<compile_context>
chip_gen: v5e
topology: v5e:2x2
jax: 0.10.0
libtpu: 0.0.40
codegen_flags: <defaults>
</compile_context>

<pallas_src>
import functools

import jax
import jax.numpy as jnp
from jax import lax
from jax.experimental import pallas as pl
from jax.experimental.pallas import tpu as pltpu

EPS = 1e-5


def _cellb_kernel(x_ref, w1_ref, w5_ref, wb_ref, w2_ref, m_ref, o_ref, *, H, W):
    """One batch-block of PNASNetCellB (stride=1) in (C, H*W) layout."""
    NB, C, HW = o_ref.shape

    bias1 = wb_ref[:, 0:1]          # (C, 1) folded BN bias of sep_conv1 + sep_conv2
    bias5 = wb_ref[:, 1:2]          # (C, 1) folded BN bias of sep_conv3
    bias2 = wb_ref[:, 2:3]          # (C, 1) folded BN2 bias of the 1x1 conv
    w2 = w2_ref[...]                # (C, 2C) BN2-scale-folded 1x1 conv weight

    for b in range(NB):
        x = x_ref[b]                                   # (C, HW)
        xx = jnp.concatenate([x, x], axis=1)           # (C, 2*HW) circular-shift source

        def shifted(d):
            # out[:, p] = x[:, (p + d) % HW]  (pure static slicing, no roll primitive)
            dm = d % HW
            if dm == 0:
                return x
            return xx[:, dm:dm + HW]

        acc1 = jnp.zeros((C, HW), jnp.float32) + bias1      # 7x7 + 3x3 branch
        acc2 = jnp.zeros((C, HW), jnp.float32) + bias5      # 5x5 branch
        pooled = jnp.full((C, HW), -jnp.inf, jnp.float32)   # 3x3 max pool (-inf pad)

        for dh in range(-3, 4):
            for dw in range(-3, 4):
                t = (dh + 3) * 7 + (dw + 3)
                r = shifted(dh * W + dw)               # (C, HW)
                m = m_ref[t]                           # (1, HW) 0/1 validity mask
                rm = r * m
                acc1 = acc1 + rm * w1_ref[:, t:t + 1]
                if abs(dh) <= 2 and abs(dw) <= 2:
                    t5 = (dh + 2) * 5 + (dw + 2)
                    acc2 = acc2 + rm * w5_ref[:, t5:t5 + 1]
                if abs(dh) <= 1 and abs(dw) <= 1:
                    pooled = jnp.maximum(pooled, jnp.where(m > 0.5, r, -jnp.inf))

        b1 = jnp.maximum(acc1, 0.0)
        b2 = jnp.maximum(acc2 + pooled, 0.0)

        # 1x1 conv over concat([b1, b2], channel) as one lane-dense MXU matmul.
        cat = jnp.concatenate([b1, b2], axis=0)                       # (2C, HW)
        y = jnp.dot(w2, cat, preferred_element_type=jnp.float32)      # (C, HW)
        o_ref[b] = jnp.maximum(y + bias2, 0.0)


def pnasnet_cellb_forward(x_nchw, packed):
    """x_nchw: (N, C, H, W) float32. Returns (N, C, H, W) float32."""
    N, C, H, W = x_nchw.shape
    w1, w5, wb, w2, masks = packed
    HW = H * W

    # NCHW -> (N, C, H*W): pure reshape, no transpose / padding, input DMA'd once.
    x = x_nchw.reshape(N, C, HW).astype(jnp.float32)

    # Split the batch across (at most) two grid steps so v7x's two TensorCores
    # each take half; on v5e/v6e this is just two cheap serial steps.
    G = 2 if (N % 2 == 0 and N >= 2) else 1
    NB = N // G

    kernel = functools.partial(_cellb_kernel, H=H, W=W)
    out = pl.pallas_call(
        kernel,
        out_shape=jax.ShapeDtypeStruct((N, C, HW), jnp.float32),
        grid=(G,),
        in_specs=[
            pl.BlockSpec((NB, C, HW), lambda g: (g, 0, 0)),
            pl.BlockSpec(w1.shape, lambda g: (0, 0)),
            pl.BlockSpec(w5.shape, lambda g: (0, 0)),
            pl.BlockSpec(wb.shape, lambda g: (0, 0)),
            pl.BlockSpec(w2.shape, lambda g: (0, 0)),
            pl.BlockSpec(masks.shape, lambda g: (0, 0, 0)),
        ],
        out_specs=pl.BlockSpec((NB, C, HW), lambda g: (g, 0, 0)),
        compiler_params=pltpu.CompilerParams(dimension_semantics=("parallel",)),
    )(x, w1, w5, wb, w2, masks)

    return out.reshape(N, C, H, W)


# ----------------------- parameter construction (deterministic) -----------------------

def init_params(key, C):
    ks = jax.random.split(key, 8)

    def bn(k):
        k1, k2, k3, k4 = jax.random.split(k, 4)
        gamma = 1.0 + 0.1 * jax.random.normal(k1, (C,), jnp.float32)
        beta = 0.1 * jax.random.normal(k2, (C,), jnp.float32)
        mean = 0.1 * jax.random.normal(k3, (C,), jnp.float32)
        var = jax.random.uniform(k4, (C,), jnp.float32, 0.5, 1.5)
        return gamma, beta, mean, var

    p = {}
    p['w7'] = 0.1 * jax.random.normal(ks[0], (C, 1, 7, 7), jnp.float32)      # depthwise 7x7
    p['bn7'] = bn(ks[1])
    p['w3'] = 0.1 * jax.random.normal(ks[2], (C, 1, 3, 3), jnp.float32)      # depthwise 3x3
    p['bn3'] = bn(ks[3])
    p['w5'] = 0.1 * jax.random.normal(ks[4], (C, 1, 5, 5), jnp.float32)      # depthwise 5x5
    p['bn5'] = bn(ks[5])
    p['w2'] = 0.2 * jax.random.normal(ks[6], (C, 2 * C, 1, 1), jnp.float32)  # 1x1 conv
    p['bn2'] = bn(ks[7])
    return p


def fold_params(p, C):
    """Fold inference BatchNorms into weights/biases and pack for the kernel."""
    def scale_bias(bnp):
        gamma, beta, mean, var = bnp
        s = gamma / jnp.sqrt(var + EPS)
        return s, beta - mean * s

    s7, c7 = scale_bias(p['bn7'])
    s3, c3 = scale_bias(p['bn3'])
    s5, c5 = scale_bias(p['bn5'])
    s2, c2 = scale_bias(p['bn2'])

    w7 = p['w7'][:, 0] * s7[:, None, None]          # (C, 7, 7)
    w3 = p['w3'][:, 0] * s3[:, None, None]          # (C, 3, 3)
    w5 = p['w5'][:, 0] * s5[:, None, None]          # (C, 5, 5)

    # Branch 1 is relu(conv7(x)+conv3(x)) -> merge the 3x3 taps into the 7x7 table.
    w1 = w7.at[:, 2:5, 2:5].add(w3).reshape(C, 49)  # tap t = (dh+3)*7 + (dw+3)
    w5 = w5.reshape(C, 25)                          # tap t5 = (dh+2)*5 + (dw+2)
    wb = jnp.stack([c7 + c3, c5, c2], axis=1)       # (C, 3) biases
    w2 = p['w2'][:, :, 0, 0] * s2[:, None]          # (C, 2C) BN2-scaled 1x1 conv
    return w1, w5, wb, w2


def build_masks(H, W):
    """0/1 validity mask per (dh, dw) shift: 1 iff (h+dh, w+dw) is inside the image."""
    HW = H * W
    p = jnp.arange(HW)
    hh, ww = p // W, p % W
    rows = []
    for dh in range(-3, 4):
        for dw in range(-3, 4):
            rows.append((hh + dh >= 0) & (hh + dh < H) & (ww + dw >= 0) & (ww + dw < W))
    return jnp.stack(rows).astype(jnp.float32).reshape(49, 1, HW)


# ----------------------- pure-JAX reference (NCHW, PyTorch semantics) -----------------------

def reference(x, p):
    N, C, H, W = x.shape

    def bn_apply(y, bnp):
        gamma, beta, mean, var = bnp
        s = (gamma / jnp.sqrt(var + EPS)).reshape(1, C, 1, 1)
        b = (beta - mean * gamma / jnp.sqrt(var + EPS)).reshape(1, C, 1, 1)
        return y * s + b

    def sep(w, bnp, k):
        pad = (k - 1) // 2
        y = lax.conv_general_dilated(
            x, w, (1, 1), ((pad, pad), (pad, pad)),
            dimension_numbers=('NCHW', 'OIHW', 'NCHW'),
            feature_group_count=C, precision=lax.Precision.HIGHEST)
        return bn_apply(y, bnp)

    y1 = sep(p['w7'], p['bn7'], 7)
    y2 = sep(p['w3'], p['bn3'], 3)
    y4 = sep(p['w5'], p['bn5'], 5)
    y3 = lax.reduce_window(x, -jnp.inf, lax.max, (1, 1, 3, 3), (1, 1, 1, 1),
                           ((0, 0), (0, 0), (1, 1), (1, 1)))
    b1 = jnp.maximum(y1 + y2, 0.0)
    b2 = jnp.maximum(y3 + y4, 0.0)
    ycat = jnp.concatenate([b1, b2], axis=1)
    y = lax.conv_general_dilated(ycat, p['w2'], (1, 1), ((0, 0), (0, 0)),
                                 dimension_numbers=('NCHW', 'OIHW', 'NCHW'),
                                 precision=lax.Precision.HIGHEST)
    return jnp.maximum(bn_apply(y, p['bn2']), 0.0)


if __name__ == "__main__":
    key = jax.random.PRNGKey(0)
    kx, kp = jax.random.split(key)

    N, C, H, W = 2, 8, 16, 16           # in_planes = out_planes = 8, stride = 1
    x = jax.random.normal(kx, (N, C, H, W), jnp.float32)

    raw = init_params(kp, C)
    packed = fold_params(raw, C) + (build_masks(H, W),)

    y = pnasnet_cellb_forward(x, packed)
    y = jax.block_until_ready(y)
    assert y.shape == (N, C, H, W), y.shape

    y_ref = reference(x, raw)
    max_err = float(jnp.max(jnp.abs(y - y_ref)))
    if not jnp.allclose(y, y_ref, rtol=5e-2, atol=5e-2):
        raise AssertionError(f"Pallas kernel mismatch vs reference, max abs err = {max_err}")

    print("KERNEL_OK")
</pallas_src>

<mosaic_0001>
module attributes {stable_mosaic.version = 11 : i64} {
  func.func @_cellb_kernel(%arg0: i32, %arg1: memref<1x8x256xf32, #tpu.memory_space<vmem>>, %arg2: memref<8x49xf32, #tpu.memory_space<vmem>>, %arg3: memref<8x25xf32, #tpu.memory_space<vmem>>, %arg4: memref<8x3xf32, #tpu.memory_space<vmem>>, %arg5: memref<8x16xf32, #tpu.memory_space<vmem>>, %arg6: memref<49x1x256xf32, #tpu.memory_space<vmem>>, %arg7: memref<1x8x256xf32, #tpu.memory_space<vmem>>) attributes {dimension_semantics = [#tpu.dimension_semantics<parallel>], iteration_bounds = array<i64: 2>, scalar_prefetch = 0 : i64, scratch_operands = 0 : i64, tpu.core_type = #tpu.core_type<tc>, window_params = [{transform_indices = @transform_0, window_bounds = array<i64: 1, 8, 256>}, {pipeline_mode = #tpu.pipeline_mode<synchronous>, transform_indices = @transform_1, window_bounds = array<i64: 8, 49>}, {pipeline_mode = #tpu.pipeline_mode<synchronous>, transform_indices = @transform_2, window_bounds = array<i64: 8, 25>}, {pipeline_mode = #tpu.pipeline_mode<synchronous>, transform_indices = @transform_3, window_bounds = array<i64: 8, 3>}, {pipeline_mode = #tpu.pipeline_mode<synchronous>, transform_indices = @transform_4, window_bounds = array<i64: 8, 16>}, {pipeline_mode = #tpu.pipeline_mode<synchronous>, transform_indices = @transform_5, window_bounds = array<i64: 49, 1, 256>}, {transform_indices = @transform_6, window_bounds = array<i64: 1, 8, 256>}]} {
    %c0 = arith.constant 0 : index
    %c0_0 = arith.constant 0 : index
    %0 = vector.load %arg4[%c0, %c0_0] : memref<8x3xf32, #tpu.memory_space<vmem>>, vector<8x1xf32>
    %c0_1 = arith.constant 0 : index
    %c1 = arith.constant 1 : index
    %1 = vector.load %arg4[%c0_1, %c1] : memref<8x3xf32, #tpu.memory_space<vmem>>, vector<8x1xf32>
    %c0_2 = arith.constant 0 : index
    %c2 = arith.constant 2 : index
    %2 = vector.load %arg4[%c0_2, %c2] : memref<8x3xf32, #tpu.memory_space<vmem>>, vector<8x1xf32>
    %c0_3 = arith.constant 0 : index
    %c0_4 = arith.constant 0 : index
    %3 = vector.load %arg5[%c0_3, %c0_4] : memref<8x16xf32, #tpu.memory_space<vmem>>, vector<8x16xf32>
    %c0_5 = arith.constant 0 : index
    %c0_6 = arith.constant 0 : index
    %c0_7 = arith.constant 0 : index
    %4 = vector.load %arg1[%c0_5, %c0_6, %c0_7] : memref<1x8x256xf32, #tpu.memory_space<vmem>>, vector<1x8x256xf32>
    %5 = vector.shape_cast %4 : vector<1x8x256xf32> to vector<8x256xf32>
    %6 = tpu.concatenate %5, %5 in 1 : vector<8x256xf32>, vector<8x256xf32> -> vector<8x512xf32>
    %cst = arith.constant 0.000000e+00 : f32
    %7 = vector.broadcast %cst : f32 to vector<8x256xf32>
    %8 = vector.broadcast %0 : vector<8x1xf32> to vector<8x256xf32>
    %9 = arith.addf %7, %8 : vector<8x256xf32>
    %cst_8 = arith.constant 0.000000e+00 : f32
    %10 = vector.broadcast %cst_8 : f32 to vector<8x256xf32>
    %11 = vector.broadcast %1 : vector<8x1xf32> to vector<8x256xf32>
    %12 = arith.addf %10, %11 : vector<8x256xf32>
    %cst_9 = arith.constant 0xFF800000 : f32
    %13 = vector.broadcast %cst_9 : f32 to vector<8x256xf32>
    %14 = vector.extract_strided_slice %6 {offsets = [0, 205], sizes = [8, 256], strides = [1, 1]} : vector<8x512xf32> to vector<8x256xf32>
    %c0_10 = arith.constant 0 : index
    %c0_11 = arith.constant 0 : index
    %c0_12 = arith.constant 0 : index
    %15 = vector.load %arg6[%c0_10, %c0_11, %c0_12] : memref<49x1x256xf32, #tpu.memory_space<vmem>>, vector<1x1x256xf32>
    %16 = vector.shape_cast %15 : vector<1x1x256xf32> to vector<1x256xf32>
    %17 = vector.broadcast %16 : vector<1x256xf32> to vector<8x256xf32>
    %18 = arith.mulf %14, %17 : vector<8x256xf32>
    %c0_13 = arith.constant 0 : index
    %c0_14 = arith.constant 0 : index
    %19 = vector.load %arg2[%c0_13, %c0_14] : memref<8x49xf32, #tpu.memory_space<vmem>>, vector<8x1xf32>
    %20 = vector.broadcast %19 : vector<8x1xf32> to vector<8x256xf32>
    %21 = arith.mulf %18, %20 : vector<8x256xf32>
    %22 = arith.addf %9, %21 : vector<8x256xf32>
    %23 = vector.extract_strided_slice %6 {offsets = [0, 206], sizes = [8, 256], strides = [1, 1]} : vector<8x512xf32> to vector<8x256xf32>
    %c1_15 = arith.constant 1 : index
    %c0_16 = arith.constant 0 : index
    %c0_17 = arith.constant 0 : index
    %24 = vector.load %arg6[%c1_15, %c0_16, %c0_17] : memref<49x1x256xf32, #tpu.memory_space<vmem>>, vector<1x1x256xf32>
    %25 = vector.shape_cast %24 : vector<1x1x256xf32> to vector<1x256xf32>
    %26 = vector.broadcast %25 : vector<1x256xf32> to vector<8x256xf32>
    %27 = arith.mulf %23, %26 : vector<8x256xf32>
    %c0_18 = arith.constant 0 : index
    %c1_19 = arith.constant 1 : index
    %28 = vector.load %arg2[%c0_18, %c1_19] : memref<8x49xf32, #tpu.memory_space<vmem>>, vector<8x1xf32>
    %29 = vector.broadcast %28 : vector<8x1xf32> to vector<8x256xf32>
    %30 = arith.mulf %27, %29 : vector<8x256xf32>
    %31 = arith.addf %22, %30 : vector<8x256xf32>
    %32 = vector.extract_strided_slice %6 {offsets = [0, 207], sizes = [8, 256], strides = [1, 1]} : vector<8x512xf32> to vector<8x256xf32>
    %c2_20 = arith.constant 2 : index
    %c0_21 = arith.constant 0 : index
    %c0_22 = arith.constant 0 : index
    %33 = vector.load %arg6[%c2_20, %c0_21, %c0_22] : memref<49x1x256xf32, #tpu.memory_space<vmem>>, vector<1x1x256xf32>
    %34 = vector.shape_cast %33 : vector<1x1x256xf32> to vector<1x256xf32>
    %35 = vector.broadcast %34 : vector<1x256xf32> to vector<8x256xf32>
    %36 = arith.mulf %32, %35 : vector<8x256xf32>
    %c0_23 = arith.constant 0 : index
    %c2_24 = arith.constant 2 : index
    %37 = vector.load %arg2[%c0_23, %c2_24] : memref<8x49xf32, #tpu.memory_space<vmem>>, vector<8x1xf32>
    %38 = vector.broadcast %37 : vector<8x1xf32> to vector<8x256xf32>
    %39 = arith.mulf %36, %38 : vector<8x256xf32>
    %40 = arith.addf %31, %39 : vector<8x256xf32>
    %41 = vector.extract_strided_slice %6 {offsets = [0, 208], sizes = [8, 256], strides = [1, 1]} : vector<8x512xf32> to vector<8x256xf32>
    %c3 = arith.constant 3 : index
    %c0_25 = arith.constant 0 : index
    %c0_26 = arith.constant 0 : index
    %42 = vector.load %arg6[%c3, %c0_25, %c0_26] : memref<49x1x256xf32, #tpu.memory_space<vmem>>, vector<1x1x256xf32>
    %43 = vector.shape_cast %42 : vector<1x1x256xf32> to vector<1x256xf32>
    %44 = vector.broadcast %43 : vector<1x256xf32> to vector<8x256xf32>
    %45 = arith.mulf %41, %44 : vector<8x256xf32>
    %c0_27 = arith.constant 0 : index
    %c3_28 = arith.constant 3 : index
    %46 = vector.load %arg2[%c0_27, %c3_28] : memref<8x49xf32, #tpu.memory_space<vmem>>, vector<8x1xf32>
    %47 = vector.broadcast %46 : vector<8x1xf32> to vector<8x256xf32>
    %48 = arith.mulf %45, %47 : vector<8x256xf32>
    %49 = arith.addf %40, %48 : vector<8x256xf32>
    %50 = vector.extract_strided_slice %6 {offsets = [0, 209], sizes = [8, 256], strides = [1, 1]} : vector<8x512xf32> to vector<8x256xf32>
    %c4 = arith.constant 4 : index
    %c0_29 = arith.constant 0 : index
    %c0_30 = arith.constant 0 : index
    %51 = vector.load %arg6[%c4, %c0_29, %c0_30] : memref<49x1x256xf32, #tpu.memory_space<vmem>>, vector<1x1x256xf32>
    %52 = vector.shape_cast %51 : vector<1x1x256xf32> to vector<1x256xf32>
    %53 = vector.broadcast %52 : vector<1x256xf32> to vector<8x256xf32>
    %54 = arith.mulf %50, %53 : vector<8x256xf32>
    %c0_31 = arith.constant 0 : index
    %c4_32 = arith.constant 4 : index
    %55 = vector.load %arg2[%c0_31, %c4_32] : memref<8x49xf32, #tpu.memory_space<vmem>>, vector<8x1xf32>
    %56 = vector.broadcast %55 : vector<8x1xf32> to vector<8x256xf32>
    %57 = arith.mulf %54, %56 : vector<8x256xf32>
    %58 = arith.addf %49, %57 : vector<8x256xf32>
    %59 = vector.extract_strided_slice %6 {offsets = [0, 210], sizes = [8, 256], strides = [1, 1]} : vector<8x512xf32> to vector<8x256xf32>
    %c5 = arith.constant 5 : index
    %c0_33 = arith.constant 0 : index
    %c0_34 = arith.constant 0 : index
    %60 = vector.load %arg6[%c5, %c0_33, %c0_34] : memref<49x1x256xf32, #tpu.memory_space<vmem>>, vector<1x1x256xf32>
    %61 = vector.shape_cast %60 : vector<1x1x256xf32> to vector<1x256xf32>
    %62 = vector.broadcast %61 : vector<1x256xf32> to vector<8x256xf32>
    %63 = arith.mulf %59, %62 : vector<8x256xf32>
    %c0_35 = arith.constant 0 : index
    %c5_36 = arith.constant 5 : index
    %64 = vector.load %arg2[%c0_35, %c5_36] : memref<8x49xf32, #tpu.memory_space<vmem>>, vector<8x1xf32>
    %65 = vector.broadcast %64 : vector<8x1xf32> to vector<8x256xf32>
    %66 = arith.mulf %63, %65 : vector<8x256xf32>
    %67 = arith.addf %58, %66 : vector<8x256xf32>
    %68 = vector.extract_strided_slice %6 {offsets = [0, 211], sizes = [8, 256], strides = [1, 1]} : vector<8x512xf32> to vector<8x256xf32>
    %c6 = arith.constant 6 : index
    %c0_37 = arith.constant 0 : index
    %c0_38 = arith.constant 0 : index
    %69 = vector.load %arg6[%c6, %c0_37, %c0_38] : memref<49x1x256xf32, #tpu.memory_space<vmem>>, vector<1x1x256xf32>
    %70 = vector.shape_cast %69 : vector<1x1x256xf32> to vector<1x256xf32>
    %71 = vector.broadcast %70 : vector<1x256xf32> to vector<8x256xf32>
    %72 = arith.mulf %68, %71 : vector<8x256xf32>
    %c0_39 = arith.constant 0 : index
    %c6_40 = arith.constant 6 : index
    %73 = vector.load %arg2[%c0_39, %c6_40] : memref<8x49xf32, #tpu.memory_space<vmem>>, vector<8x1xf32>
    %74 = vector.broadcast %73 : vector<8x1xf32> to vector<8x256xf32>
    %75 = arith.mulf %72, %74 : vector<8x256xf32>
    %76 = arith.addf %67, %75 : vector<8x256xf32>
    %77 = vector.extract_strided_slice %6 {offsets = [0, 221], sizes = [8, 256], strides = [1, 1]} : vector<8x512xf32> to vector<8x256xf32>
    %c7 = arith.constant 7 : index
    %c0_41 = arith.constant 0 : index
    %c0_42 = arith.constant 0 : index
    %78 = vector.load %arg6[%c7, %c0_41, %c0_42] : memref<49x1x256xf32, #tpu.memory_space<vmem>>, vector<1x1x256xf32>
    %79 = vector.shape_cast %78 : vector<1x1x256xf32> to vector<1x256xf32>
    %80 = vector.broadcast %79 : vector<1x256xf32> to vector<8x256xf32>
    %81 = arith.mulf %77, %80 : vector<8x256xf32>
    %c0_43 = arith.constant 0 : index
    %c7_44 = arith.constant 7 : index
    %82 = vector.load %arg2[%c0_43, %c7_44] : memref<8x49xf32, #tpu.memory_space<vmem>>, vector<8x1xf32>
    %83 = vector.broadcast %82 : vector<8x1xf32> to vector<8x256xf32>
    %84 = arith.mulf %81, %83 : vector<8x256xf32>
    %85 = arith.addf %76, %84 : vector<8x256xf32>
    %86 = vector.extract_strided_slice %6 {offsets = [0, 222], sizes = [8, 256], strides = [1, 1]} : vector<8x512xf32> to vector<8x256xf32>
    %c8 = arith.constant 8 : index
    %c0_45 = arith.constant 0 : index
    %c0_46 = arith.constant 0 : index
    %87 = vector.load %arg6[%c8, %c0_45, %c0_46] : memref<49x1x256xf32, #tpu.memory_space<vmem>>, vector<1x1x256xf32>
    %88 = vector.shape_cast %87 : vector<1x1x256xf32> to vector<1x256xf32>
    %89 = vector.broadcast %88 : vector<1x256xf32> to vector<8x256xf32>
    %90 = arith.mulf %86, %89 : vector<8x256xf32>
    %c0_47 = arith.constant 0 : index
    %c8_48 = arith.constant 8 : index
    %91 = vector.load %arg2[%c0_47, %c8_48] : memref<8x49xf32, #tpu.memory_space<vmem>>, vector<8x1xf32>
    %92 = vector.broadcast %91 : vector<8x1xf32> to vector<8x256xf32>
    %93 = arith.mulf %90, %92 : vector<8x256xf32>
    %94 = arith.addf %85, %93 : vector<8x256xf32>
    %c0_49 = arith.constant 0 : index
    %c0_50 = arith.constant 0 : index
    %95 = vector.load %arg3[%c0_49, %c0_50] : memref<8x25xf32, #tpu.memory_space<vmem>>, vector<8x1xf32>
    %96 = vector.broadcast %95 : vector<8x1xf32> to vector<8x256xf32>
    %97 = arith.mulf %90, %96 : vector<8x256xf32>
    %98 = arith.addf %12, %97 : vector<8x256xf32>
    %99 = vector.extract_strided_slice %6 {offsets = [0, 223], sizes = [8, 256], strides = [1, 1]} : vector<8x512xf32> to vector<8x256xf32>
    %c9 = arith.constant 9 : index
    %c0_51 = arith.constant 0 : index
    %c0_52 = arith.constant 0 : index
    %100 = vector.load %arg6[%c9, %c0_51, %c0_52] : memref<49x1x256xf32, #tpu.memory_space<vmem>>, vector<1x1x256xf32>
    %101 = vector.shape_cast %100 : vector<1x1x256xf32> to vector<1x256xf32>
    %102 = vector.broadcast %101 : vector<1x256xf32> to vector<8x256xf32>
    %103 = arith.mulf %99, %102 : vector<8x256xf32>
    %c0_53 = arith.constant 0 : index
    %c9_54 = arith.constant 9 : index
    %104 = vector.load %arg2[%c0_53, %c9_54] : memref<8x49xf32, #tpu.memory_space<vmem>>, vector<8x1xf32>
    %105 = vector.broadcast %104 : vector<8x1xf32> to vector<8x256xf32>
    %106 = arith.mulf %103, %105 : vector<8x256xf32>
    %107 = arith.addf %94, %106 : vector<8x256xf32>
    %c0_55 = arith.constant 0 : index
    %c1_56 = arith.constant 1 : index
    %108 = vector.load %arg3[%c0_55, %c1_56] : memref<8x25xf32, #tpu.memory_space<vmem>>, vector<8x1xf32>
    %109 = vector.broadcast %108 : vector<8x1xf32> to vector<8x256xf32>
    %110 = arith.mulf %103, %109 : vector<8x256xf32>
    %111 = arith.addf %98, %110 : vector<8x256xf32>
    %112 = vector.extract_strided_slice %6 {offsets = [0, 224], sizes = [8, 256], strides = [1, 1]} : vector<8x512xf32> to vector<8x256xf32>
    %c10 = arith.constant 10 : index
    %c0_57 = arith.constant 0 : index
    %c0_58 = arith.constant 0 : index
    %113 = vector.load %arg6[%c10, %c0_57, %c0_58] : memref<49x1x256xf32, #tpu.memory_space<vmem>>, vector<1x1x256xf32>
    %114 = vector.shape_cast %113 : vector<1x1x256xf32> to vector<1x256xf32>
    %115 = vector.broadcast %114 : vector<1x256xf32> to vector<8x256xf32>
    %116 = arith.mulf %112, %115 : vector<8x256xf32>
    %c0_59 = arith.constant 0 : index
    %c10_60 = arith.constant 10 : index
    %117 = vector.load %arg2[%c0_59, %c10_60] : memref<8x49xf32, #tpu.memory_space<vmem>>, vector<8x1xf32>
    %118 = vector.broadcast %117 : vector<8x1xf32> to vector<8x256xf32>
    %119 = arith.mulf %116, %118 : vector<8x256xf32>
    %120 = arith.addf %107, %119 : vector<8x256xf32>
    %c0_61 = arith.constant 0 : index
    %c2_62 = arith.constant 2 : index
    %121 = vector.load %arg3[%c0_61, %c2_62] : memref<8x25xf32, #tpu.memory_space<vmem>>, vector<8x1xf32>
    %122 = vector.broadcast %121 : vector<8x1xf32> to vector<8x256xf32>
    %123 = arith.mulf %116, %122 : vector<8x256xf32>
    %124 = arith.addf %111, %123 : vector<8x256xf32>
    %125 = vector.extract_strided_slice %6 {offsets = [0, 225], sizes = [8, 256], strides = [1, 1]} : vector<8x512xf32> to vector<8x256xf32>
    %c11 = arith.constant 11 : index
    %c0_63 = arith.constant 0 : index
    %c0_64 = arith.constant 0 : index
    %126 = vector.load %arg6[%c11, %c0_63, %c0_64] : memref<49x1x256xf32, #tpu.memory_space<vmem>>, vector<1x1x256xf32>
    %127 = vector.shape_cast %126 : vector<1x1x256xf32> to vector<1x256xf32>
    %128 = vector.broadcast %127 : vector<1x256xf32> to vector<8x256xf32>
    %129 = arith.mulf %125, %128 : vector<8x256xf32>
    %c0_65 = arith.constant 0 : index
    %c11_66 = arith.constant 11 : index
    %130 = vector.load %arg2[%c0_65, %c11_66] : memref<8x49xf32, #tpu.memory_space<vmem>>, vector<8x1xf32>
    %131 = vector.broadcast %130 : vector<8x1xf32> to vector<8x256xf32>
    %132 = arith.mulf %129, %131 : vector<8x256xf32>
    %133 = arith.addf %120, %132 : vector<8x256xf32>
    %c0_67 = arith.constant 0 : index
    %c3_68 = arith.constant 3 : index
    %134 = vector.load %arg3[%c0_67, %c3_68] : memref<8x25xf32, #tpu.memory_space<vmem>>, vector<8x1xf32>
    %135 = vector.broadcast %134 : vector<8x1xf32> to vector<8x256xf32>
    %136 = arith.mulf %129, %135 : vector<8x256xf32>
    %137 = arith.addf %124, %136 : vector<8x256xf32>
    %138 = vector.extract_strided_slice %6 {offsets = [0, 226], sizes = [8, 256], strides = [1, 1]} : vector<8x512xf32> to vector<8x256xf32>
    %c12 = arith.constant 12 : index
    %c0_69 = arith.constant 0 : index
    %c0_70 = arith.constant 0 : index
    %139 = vector.load %arg6[%c12, %c0_69, %c0_70] : memref<49x1x256xf32, #tpu.memory_space<vmem>>, vector<1x1x256xf32>
    %140 = vector.shape_cast %139 : vector<1x1x256xf32> to vector<1x256xf32>
    %141 = vector.broadcast %140 : vector<1x256xf32> to vector<8x256xf32>
    %142 = arith.mulf %138, %141 : vector<8x256xf32>
    %c0_71 = arith.constant 0 : index
    %c12_72 = arith.constant 12 : index
    %143 = vector.load %arg2[%c0_71, %c12_72] : memref<8x49xf32, #tpu.memory_space<vmem>>, vector<8x1xf32>
    %144 = vector.broadcast %143 : vector<8x1xf32> to vector<8x256xf32>
    %145 = arith.mulf %142, %144 : vector<8x256xf32>
    %146 = arith.addf %133, %145 : vector<8x256xf32>
    %c0_73 = arith.constant 0 : index
    %c4_74 = arith.constant 4 : index
    %147 = vector.load %arg3[%c0_73, %c4_74] : memref<8x25xf32, #tpu.memory_space<vmem>>, vector<8x1xf32>
    %148 = vector.broadcast %147 : vector<8x1xf32> to vector<8x256xf32>
    %149 = arith.mulf %142, %148 : vector<8x256xf32>
    %150 = arith.addf %137, %149 : vector<8x256xf32>
    %151 = vector.extract_strided_slice %6 {offsets = [0, 227], sizes = [8, 256], strides = [1, 1]} : vector<8x512xf32> to vector<8x256xf32>
    %c13 = arith.constant 13 : index
    %c0_75 = arith.constant 0 : index
    %c0_76 = arith.constant 0 : index
    %152 = vector.load %arg6[%c13, %c0_75, %c0_76] : memref<49x1x256xf32, #tpu.memory_space<vmem>>, vector<1x1x256xf32>
    %153 = vector.shape_cast %152 : vector<1x1x256xf32> to vector<1x256xf32>
    %154 = vector.broadcast %153 : vector<1x256xf32> to vector<8x256xf32>
    %155 = arith.mulf %151, %154 : vector<8x256xf32>
    %c0_77 = arith.constant 0 : index
    %c13_78 = arith.constant 13 : index
    %156 = vector.load %arg2[%c0_77, %c13_78] : memref<8x49xf32, #tpu.memory_space<vmem>>, vector<8x1xf32>
    %157 = vector.broadcast %156 : vector<8x1xf32> to vector<8x256xf32>
    %158 = arith.mulf %155, %157 : vector<8x256xf32>
    %159 = arith.addf %146, %158 : vector<8x256xf32>
    %160 = vector.extract_strided_slice %6 {offsets = [0, 237], sizes = [8, 256], strides = [1, 1]} : vector<8x512xf32> to vector<8x256xf32>
    %c14 = arith.constant 14 : index
    %c0_79 = arith.constant 0 : index
    %c0_80 = arith.constant 0 : index
    %161 = vector.load %arg6[%c14, %c0_79, %c0_80] : memref<49x1x256xf32, #tpu.memory_space<vmem>>, vector<1x1x256xf32>
    %162 = vector.shape_cast %161 : vector<1x1x256xf32> to vector<1x256xf32>
    %163 = vector.broadcast %162 : vector<1x256xf32> to vector<8x256xf32>
    %164 = arith.mulf %160, %163 : vector<8x256xf32>
    %c0_81 = arith.constant 0 : index
    %c14_82 = arith.constant 14 : index
    %165 = vector.load %arg2[%c0_81, %c14_82] : memref<8x49xf32, #tpu.memory_space<vmem>>, vector<8x1xf32>
    %166 = vector.broadcast %165 : vector<8x1xf32> to vector<8x256xf32>
    %167 = arith.mulf %164, %166 : vector<8x256xf32>
    %168 = arith.addf %159, %167 : vector<8x256xf32>
    %169 = vector.extract_strided_slice %6 {offsets = [0, 238], sizes = [8, 256], strides = [1, 1]} : vector<8x512xf32> to vector<8x256xf32>
    %c15 = arith.constant 15 : index
    %c0_83 = arith.constant 0 : index
    %c0_84 = arith.constant 0 : index
    %170 = vector.load %arg6[%c15, %c0_83, %c0_84] : memref<49x1x256xf32, #tpu.memory_space<vmem>>, vector<1x1x256xf32>
    %171 = vector.shape_cast %170 : vector<1x1x256xf32> to vector<1x256xf32>
    %172 = vector.broadcast %171 : vector<1x256xf32> to vector<8x256xf32>
    %173 = arith.mulf %169, %172 : vector<8x256xf32>
    %c0_85 = arith.constant 0 : index
    %c15_86 = arith.constant 15 : index
    %174 = vector.load %arg2[%c0_85, %c15_86] : memref<8x49xf32, #tpu.memory_space<vmem>>, vector<8x1xf32>
    %175 = vector.broadcast %174 : vector<8x1xf32> to vector<8x256xf32>
    %176 = arith.mulf %173, %175 : vector<8x256xf32>
    %177 = arith.addf %168, %176 : vector<8x256xf32>
    %c0_87 = arith.constant 0 : index
    %c5_88 = arith.constant 5 : index
    %178 = vector.load %arg3[%c0_87, %c5_88] : memref<8x25xf32, #tpu.memory_space<vmem>>, vector<8x1xf32>
    %179 = vector.broadcast %178 : vector<8x1xf32> to vector<8x256xf32>
    %180 = arith.mulf %173, %179 : vector<8x256xf32>
    %181 = arith.addf %150, %180 : vector<8x256xf32>
    %182 = vector.extract_strided_slice %6 {offsets = [0, 239], sizes = [8, 256], strides = [1, 1]} : vector<8x512xf32> to vector<8x256xf32>
    %c16 = arith.constant 16 : index
    %c0_89 = arith.constant 0 : index
    %c0_90 = arith.constant 0 : index
    %183 = vector.load %arg6[%c16, %c0_89, %c0_90] : memref<49x1x256xf32, #tpu.memory_space<vmem>>, vector<1x1x256xf32>
    %184 = vector.shape_cast %183 : vector<1x1x256xf32> to vector<1x256xf32>
    %185 = vector.broadcast %184 : vector<1x256xf32> to vector<8x256xf32>
    %186 = arith.mulf %182, %185 : vector<8x256xf32>
    %c0_91 = arith.constant 0 : index
    %c16_92 = arith.constant 16 : index
    %187 = vector.load %arg2[%c0_91, %c16_92] : memref<8x49xf32, #tpu.memory_space<vmem>>, vector<8x1xf32>
    %188 = vector.broadcast %187 : vector<8x1xf32> to vector<8x256xf32>
    %189 = arith.mulf %186, %188 : vector<8x256xf32>
    %190 = arith.addf %177, %189 : vector<8x256xf32>
    %c0_93 = arith.constant 0 : index
    %c6_94 = arith.constant 6 : index
    %191 = vector.load %arg3[%c0_93, %c6_94] : memref<8x25xf32, #tpu.memory_space<vmem>>, vector<8x1xf32>
    %192 = vector.broadcast %191 : vector<8x1xf32> to vector<8x256xf32>
    %193 = arith.mulf %186, %192 : vector<8x256xf32>
    %194 = arith.addf %181, %193 : vector<8x256xf32>
    %cst_95 = arith.constant 5.000000e-01 : f32
    %195 = vector.broadcast %cst_95 : f32 to vector<1x256xf32>
    %196 = arith.cmpf ogt, %184, %195 : vector<1x256xf32>
    %cst_96 = arith.constant 0xFF800000 : f32
    %197 = vector.shape_cast %196 : vector<1x256xi1> to vector<1x256xi1>
    %198 = vector.broadcast %197 : vector<1x256xi1> to vector<8x256xi1>
    %199 = vector.broadcast %cst_96 : f32 to vector<8x256xf32>
    %200 = arith.select %198, %182, %199 : vector<8x256xi1>, vector<8x256xf32>
    %201 = arith.maximumf %13, %200 : vector<8x256xf32>
    %202 = vector.extract_strided_slice %6 {offsets = [0, 240], sizes = [8, 256], strides = [1, 1]} : vector<8x512xf32> to vector<8x256xf32>
    %c17 = arith.constant 17 : index
    %c0_97 = arith.constant 0 : index
    %c0_98 = arith.constant 0 : index
    %203 = vector.load %arg6[%c17, %c0_97, %c0_98] : memref<49x1x256xf32, #tpu.memory_space<vmem>>, vector<1x1x256xf32>
    %204 = vector.shape_cast %203 : vector<1x1x256xf32> to vector<1x256xf32>
    %205 = vector.broadcast %204 : vector<1x256xf32> to vector<8x256xf32>
    %206 = arith.mulf %202, %205 : vector<8x256xf32>
    %c0_99 = arith.constant 0 : index
    %c17_100 = arith.constant 17 : index
    %207 = vector.load %arg2[%c0_99, %c17_100] : memref<8x49xf32, #tpu.memory_space<vmem>>, vector<8x1xf32>
    %208 = vector.broadcast %207 : vector<8x1xf32> to vector<8x256xf32>
    %209 = arith.mulf %206, %208 : vector<8x256xf32>
    %210 = arith.addf %190, %209 : vector<8x256xf32>
    %c0_101 = arith.constant 0 : index
    %c7_102 = arith.constant 7 : index
    %211 = vector.load %arg3[%c0_101, %c7_102] : memref<8x25xf32, #tpu.memory_space<vmem>>, vector<8x1xf32>
    %212 = vector.broadcast %211 : vector<8x1xf32> to vector<8x256xf32>
    %213 = arith.mulf %206, %212 : vector<8x256xf32>
    %214 = arith.addf %194, %213 : vector<8x256xf32>
    %cst_103 = arith.constant 5.000000e-01 : f32
    %215 = vector.broadcast %cst_103 : f32 to vector<1x256xf32>
    %216 = arith.cmpf ogt, %204, %215 : vector<1x256xf32>
    %cst_104 = arith.constant 0xFF800000 : f32
    %217 = vector.shape_cast %216 : vector<1x256xi1> to vector<1x256xi1>
    %218 = vector.broadcast %217 : vector<1x256xi1> to vector<8x256xi1>
    %219 = vector.broadcast %cst_104 : f32 to vector<8x256xf32>
    %220 = arith.select %218, %202, %219 : vector<8x256xi1>, vector<8x256xf32>
    %221 = arith.maximumf %201, %220 : vector<8x256xf32>
    %222 = vector.extract_strided_slice %6 {offsets = [0, 241], sizes = [8, 256], strides = [1, 1]} : vector<8x512xf32> to vector<8x256xf32>
    %c18 = arith.constant 18 : index
    %c0_105 = arith.constant 0 : index
    %c0_106 = arith.constant 0 : index
    %223 = vector.load %arg6[%c18, %c0_105, %c0_106] : memref<49x1x256xf32, #tpu.memory_space<vmem>>, vector<1x1x256xf32>
    %224 = vector.shape_cast %223 : vector<1x1x256xf32> to vector<1x256xf32>
    %225 = vector.broadcast %224 : vector<1x256xf32> to vector<8x256xf32>
    %226 = arith.mulf %222, %225 : vector<8x256xf32>
    %c0_107 = arith.constant 0 : index
    %c18_108 = arith.constant 18 : index
    %227 = vector.load %arg2[%c0_107, %c18_108] : memref<8x49xf32, #tpu.memory_space<vmem>>, vector<8x1xf32>
    %228 = vector.broadcast %227 : vector<8x1xf32> to vector<8x256xf32>
    %229 = arith.mulf %226, %228 : vector<8x256xf32>
    %230 = arith.addf %210, %229 : vector<8x256xf32>
    %c0_109 = arith.constant 0 : index
    %c8_110 = arith.constant 8 : index
    %231 = vector.load %arg3[%c0_109, %c8_110] : memref<8x25xf32, #tpu.memory_space<vmem>>, vector<8x1xf32>
    %232 = vector.broadcast %231 : vector<8x1xf32> to vector<8x256xf32>
    %233 = arith.mulf %226, %232 : vector<8x256xf32>
    %234 = arith.addf %214, %233 : vector<8x256xf32>
    %cst_111 = arith.constant 5.000000e-01 : f32
    %235 = vector.broadcast %cst_111 : f32 to vector<1x256xf32>
    %236 = arith.cmpf ogt, %224, %235 : vector<1x256xf32>
    %cst_112 = arith.constant 0xFF800000 : f32
    %237 = vector.shape_cast %236 : vector<1x256xi1> to vector<1x256xi1>
    %238 = vector.broadcast %237 : vector<1x256xi1> to vector<8x256xi1>
    %239 = vector.broadcast %cst_112 : f32 to vector<8x256xf32>
    %240 = arith.select %238, %222, %239 : vector<8x256xi1>, vector<8x256xf32>
    %241 = arith.maximumf %221, %240 : vector<8x256xf32>
    %242 = vector.extract_strided_slice %6 {offsets = [0, 242], sizes = [8, 256], strides = [1, 1]} : vector<8x512xf32> to vector<8x256xf32>
    %c19 = arith.constant 19 : index
    %c0_113 = arith.constant 0 : index
    %c0_114 = arith.constant 0 : index
    %243 = vector.load %arg6[%c19, %c0_113, %c0_114] : memref<49x1x256xf32, #tpu.memory_space<vmem>>, vector<1x1x256xf32>
    %244 = vector.shape_cast %243 : vector<1x1x256xf32> to vector<1x256xf32>
    %245 = vector.broadcast %244 : vector<1x256xf32> to vector<8x256xf32>
    %246 = arith.mulf %242, %245 : vector<8x256xf32>
    %c0_115 = arith.constant 0 : index
    %c19_116 = arith.constant 19 : index
    %247 = vector.load %arg2[%c0_115, %c19_116] : memref<8x49xf32, #tpu.memory_space<vmem>>, vector<8x1xf32>
    %248 = vector.broadcast %247 : vector<8x1xf32> to vector<8x256xf32>
    %249 = arith.mulf %246, %248 : vector<8x256xf32>
    %250 = arith.addf %230, %249 : vector<8x256xf32>
    %c0_117 = arith.constant 0 : index
    %c9_118 = arith.constant 9 : index
    %251 = vector.load %arg3[%c0_117, %c9_118] : memref<8x25xf32, #tpu.memory_space<vmem>>, vector<8x1xf32>
    %252 = vector.broadcast %251 : vector<8x1xf32> to vector<8x256xf32>
    %253 = arith.mulf %246, %252 : vector<8x256xf32>
    %254 = arith.addf %234, %253 : vector<8x256xf32>
    %255 = vector.extract_strided_slice %6 {offsets = [0, 243], sizes = [8, 256], strides = [1, 1]} : vector<8x512xf32> to vector<8x256xf32>
    %c20 = arith.constant 20 : index
    %c0_119 = arith.constant 0 : index
    %c0_120 = arith.constant 0 : index
    %256 = vector.load %arg6[%c20, %c0_119, %c0_120] : memref<49x1x256xf32, #tpu.memory_space<vmem>>, vector<1x1x256xf32>
    %257 = vector.shape_cast %256 : vector<1x1x256xf32> to vector<1x256xf32>
    %258 = vector.broadcast %257 : vector<1x256xf32> to vector<8x256xf32>
    %259 = arith.mulf %255, %258 : vector<8x256xf32>
    %c0_121 = arith.constant 0 : index
    %c20_122 = arith.constant 20 : index
    %260 = vector.load %arg2[%c0_121, %c20_122] : memref<8x49xf32, #tpu.memory_space<vmem>>, vector<8x1xf32>
    %261 = vector.broadcast %260 : vector<8x1xf32> to vector<8x256xf32>
    %262 = arith.mulf %259, %261 : vector<8x256xf32>
    %263 = arith.addf %250, %262 : vector<8x256xf32>
    %264 = vector.extract_strided_slice %6 {offsets = [0, 253], sizes = [8, 256], strides = [1, 1]} : vector<8x512xf32> to vector<8x256xf32>
    %c21 = arith.constant 21 : index
    %c0_123 = arith.constant 0 : index
    %c0_124 = arith.constant 0 : index
    %265 = vector.load %arg6[%c21, %c0_123, %c0_124] : memref<49x1x256xf32, #tpu.memory_space<vmem>>, vector<1x1x256xf32>
    %266 = vector.shape_cast %265 : vector<1x1x256xf32> to vector<1x256xf32>
    %267 = vector.broadcast %266 : vector<1x256xf32> to vector<8x256xf32>
    %268 = arith.mulf %264, %267 : vector<8x256xf32>
    %c0_125 = arith.constant 0 : index
    %c21_126 = arith.constant 21 : index
    %269 = vector.load %arg2[%c0_125, %c21_126] : memref<8x49xf32, #tpu.memory_space<vmem>>, vector<8x1xf32>
    %270 = vector.broadcast %269 : vector<8x1xf32> to vector<8x256xf32>
    %271 = arith.mulf %268, %270 : vector<8x256xf32>
    %272 = arith.addf %263, %271 : vector<8x256xf32>
    %273 = vector.extract_strided_slice %6 {offsets = [0, 254], sizes = [8, 256], strides = [1, 1]} : vector<8x512xf32> to vector<8x256xf32>
    %c22 = arith.constant 22 : index
    %c0_127 = arith.constant 0 : index
    %c0_128 = arith.constant 0 : index
    %274 = vector.load %arg6[%c22, %c0_127, %c0_128] : memref<49x1x256xf32, #tpu.memory_space<vmem>>, vector<1x1x256xf32>
    %275 = vector.shape_cast %274 : vector<1x1x256xf32> to vector<1x256xf32>
    %276 = vector.broadcast %275 : vector<1x256xf32> to vector<8x256xf32>
    %277 = arith.mulf %273, %276 : vector<8x256xf32>
    %c0_129 = arith.constant 0 : index
    %c22_130 = arith.constant 22 : index
    %278 = vector.load %arg2[%c0_129, %c22_130] : memref<8x49xf32, #tpu.memory_space<vmem>>, vector<8x1xf32>
    %279 = vector.broadcast %278 : vector<8x1xf32> to vector<8x256xf32>
    %280 = arith.mulf %277, %279 : vector<8x256xf32>
    %281 = arith.addf %272, %280 : vector<8x256xf32>
    %c0_131 = arith.constant 0 : index
    %c10_132 = arith.constant 10 : index
    %282 = vector.load %arg3[%c0_131, %c10_132] : memref<8x25xf32, #tpu.memory_space<vmem>>, vector<8x1xf32>
    %283 = vector.broadcast %282 : vector<8x1xf32> to vector<8x256xf32>
    %284 = arith.mulf %277, %283 : vector<8x256xf32>
    %285 = arith.addf %254, %284 : vector<8x256xf32>
    %286 = vector.extract_strided_slice %6 {offsets = [0, 255], sizes = [8, 256], strides = [1, 1]} : vector<8x512xf32> to vector<8x256xf32>
    %c23 = arith.constant 23 : index
    %c0_133 = arith.constant 0 : index
    %c0_134 = arith.constant 0 : index
    %287 = vector.load %arg6[%c23, %c0_133, %c0_134] : memref<49x1x256xf32, #tpu.memory_space<vmem>>, vector<1x1x256xf32>
    %288 = vector.shape_cast %287 : vector<1x1x256xf32> to vector<1x256xf32>
    %289 = vector.broadcast %288 : vector<1x256xf32> to vector<8x256xf32>
    %290 = arith.mulf %286, %289 : vector<8x256xf32>
    %c0_135 = arith.constant 0 : index
    %c23_136 = arith.constant 23 : index
    %291 = vector.load %arg2[%c0_135, %c23_136] : memref<8x49xf32, #tpu.memory_space<vmem>>, vector<8x1xf32>
    %292 = vector.broadcast %291 : vector<8x1xf32> to vector<8x256xf32>
    %293 = arith.mulf %290, %292 : vector<8x256xf32>
    %294 = arith.addf %281, %293 : vector<8x256xf32>
    %c0_137 = arith.constant 0 : index
    %c11_138 = arith.constant 11 : index
    %295 = vector.load %arg3[%c0_137, %c11_138] : memref<8x25xf32, #tpu.memory_space<vmem>>, vector<8x1xf32>
    %296 = vector.broadcast %295 : vector<8x1xf32> to vector<8x256xf32>
    %297 = arith.mulf %290, %296 : vector<8x256xf32>
    %298 = arith.addf %285, %297 : vector<8x256xf32>
    %cst_139 = arith.constant 5.000000e-01 : f32
    %299 = vector.broadcast %cst_139 : f32 to vector<1x256xf32>
    %300 = arith.cmpf ogt, %288, %299 : vector<1x256xf32>
    %cst_140 = arith.constant 0xFF800000 : f32
    %301 = vector.shape_cast %300 : vector<1x256xi1> to vector<1x256xi1>
    %302 = vector.broadcast %301 : vector<1x256xi1> to vector<8x256xi1>
    %303 = vector.broadcast %cst_140 : f32 to vector<8x256xf32>
    %304 = arith.select %302, %286, %303 : vector<8x256xi1>, vector<8x256xf32>
    %305 = arith.maximumf %241, %304 : vector<8x256xf32>
    %c24 = arith.constant 24 : index
    %c0_141 = arith.constant 0 : index
    %c0_142 = arith.constant 0 : index
    %306 = vector.load %arg6[%c24, %c0_141, %c0_142] : memref<49x1x256xf32, #tpu.memory_space<vmem>>, vector<1x1x256xf32>
    %307 = vector.shape_cast %306 : vector<1x1x256xf32> to vector<1x256xf32>
    %308 = vector.broadcast %307 : vector<1x256xf32> to vector<8x256xf32>
    %309 = arith.mulf %5, %308 : vector<8x256xf32>
    %c0_143 = arith.constant 0 : index
    %c24_144 = arith.constant 24 : index
    %310 = vector.load %arg2[%c0_143, %c24_144] : memref<8x49xf32, #tpu.memory_space<vmem>>, vector<8x1xf32>
    %311 = vector.broadcast %310 : vector<8x1xf32> to vector<8x256xf32>
    %312 = arith.mulf %309, %311 : vector<8x256xf32>
    %313 = arith.addf %294, %312 : vector<8x256xf32>
    %c0_145 = arith.constant 0 : index
    %c12_146 = arith.constant 12 : index
    %314 = vector.load %arg3[%c0_145, %c12_146] : memref<8x25xf32, #tpu.memory_space<vmem>>, vector<8x1xf32>
    %315 = vector.broadcast %314 : vector<8x1xf32> to vector<8x256xf32>
    %316 = arith.mulf %309, %315 : vector<8x256xf32>
    %317 = arith.addf %298, %316 : vector<8x256xf32>
    %cst_147 = arith.constant 5.000000e-01 : f32
    %318 = vector.broadcast %cst_147 : f32 to vector<1x256xf32>
    %319 = arith.cmpf ogt, %307, %318 : vector<1x256xf32>
    %cst_148 = arith.constant 0xFF800000 : f32
    %320 = vector.shape_cast %319 : vector<1x256xi1> to vector<1x256xi1>
    %321 = vector.broadcast %320 : vector<1x256xi1> to vector<8x256xi1>
    %322 = vector.broadcast %cst_148 : f32 to vector<8x256xf32>
    %323 = arith.select %321, %5, %322 : vector<8x256xi1>, vector<8x256xf32>
    %324 = arith.maximumf %305, %323 : vector<8x256xf32>
    %325 = vector.extract_strided_slice %6 {offsets = [0, 1], sizes = [8, 256], strides = [1, 1]} : vector<8x512xf32> to vector<8x256xf32>
    %c25 = arith.constant 25 : index
    %c0_149 = arith.constant 0 : index
    %c0_150 = arith.constant 0 : index
    %326 = vector.load %arg6[%c25, %c0_149, %c0_150] : memref<49x1x256xf32, #tpu.memory_space<vmem>>, vector<1x1x256xf32>
    %327 = vector.shape_cast %326 : vector<1x1x256xf32> to vector<1x256xf32>
    %328 = vector.broadcast %327 : vector<1x256xf32> to vector<8x256xf32>
    %329 = arith.mulf %325, %328 : vector<8x256xf32>
    %c0_151 = arith.constant 0 : index
    %c25_152 = arith.constant 25 : index
    %330 = vector.load %arg2[%c0_151, %c25_152] : memref<8x49xf32, #tpu.memory_space<vmem>>, vector<8x1xf32>
    %331 = vector.broadcast %330 : vector<8x1xf32> to vector<8x256xf32>
    %332 = arith.mulf %329, %331 : vector<8x256xf32>
    %333 = arith.addf %313, %332 : vector<8x256xf32>
    %c0_153 = arith.constant 0 : index
    %c13_154 = arith.constant 13 : index
    %334 = vector.load %arg3[%c0_153, %c13_154] : memref<8x25xf32, #tpu.memory_space<vmem>>, vector<8x1xf32>
    %335 = vector.broadcast %334 : vector<8x1xf32> to vector<8x256xf32>
    %336 = arith.mulf %329, %335 : vector<8x256xf32>
    %337 = arith.addf %317, %336 : vector<8x256xf32>
    %cst_155 = arith.constant 5.000000e-01 : f32
    %338 = vector.broadcast %cst_155 : f32 to vector<1x256xf32>
    %339 = arith.cmpf ogt, %327, %338 : vector<1x256xf32>
    %cst_156 = arith.constant 0xFF800000 : f32
    %340 = vector.shape_cast %339 : vector<1x256xi1> to vector<1x256xi1>
    %341 = vector.broadcast %340 : vector<1x256xi1> to vector<8x256xi1>
    %342 = vector.broadcast %cst_156 : f32 to vector<8x256xf32>
    %343 = arith.select %341, %325, %342 : vector<8x256xi1>, vector<8x256xf32>
    %344 = arith.maximumf %324, %343 : vector<8x256xf32>
    %345 = vector.extract_strided_slice %6 {offsets = [0, 2], sizes = [8, 256], strides = [1, 1]} : vector<8x512xf32> to vector<8x256xf32>
    %c26 = arith.constant 26 : index
    %c0_157 = arith.constant 0 : index
    %c0_158 = arith.constant 0 : index
    %346 = vector.load %arg6[%c26, %c0_157, %c0_158] : memref<49x1x256xf32, #tpu.memory_space<vmem>>, vector<1x1x256xf32>
    %347 = vector.shape_cast %346 : vector<1x1x256xf32> to vector<1x256xf32>
    %348 = vector.broadcast %347 : vector<1x256xf32> to vector<8x256xf32>
    %349 = arith.mulf %345, %348 : vector<8x256xf32>
    %c0_159 = arith.constant 0 : index
    %c26_160 = arith.constant 26 : index
    %350 = vector.load %arg2[%c0_159, %c26_160] : memref<8x49xf32, #tpu.memory_space<vmem>>, vector<8x1xf32>
    %351 = vector.broadcast %350 : vector<8x1xf32> to vector<8x256xf32>
    %352 = arith.mulf %349, %351 : vector<8x256xf32>
    %353 = arith.addf %333, %352 : vector<8x256xf32>
    %c0_161 = arith.constant 0 : index
    %c14_162 = arith.constant 14 : index
    %354 = vector.load %arg3[%c0_161, %c14_162] : memref<8x25xf32, #tpu.memory_space<vmem>>, vector<8x1xf32>
    %355 = vector.broadcast %354 : vector<8x1xf32> to vector<8x256xf32>
    %356 = arith.mulf %349, %355 : vector<8x256xf32>
    %357 = arith.addf %337, %356 : vector<8x256xf32>
    %358 = vector.extract_strided_slice %6 {offsets = [0, 3], sizes = [8, 256], strides = [1, 1]} : vector<8x512xf32> to vector<8x256xf32>
    %c27 = arith.constant 27 : index
    %c0_163 = arith.constant 0 : index
    %c0_164 = arith.constant 0 : index
    %359 = vector.load %arg6[%c27, %c0_163, %c0_164] : memref<49x1x256xf32, #tpu.memory_space<vmem>>, vector<1x1x256xf32>
    %360 = vector.shape_cast %359 : vector<1x1x256xf32> to vector<1x256xf32>
    %361 = vector.broadcast %360 : vector<1x256xf32> to vector<8x256xf32>
    %362 = arith.mulf %358, %361 : vector<8x256xf32>
    %c0_165 = arith.constant 0 : index
    %c27_166 = arith.constant 27 : index
    %363 = vector.load %arg2[%c0_165, %c27_166] : memref<8x49xf32, #tpu.memory_space<vmem>>, vector<8x1xf32>
    %364 = vector.broadcast %363 : vector<8x1xf32> to vector<8x256xf32>
    %365 = arith.mulf %362, %364 : vector<8x256xf32>
    %366 = arith.addf %353, %365 : vector<8x256xf32>
    %367 = vector.extract_strided_slice %6 {offsets = [0, 13], sizes = [8, 256], strides = [1, 1]} : vector<8x512xf32> to vector<8x256xf32>
    %c28 = arith.constant 28 : index
    %c0_167 = arith.constant 0 : index
    %c0_168 = arith.constant 0 : index
    %368 = vector.load %arg6[%c28, %c0_167, %c0_168] : memref<49x1x256xf32, #tpu.memory_space<vmem>>, vector<1x1x256xf32>
    %369 = vector.shape_cast %368 : vector<1x1x256xf32> to vector<1x256xf32>
    %370 = vector.broadcast %369 : vector<1x256xf32> to vector<8x256xf32>
    %371 = arith.mulf %367, %370 : vector<8x256xf32>
    %c0_169 = arith.constant 0 : index
    %c28_170 = arith.constant 28 : index
    %372 = vector.load %arg2[%c0_169, %c28_170] : memref<8x49xf32, #tpu.memory_space<vmem>>, vector<8x1xf32>
    %373 = vector.broadcast %372 : vector<8x1xf32> to vector<8x256xf32>
    %374 = arith.mulf %371, %373 : vector<8x256xf32>
    %375 = arith.addf %366, %374 : vector<8x256xf32>
    %376 = vector.extract_strided_slice %6 {offsets = [0, 14], sizes = [8, 256], strides = [1, 1]} : vector<8x512xf32> to vector<8x256xf32>
    %c29 = arith.constant 29 : index
    %c0_171 = arith.constant 0 : index
    %c0_172 = arith.constant 0 : index
    %377 = vector.load %arg6[%c29, %c0_171, %c0_172] : memref<49x1x256xf32, #tpu.memory_space<vmem>>, vector<1x1x256xf32>
    %378 = vector.shape_cast %377 : vector<1x1x256xf32> to vector<1x256xf32>
    %379 = vector.broadcast %378 : vector<1x256xf32> to vector<8x256xf32>
    %380 = arith.mulf %376, %379 : vector<8x256xf32>
    %c0_173 = arith.constant 0 : index
    %c29_174 = arith.constant 29 : index
    %381 = vector.load %arg2[%c0_173, %c29_174] : memref<8x49xf32, #tpu.memory_space<vmem>>, vector<8x1xf32>
    %382 = vector.broadcast %381 : vector<8x1xf32> to vector<8x256xf32>
    %383 = arith.mulf %380, %382 : vector<8x256xf32>
    %384 = arith.addf %375, %383 : vector<8x256xf32>
    %c0_175 = arith.constant 0 : index
    %c15_176 = arith.constant 15 : index
    %385 = vector.load %arg3[%c0_175, %c15_176] : memref<8x25xf32, #tpu.memory_space<vmem>>, vector<8x1xf32>
    %386 = vector.broadcast %385 : vector<8x1xf32> to vector<8x256xf32>
    %387 = arith.mulf %380, %386 : vector<8x256xf32>
    %388 = arith.addf %357, %387 : vector<8x256xf32>
    %389 = vector.extract_strided_slice %6 {offsets = [0, 15], sizes = [8, 256], strides = [1, 1]} : vector<8x512xf32> to vector<8x256xf32>
    %c30 = arith.constant 30 : index
    %c0_177 = arith.constant 0 : index
    %c0_178 = arith.constant 0 : index
    %390 = vector.load %arg6[%c30, %c0_177, %c0_178] : memref<49x1x256xf32, #tpu.memory_space<vmem>>, vector<1x1x256xf32>
    %391 = vector.shape_cast %390 : vector<1x1x256xf32> to vector<1x256xf32>
    %392 = vector.broadcast %391 : vector<1x256xf32> to vector<8x256xf32>
    %393 = arith.mulf %389, %392 : vector<8x256xf32>
    %c0_179 = arith.constant 0 : index
    %c30_180 = arith.constant 30 : index
    %394 = vector.load %arg2[%c0_179, %c30_180] : memref<8x49xf32, #tpu.memory_space<vmem>>, vector<8x1xf32>
    %395 = vector.broadcast %394 : vector<8x1xf32> to vector<8x256xf32>
    %396 = arith.mulf %393, %395 : vector<8x256xf32>
    %397 = arith.addf %384, %396 : vector<8x256xf32>
    %c0_181 = arith.constant 0 : index
    %c16_182 = arith.constant 16 : index
    %398 = vector.load %arg3[%c0_181, %c16_182] : memref<8x25xf32, #tpu.memory_space<vmem>>, vector<8x1xf32>
    %399 = vector.broadcast %398 : vector<8x1xf32> to vector<8x256xf32>
    %400 = arith.mulf %393, %399 : vector<8x256xf32>
    %401 = arith.addf %388, %400 : vector<8x256xf32>
    %cst_183 = arith.constant 5.000000e-01 : f32
    %402 = vector.broadcast %cst_183 : f32 to vector<1x256xf32>
    %403 = arith.cmpf ogt, %391, %402 : vector<1x256xf32>
    %cst_184 = arith.constant 0xFF800000 : f32
    %404 = vector.shape_cast %403 : vector<1x256xi1> to vector<1x256xi1>
    %405 = vector.broadcast %404 : vector<1x256xi1> to vector<8x256xi1>
    %406 = vector.broadcast %cst_184 : f32 to vector<8x256xf32>
    %407 = arith.select %405, %389, %406 : vector<8x256xi1>, vector<8x256xf32>
    %408 = arith.maximumf %344, %407 : vector<8x256xf32>
    %409 = vector.extract_strided_slice %6 {offsets = [0, 16], sizes = [8, 256], strides = [1, 1]} : vector<8x512xf32> to vector<8x256xf32>
    %c31 = arith.constant 31 : index
    %c0_185 = arith.constant 0 : index
    %c0_186 = arith.constant 0 : index
    %410 = vector.load %arg6[%c31, %c0_185, %c0_186] : memref<49x1x256xf32, #tpu.memory_space<vmem>>, vector<1x1x256xf32>
    %411 = vector.shape_cast %410 : vector<1x1x256xf32> to vector<1x256xf32>
    %412 = vector.broadcast %411 : vector<1x256xf32> to vector<8x256xf32>
    %413 = arith.mulf %409, %412 : vector<8x256xf32>
    %c0_187 = arith.constant 0 : index
    %c31_188 = arith.constant 31 : index
    %414 = vector.load %arg2[%c0_187, %c31_188] : memref<8x49xf32, #tpu.memory_space<vmem>>, vector<8x1xf32>
    %415 = vector.broadcast %414 : vector<8x1xf32> to vector<8x256xf32>
    %416 = arith.mulf %413, %415 : vector<8x256xf32>
    %417 = arith.addf %397, %416 : vector<8x256xf32>
    %c0_189 = arith.constant 0 : index
    %c17_190 = arith.constant 17 : index
    %418 = vector.load %arg3[%c0_189, %c17_190] : memref<8x25xf32, #tpu.memory_space<vmem>>, vector<8x1xf32>
    %419 = vector.broadcast %418 : vector<8x1xf32> to vector<8x256xf32>
    %420 = arith.mulf %413, %419 : vector<8x256xf32>
    %421 = arith.addf %401, %420 : vector<8x256xf32>
    %cst_191 = arith.constant 5.000000e-01 : f32
    %422 = vector.broadcast %cst_191 : f32 to vector<1x256xf32>
    %423 = arith.cmpf ogt, %411, %422 : vector<1x256xf32>
    %cst_192 = arith.constant 0xFF800000 : f32
    %424 = vector.shape_cast %423 : vector<1x256xi1> to vector<1x256xi1>
    %425 = vector.broadcast %424 : vector<1x256xi1> to vector<8x256xi1>
    %426 = vector.broadcast %cst_192 : f32 to vector<8x256xf32>
    %427 = arith.select %425, %409, %426 : vector<8x256xi1>, vector<8x256xf32>
    %428 = arith.maximumf %408, %427 : vector<8x256xf32>
    %429 = vector.extract_strided_slice %6 {offsets = [0, 17], sizes = [8, 256], strides = [1, 1]} : vector<8x512xf32> to vector<8x256xf32>
    %c32 = arith.constant 32 : index
    %c0_193 = arith.constant 0 : index
    %c0_194 = arith.constant 0 : index
    %430 = vector.load %arg6[%c32, %c0_193, %c0_194] : memref<49x1x256xf32, #tpu.memory_space<vmem>>, vector<1x1x256xf32>
    %431 = vector.shape_cast %430 : vector<1x1x256xf32> to vector<1x256xf32>
    %432 = vector.broadcast %431 : vector<1x256xf32> to vector<8x256xf32>
    %433 = arith.mulf %429, %432 : vector<8x256xf32>
    %c0_195 = arith.constant 0 : index
    %c32_196 = arith.constant 32 : index
    %434 = vector.load %arg2[%c0_195, %c32_196] : memref<8x49xf32, #tpu.memory_space<vmem>>, vector<8x1xf32>
    %435 = vector.broadcast %434 : vector<8x1xf32> to vector<8x256xf32>
    %436 = arith.mulf %433, %435 : vector<8x256xf32>
    %437 = arith.addf %417, %436 : vector<8x256xf32>
    %c0_197 = arith.constant 0 : index
    %c18_198 = arith.constant 18 : index
    %438 = vector.load %arg3[%c0_197, %c18_198] : memref<8x25xf32, #tpu.memory_space<vmem>>, vector<8x1xf32>
    %439 = vector.broadcast %438 : vector<8x1xf32> to vector<8x256xf32>
    %440 = arith.mulf %433, %439 : vector<8x256xf32>
    %441 = arith.addf %421, %440 : vector<8x256xf32>
    %cst_199 = arith.constant 5.000000e-01 : f32
    %442 = vector.broadcast %cst_199 : f32 to vector<1x256xf32>
    %443 = arith.cmpf ogt, %431, %442 : vector<1x256xf32>
    %cst_200 = arith.constant 0xFF800000 : f32
    %444 = vector.shape_cast %443 : vector<1x256xi1> to vector<1x256xi1>
    %445 = vector.broadcast %444 : vector<1x256xi1> to vector<8x256xi1>
    %446 = vector.broadcast %cst_200 : f32 to vector<8x256xf32>
    %447 = arith.select %445, %429, %446 : vector<8x256xi1>, vector<8x256xf32>
    %448 = arith.maximumf %428, %447 : vector<8x256xf32>
    %449 = vector.extract_strided_slice %6 {offsets = [0, 18], sizes = [8, 256], strides = [1, 1]} : vector<8x512xf32> to vector<8x256xf32>
    %c33 = arith.constant 33 : index
    %c0_201 = arith.constant 0 : index
    %c0_202 = arith.constant 0 : index
    %450 = vector.load %arg6[%c33, %c0_201, %c0_202] : memref<49x1x256xf32, #tpu.memory_space<vmem>>, vector<1x1x256xf32>
    %451 = vector.shape_cast %450 : vector<1x1x256xf32> to vector<1x256xf32>
    %452 = vector.broadcast %451 : vector<1x256xf32> to vector<8x256xf32>
    %453 = arith.mulf %449, %452 : vector<8x256xf32>
    %c0_203 = arith.constant 0 : index
    %c33_204 = arith.constant 33 : index
    %454 = vector.load %arg2[%c0_203, %c33_204] : memref<8x49xf32, #tpu.memory_space<vmem>>, vector<8x1xf32>
    %455 = vector.broadcast %454 : vector<8x1xf32> to vector<8x256xf32>
    %456 = arith.mulf %453, %455 : vector<8x256xf32>
    %457 = arith.addf %437, %456 : vector<8x256xf32>
    %c0_205 = arith.constant 0 : index
    %c19_206 = arith.constant 19 : index
    %458 = vector.load %arg3[%c0_205, %c19_206] : memref<8x25xf32, #tpu.memory_space<vmem>>, vector<8x1xf32>
    %459 = vector.broadcast %458 : vector<8x1xf32> to vector<8x256xf32>
    %460 = arith.mulf %453, %459 : vector<8x256xf32>
    %461 = arith.addf %441, %460 : vector<8x256xf32>
    %462 = vector.extract_strided_slice %6 {offsets = [0, 19], sizes = [8, 256], strides = [1, 1]} : vector<8x512xf32> to vector<8x256xf32>
    %c34 = arith.constant 34 : index
    %c0_207 = arith.constant 0 : index
    %c0_208 = arith.constant 0 : index
    %463 = vector.load %arg6[%c34, %c0_207, %c0_208] : memref<49x1x256xf32, #tpu.memory_space<vmem>>, vector<1x1x256xf32>
    %464 = vector.shape_cast %463 : vector<1x1x256xf32> to vector<1x256xf32>
    %465 = vector.broadcast %464 : vector<1x256xf32> to vector<8x256xf32>
    %466 = arith.mulf %462, %465 : vector<8x256xf32>
    %c0_209 = arith.constant 0 : index
    %c34_210 = arith.constant 34 : index
    %467 = vector.load %arg2[%c0_209, %c34_210] : memref<8x49xf32, #tpu.memory_space<vmem>>, vector<8x1xf32>
    %468 = vector.broadcast %467 : vector<8x1xf32> to vector<8x256xf32>
    %469 = arith.mulf %466, %468 : vector<8x256xf32>
    %470 = arith.addf %457, %469 : vector<8x256xf32>
    %471 = vector.extract_strided_slice %6 {offsets = [0, 29], sizes = [8, 256], strides = [1, 1]} : vector<8x512xf32> to vector<8x256xf32>
    %c35 = arith.constant 35 : index
    %c0_211 = arith.constant 0 : index
    %c0_212 = arith.constant 0 : index
    %472 = vector.load %arg6[%c35, %c0_211, %c0_212] : memref<49x1x256xf32, #tpu.memory_space<vmem>>, vector<1x1x256xf32>
    %473 = vector.shape_cast %472 : vector<1x1x256xf32> to vector<1x256xf32>
    %474 = vector.broadcast %473 : vector<1x256xf32> to vector<8x256xf32>
    %475 = arith.mulf %471, %474 : vector<8x256xf32>
    %c0_213 = arith.constant 0 : index
    %c35_214 = arith.constant 35 : index
    %476 = vector.load %arg2[%c0_213, %c35_214] : memref<8x49xf32, #tpu.memory_space<vmem>>, vector<8x1xf32>
    %477 = vector.broadcast %476 : vector<8x1xf32> to vector<8x256xf32>
    %478 = arith.mulf %475, %477 : vector<8x256xf32>
    %479 = arith.addf %470, %478 : vector<8x256xf32>
    %480 = vector.extract_strided_slice %6 {offsets = [0, 30], sizes = [8, 256], strides = [1, 1]} : vector<8x512xf32> to vector<8x256xf32>
    %c36 = arith.constant 36 : index
    %c0_215 = arith.constant 0 : index
    %c0_216 = arith.constant 0 : index
    %481 = vector.load %arg6[%c36, %c0_215, %c0_216] : memref<49x1x256xf32, #tpu.memory_space<vmem>>, vector<1x1x256xf32>
    %482 = vector.shape_cast %481 : vector<1x1x256xf32> to vector<1x256xf32>
    %483 = vector.broadcast %482 : vector<1x256xf32> to vector<8x256xf32>
    %484 = arith.mulf %480, %483 : vector<8x256xf32>
    %c0_217 = arith.constant 0 : index
    %c36_218 = arith.constant 36 : index
    %485 = vector.load %arg2[%c0_217, %c36_218] : memref<8x49xf32, #tpu.memory_space<vmem>>, vector<8x1xf32>
    %486 = vector.broadcast %485 : vector<8x1xf32> to vector<8x256xf32>
    %487 = arith.mulf %484, %486 : vector<8x256xf32>
    %488 = arith.addf %479, %487 : vector<8x256xf32>
    %c0_219 = arith.constant 0 : index
    %c20_220 = arith.constant 20 : index
    %489 = vector.load %arg3[%c0_219, %c20_220] : memref<8x25xf32, #tpu.memory_space<vmem>>, vector<8x1xf32>
    %490 = vector.broadcast %489 : vector<8x1xf32> to vector<8x256xf32>
    %491 = arith.mulf %484, %490 : vector<8x256xf32>
    %492 = arith.addf %461, %491 : vector<8x256xf32>
    %493 = vector.extract_strided_slice %6 {offsets = [0, 31], sizes = [8, 256], strides = [1, 1]} : vector<8x512xf32> to vector<8x256xf32>
    %c37 = arith.constant 37 : index
    %c0_221 = arith.constant 0 : index
    %c0_222 = arith.constant 0 : index
    %494 = vector.load %arg6[%c37, %c0_221, %c0_222] : memref<49x1x256xf32, #tpu.memory_space<vmem>>, vector<1x1x256xf32>
    %495 = vector.shape_cast %494 : vector<1x1x256xf32> to vector<1x256xf32>
    %496 = vector.broadcast %495 : vector<1x256xf32> to vector<8x256xf32>
    %497 = arith.mulf %493, %496 : vector<8x256xf32>
    %c0_223 = arith.constant 0 : index
    %c37_224 = arith.constant 37 : index
    %498 = vector.load %arg2[%c0_223, %c37_224] : memref<8x49xf32, #tpu.memory_space<vmem>>, vector<8x1xf32>
    %499 = vector.broadcast %498 : vector<8x1xf32> to vector<8x256xf32>
    %500 = arith.mulf %497, %499 : vector<8x256xf32>
    %501 = arith.addf %488, %500 : vector<8x256xf32>
    %c0_225 = arith.constant 0 : index
    %c21_226 = arith.constant 21 : index
    %502 = vector.load %arg3[%c0_225, %c21_226] : memref<8x25xf32, #tpu.memory_space<vmem>>, vector<8x1xf32>
    %503 = vector.broadcast %502 : vector<8x1xf32> to vector<8x256xf32>
    %504 = arith.mulf %497, %503 : vector<8x256xf32>
    %505 = arith.addf %492, %504 : vector<8x256xf32>
    %506 = vector.extract_strided_slice %6 {offsets = [0, 32], sizes = [8, 256], strides = [1, 1]} : vector<8x512xf32> to vector<8x256xf32>
    %c38 = arith.constant 38 : index
    %c0_227 = arith.constant 0 : index
    %c0_228 = arith.constant 0 : index
    %507 = vector.load %arg6[%c38, %c0_227, %c0_228] : memref<49x1x256xf32, #tpu.memory_space<vmem>>, vector<1x1x256xf32>
    %508 = vector.shape_cast %507 : vector<1x1x256xf32> to vector<1x256xf32>
    %509 = vector.broadcast %508 : vector<1x256xf32> to vector<8x256xf32>
    %510 = arith.mulf %506, %509 : vector<8x256xf32>
    %c0_229 = arith.constant 0 : index
    %c38_230 = arith.constant 38 : index
    %511 = vector.load %arg2[%c0_229, %c38_230] : memref<8x49xf32, #tpu.memory_space<vmem>>, vector<8x1xf32>
    %512 = vector.broadcast %511 : vector<8x1xf32> to vector<8x256xf32>
    %513 = arith.mulf %510, %512 : vector<8x256xf32>
    %514 = arith.addf %501, %513 : vector<8x256xf32>
    %c0_231 = arith.constant 0 : index
    %c22_232 = arith.constant 22 : index
    %515 = vector.load %arg3[%c0_231, %c22_232] : memref<8x25xf32, #tpu.memory_space<vmem>>, vector<8x1xf32>
    %516 = vector.broadcast %515 : vector<8x1xf32> to vector<8x256xf32>
    %517 = arith.mulf %510, %516 : vector<8x256xf32>
    %518 = arith.addf %505, %517 : vector<8x256xf32>
    %519 = vector.extract_strided_slice %6 {offsets = [0, 33], sizes = [8, 256], strides = [1, 1]} : vector<8x512xf32> to vector<8x256xf32>
    %c39 = arith.constant 39 : index
    %c0_233 = arith.constant 0 : index
    %c0_234 = arith.constant 0 : index
    %520 = vector.load %arg6[%c39, %c0_233, %c0_234] : memref<49x1x256xf32, #tpu.memory_space<vmem>>, vector<1x1x256xf32>
    %521 = vector.shape_cast %520 : vector<1x1x256xf32> to vector<1x256xf32>
    %522 = vector.broadcast %521 : vector<1x256xf32> to vector<8x256xf32>
    %523 = arith.mulf %519, %522 : vector<8x256xf32>
    %c0_235 = arith.constant 0 : index
    %c39_236 = arith.constant 39 : index
    %524 = vector.load %arg2[%c0_235, %c39_236] : memref<8x49xf32, #tpu.memory_space<vmem>>, vector<8x1xf32>
    %525 = vector.broadcast %524 : vector<8x1xf32> to vector<8x256xf32>
    %526 = arith.mulf %523, %525 : vector<8x256xf32>
    %527 = arith.addf %514, %526 : vector<8x256xf32>
    %c0_237 = arith.constant 0 : index
    %c23_238 = arith.constant 23 : index
    %528 = vector.load %arg3[%c0_237, %c23_238] : memref<8x25xf32, #tpu.memory_space<vmem>>, vector<8x1xf32>
    %529 = vector.broadcast %528 : vector<8x1xf32> to vector<8x256xf32>
    %530 = arith.mulf %523, %529 : vector<8x256xf32>
    %531 = arith.addf %518, %530 : vector<8x256xf32>
    %532 = vector.extract_strided_slice %6 {offsets = [0, 34], sizes = [8, 256], strides = [1, 1]} : vector<8x512xf32> to vector<8x256xf32>
    %c40 = arith.constant 40 : index
    %c0_239 = arith.constant 0 : index
    %c0_240 = arith.constant 0 : index
    %533 = vector.load %arg6[%c40, %c0_239, %c0_240] : memref<49x1x256xf32, #tpu.memory_space<vmem>>, vector<1x1x256xf32>
    %534 = vector.shape_cast %533 : vector<1x1x256xf32> to vector<1x256xf32>
    %535 = vector.broadcast %534 : vector<1x256xf32> to vector<8x256xf32>
    %536 = arith.mulf %532, %535 : vector<8x256xf32>
    %c0_241 = arith.constant 0 : index
    %c40_242 = arith.constant 40 : index
    %537 = vector.load %arg2[%c0_241, %c40_242] : memref<8x49xf32, #tpu.memory_space<vmem>>, vector<8x1xf32>
    %538 = vector.broadcast %537 : vector<8x1xf32> to vector<8x256xf32>
    %539 = arith.mulf %536, %538 : vector<8x256xf32>
    %540 = arith.addf %527, %539 : vector<8x256xf32>
    %c0_243 = arith.constant 0 : index
    %c24_244 = arith.constant 24 : index
    %541 = vector.load %arg3[%c0_243, %c24_244] : memref<8x25xf32, #tpu.memory_space<vmem>>, vector<8x1xf32>
    %542 = vector.broadcast %541 : vector<8x1xf32> to vector<8x256xf32>
    %543 = arith.mulf %536, %542 : vector<8x256xf32>
    %544 = arith.addf %531, %543 : vector<8x256xf32>
    %545 = vector.extract_strided_slice %6 {offsets = [0, 35], sizes = [8, 256], strides = [1, 1]} : vector<8x512xf32> to vector<8x256xf32>
    %c41 = arith.constant 41 : index
    %c0_245 = arith.constant 0 : index
    %c0_246 = arith.constant 0 : index
    %546 = vector.load %arg6[%c41, %c0_245, %c0_246] : memref<49x1x256xf32, #tpu.memory_space<vmem>>, vector<1x1x256xf32>
    %547 = vector.shape_cast %546 : vector<1x1x256xf32> to vector<1x256xf32>
    %548 = vector.broadcast %547 : vector<1x256xf32> to vector<8x256xf32>
    %549 = arith.mulf %545, %548 : vector<8x256xf32>
    %c0_247 = arith.constant 0 : index
    %c41_248 = arith.constant 41 : index
    %550 = vector.load %arg2[%c0_247, %c41_248] : memref<8x49xf32, #tpu.memory_space<vmem>>, vector<8x1xf32>
    %551 = vector.broadcast %550 : vector<8x1xf32> to vector<8x256xf32>
    %552 = arith.mulf %549, %551 : vector<8x256xf32>
    %553 = arith.addf %540, %552 : vector<8x256xf32>
    %554 = vector.extract_strided_slice %6 {offsets = [0, 45], sizes = [8, 256], strides = [1, 1]} : vector<8x512xf32> to vector<8x256xf32>
    %c42 = arith.constant 42 : index
    %c0_249 = arith.constant 0 : index
    %c0_250 = arith.constant 0 : index
    %555 = vector.load %arg6[%c42, %c0_249, %c0_250] : memref<49x1x256xf32, #tpu.memory_space<vmem>>, vector<1x1x256xf32>
    %556 = vector.shape_cast %555 : vector<1x1x256xf32> to vector<1x256xf32>
    %557 = vector.broadcast %556 : vector<1x256xf32> to vector<8x256xf32>
    %558 = arith.mulf %554, %557 : vector<8x256xf32>
    %c0_251 = arith.constant 0 : index
    %c42_252 = arith.constant 42 : index
    %559 = vector.load %arg2[%c0_251, %c42_252] : memref<8x49xf32, #tpu.memory_space<vmem>>, vector<8x1xf32>
    %560 = vector.broadcast %559 : vector<8x1xf32> to vector<8x256xf32>
    %561 = arith.mulf %558, %560 : vector<8x256xf32>
    %562 = arith.addf %553, %561 : vector<8x256xf32>
    %563 = vector.extract_strided_slice %6 {offsets = [0, 46], sizes = [8, 256], strides = [1, 1]} : vector<8x512xf32> to vector<8x256xf32>
    %c43 = arith.constant 43 : index
    %c0_253 = arith.constant 0 : index
    %c0_254 = arith.constant 0 : index
    %564 = vector.load %arg6[%c43, %c0_253, %c0_254] : memref<49x1x256xf32, #tpu.memory_space<vmem>>, vector<1x1x256xf32>
    %565 = vector.shape_cast %564 : vector<1x1x256xf32> to vector<1x256xf32>
    %566 = vector.broadcast %565 : vector<1x256xf32> to vector<8x256xf32>
    %567 = arith.mulf %563, %566 : vector<8x256xf32>
    %c0_255 = arith.constant 0 : index
    %c43_256 = arith.constant 43 : index
    %568 = vector.load %arg2[%c0_255, %c43_256] : memref<8x49xf32, #tpu.memory_space<vmem>>, vector<8x1xf32>
    %569 = vector.broadcast %568 : vector<8x1xf32> to vector<8x256xf32>
    %570 = arith.mulf %567, %569 : vector<8x256xf32>
    %571 = arith.addf %562, %570 : vector<8x256xf32>
    %572 = vector.extract_strided_slice %6 {offsets = [0, 47], sizes = [8, 256], strides = [1, 1]} : vector<8x512xf32> to vector<8x256xf32>
    %c44 = arith.constant 44 : index
    %c0_257 = arith.constant 0 : index
    %c0_258 = arith.constant 0 : index
    %573 = vector.load %arg6[%c44, %c0_257, %c0_258] : memref<49x1x256xf32, #tpu.memory_space<vmem>>, vector<1x1x256xf32>
    %574 = vector.shape_cast %573 : vector<1x1x256xf32> to vector<1x256xf32>
    %575 = vector.broadcast %574 : vector<1x256xf32> to vector<8x256xf32>
    %576 = arith.mulf %572, %575 : vector<8x256xf32>
    %c0_259 = arith.constant 0 : index
    %c44_260 = arith.constant 44 : index
    %577 = vector.load %arg2[%c0_259, %c44_260] : memref<8x49xf32, #tpu.memory_space<vmem>>, vector<8x1xf32>
    %578 = vector.broadcast %577 : vector<8x1xf32> to vector<8x256xf32>
    %579 = arith.mulf %576, %578 : vector<8x256xf32>
    %580 = arith.addf %571, %579 : vector<8x256xf32>
    %581 = vector.extract_strided_slice %6 {offsets = [0, 48], sizes = [8, 256], strides = [1, 1]} : vector<8x512xf32> to vector<8x256xf32>
    %c45 = arith.constant 45 : index
    %c0_261 = arith.constant 0 : index
    %c0_262 = arith.constant 0 : index
    %582 = vector.load %arg6[%c45, %c0_261, %c0_262] : memref<49x1x256xf32, #tpu.memory_space<vmem>>, vector<1x1x256xf32>
    %583 = vector.shape_cast %582 : vector<1x1x256xf32> to vector<1x256xf32>
    %584 = vector.broadcast %583 : vector<1x256xf32> to vector<8x256xf32>
    %585 = arith.mulf %581, %584 : vector<8x256xf32>
    %c0_263 = arith.constant 0 : index
    %c45_264 = arith.constant 45 : index
    %586 = vector.load %arg2[%c0_263, %c45_264] : memref<8x49xf32, #tpu.memory_space<vmem>>, vector<8x1xf32>
    %587 = vector.broadcast %586 : vector<8x1xf32> to vector<8x256xf32>
    %588 = arith.mulf %585, %587 : vector<8x256xf32>
    %589 = arith.addf %580, %588 : vector<8x256xf32>
    %590 = vector.extract_strided_slice %6 {offsets = [0, 49], sizes = [8, 256], strides = [1, 1]} : vector<8x512xf32> to vector<8x256xf32>
    %c46 = arith.constant 46 : index
    %c0_265 = arith.constant 0 : index
    %c0_266 = arith.constant 0 : index
    %591 = vector.load %arg6[%c46, %c0_265, %c0_266] : memref<49x1x256xf32, #tpu.memory_space<vmem>>, vector<1x1x256xf32>
    %592 = vector.shape_cast %591 : vector<1x1x256xf32> to vector<1x256xf32>
    %593 = vector.broadcast %592 : vector<1x256xf32> to vector<8x256xf32>
    %594 = arith.mulf %590, %593 : vector<8x256xf32>
    %c0_267 = arith.constant 0 : index
    %c46_268 = arith.constant 46 : index
    %595 = vector.load %arg2[%c0_267, %c46_268] : memref<8x49xf32, #tpu.memory_space<vmem>>, vector<8x1xf32>
    %596 = vector.broadcast %595 : vector<8x1xf32> to vector<8x256xf32>
    %597 = arith.mulf %594, %596 : vector<8x256xf32>
    %598 = arith.addf %589, %597 : vector<8x256xf32>
    %599 = vector.extract_strided_slice %6 {offsets = [0, 50], sizes = [8, 256], strides = [1, 1]} : vector<8x512xf32> to vector<8x256xf32>
    %c47 = arith.constant 47 : index
    %c0_269 = arith.constant 0 : index
    %c0_270 = arith.constant 0 : index
    %600 = vector.load %arg6[%c47, %c0_269, %c0_270] : memref<49x1x256xf32, #tpu.memory_space<vmem>>, vector<1x1x256xf32>
    %601 = vector.shape_cast %600 : vector<1x1x256xf32> to vector<1x256xf32>
    %602 = vector.broadcast %601 : vector<1x256xf32> to vector<8x256xf32>
    %603 = arith.mulf %599, %602 : vector<8x256xf32>
    %c0_271 = arith.constant 0 : index
    %c47_272 = arith.constant 47 : index
    %604 = vector.load %arg2[%c0_271, %c47_272] : memref<8x49xf32, #tpu.memory_space<vmem>>, vector<8x1xf32>
    %605 = vector.broadcast %604 : vector<8x1xf32> to vector<8x256xf32>
    %606 = arith.mulf %603, %605 : vector<8x256xf32>
    %607 = arith.addf %598, %606 : vector<8x256xf32>
    %608 = vector.extract_strided_slice %6 {offsets = [0, 51], sizes = [8, 256], strides = [1, 1]} : vector<8x512xf32> to vector<8x256xf32>
    %c48 = arith.constant 48 : index
    %c0_273 = arith.constant 0 : index
    %c0_274 = arith.constant 0 : index
    %609 = vector.load %arg6[%c48, %c0_273, %c0_274] : memref<49x1x256xf32, #tpu.memory_space<vmem>>, vector<1x1x256xf32>
    %610 = vector.shape_cast %609 : vector<1x1x256xf32> to vector<1x256xf32>
    %611 = vector.broadcast %610 : vector<1x256xf32> to vector<8x256xf32>
    %612 = arith.mulf %608, %611 : vector<8x256xf32>
    %c0_275 = arith.constant 0 : index
    %c48_276 = arith.constant 48 : index
    %613 = vector.load %arg2[%c0_275, %c48_276] : memref<8x49xf32, #tpu.memory_space<vmem>>, vector<8x1xf32>
    %614 = vector.broadcast %613 : vector<8x1xf32> to vector<8x256xf32>
    %615 = arith.mulf %612, %614 : vector<8x256xf32>
    %616 = arith.addf %607, %615 : vector<8x256xf32>
    %cst_277 = arith.constant 0.000000e+00 : f32
    %617 = vector.broadcast %cst_277 : f32 to vector<8x256xf32>
    %618 = arith.maximumf %616, %617 : vector<8x256xf32>
    %619 = arith.addf %544, %448 : vector<8x256xf32>
    %cst_278 = arith.constant 0.000000e+00 : f32
    %620 = vector.broadcast %cst_278 : f32 to vector<8x256xf32>
    %621 = arith.maximumf %619, %620 : vector<8x256xf32>
    %622 = tpu.concatenate %618, %621 in 0 : vector<8x256xf32>, vector<8x256xf32> -> vector<16x256xf32>
    %cst_279 = arith.constant dense<0.000000e+00> : vector<8x256xf32>
    %623 = tpu.matmul %3, %622, %cst_279 {dimension_numbers = #tpu.dot_dimension_numbers<[1], [0], [0], [1], [0, 0, 1, 1], [], []>} : vector<8x16xf32>, vector<16x256xf32>, vector<8x256xf32> -> vector<8x256xf32>
    %624 = vector.broadcast %2 : vector<8x1xf32> to vector<8x256xf32>
    %625 = arith.addf %623, %624 : vector<8x256xf32>
    %cst_280 = arith.constant 0.000000e+00 : f32
    %626 = vector.broadcast %cst_280 : f32 to vector<8x256xf32>
    %627 = arith.maximumf %625, %626 : vector<8x256xf32>
    %c0_281 = arith.constant 0 : index
    %c0_282 = arith.constant 0 : index
    %c0_283 = arith.constant 0 : index
    %628 = vector.load %arg7[%c0_281, %c0_282, %c0_283] : memref<1x8x256xf32, #tpu.memory_space<vmem>>, vector<1x8x256xf32>
    %629 = vector.shape_cast %628 : vector<1x8x256xf32> to vector<8x256xf32>
    %630 = vector.shape_cast %627 : vector<8x256xf32> to vector<1x8x256xf32>
    tpu.vector_store %arg7[%c0_281, %c0_282, %c0_283], %630 {strides = array<i32>} : memref<1x8x256xf32, #tpu.memory_space<vmem>>, vector<1x8x256xf32>,
    return
  }
  func.func @transform_0(%arg0: i32) -> (i32, i32, i32) {
    %c0_i32 = arith.constant 0 : i32
    %c0_i32_0 = arith.constant 0 : i32
    %c0_i32_1 = arith.constant 0 : i32
    return %arg0, %c0_i32, %c0_i32_0 : i32, i32, i32
  }
  func.func @transform_1(%arg0: i32) -> (i32, i32) {
    %c0_i32 = arith.constant 0 : i32
    %c0_i32_0 = arith.constant 0 : i32
    %c0_i32_1 = arith.constant 0 : i32
    return %c0_i32, %c0_i32_0 : i32, i32
  }
  func.func @transform_2(%arg0: i32) -> (i32, i32) {
    %c0_i32 = arith.constant 0 : i32
    %c0_i32_0 = arith.constant 0 : i32
    %c0_i32_1 = arith.constant 0 : i32
    return %c0_i32, %c0_i32_0 : i32, i32
  }
  func.func @transform_3(%arg0: i32) -> (i32, i32) {
    %c0_i32 = arith.constant 0 : i32
    %c0_i32_0 = arith.constant 0 : i32
    %c0_i32_1 = arith.constant 0 : i32
    return %c0_i32, %c0_i32_0 : i32, i32
  }
  func.func @transform_4(%arg0: i32) -> (i32, i32) {
    %c0_i32 = arith.constant 0 : i32
    %c0_i32_0 = arith.constant 0 : i32
    %c0_i32_1 = arith.constant 0 : i32
    return %c0_i32, %c0_i32_0 : i32, i32
  }
  func.func @transform_5(%arg0: i32) -> (i32, i32, i32) {
    %c0_i32 = arith.constant 0 : i32
    %c0_i32_0 = arith.constant 0 : i32
    %c0_i32_1 = arith.constant 0 : i32
    %c0_i32_2 = arith.constant 0 : i32
    return %c0_i32, %c0_i32_0, %c0_i32_1 : i32, i32, i32
  }
  func.func @transform_6(%arg0: i32) -> (i32, i32, i32) {
    %c0_i32 = arith.constant 0 : i32
    %c0_i32_0 = arith.constant 0 : i32
    %c0_i32_1 = arith.constant 0 : i32
    return %arg0, %c0_i32, %c0_i32_0 : i32, i32, i32
  }
}

</mosaic_0001>

<llo_original>
// kernel: tpu_custom_call.1
$region0: #{tpu_custom_call.1}
  #allocation0 [shape = 'u32[]', space=smem, size = 0x4, offset = 0x4, fixed_abs, tag = 'smem constant byte address 0x4 - core index']
  #allocation1 [shape = 'u32[72,128]{1,0:T(1,128)}', space=vmem, size = 0x9000, scoped, tag = 'internal scratch']
  %s0 = inlined_call_operand.hbm [shape: f32[2,8,256], index: 0, kind: input, shape index: {}]
  %s1 = inlined_call_operand.vmem [shape: f32[8,49], index: 1, kind: input, shape index: {}]
  %s2 = inlined_call_operand.hbm [shape: f32[8,25], index: 2, kind: input, shape index: {}]
  %s3 = inlined_call_operand.vmem [shape: f32[8,3], index: 3, kind: input, shape index: {}]
  %s4 = inlined_call_operand.hbm [shape: f32[8,16], index: 4, kind: input, shape index: {}]
  %s5 = inlined_call_operand.hbm [shape: f32[49,1,256], index: 5, kind: input, shape index: {}]
  %s6 = inlined_call_operand.hbm [shape: f32[2,8,256], index: 6, kind: output, shape index: {}]
  %s7 = sld [smem:[#allocation0]]
  $region73: #{tpu_custom_call.1} parent=0
    _
  %s9 = ssub.s32 1, %s7
  %s10 = scalar_select 0, %s9, %s7
  $region1: #{tpu_custom_call.1} parent=0
    #allocation2 [shape = 'u8[16384]{0}', space=vmem, size = 0x4000, scoped, tag = 'input window, operand 0']
    #allocation3 [shape = 's32[2]{0}', space=sflag, size = 0x8, scoped, tag = 'scoped memory for tpu_custom_call.1']
    #allocation4 [shape = 's32[2]{0}', space=sflag, size = 0x8, scoped, tag = 'scoped memory for tpu_custom_call.1']
    #allocation5 [shape = 'u8[4096]{0}', space=vmem, size = 0x1000, scoped, tag = 'input window, operand 2, single buffered']
    #allocation6 [shape = 's32[1]{0}', space=sflag, size = 0x4, scoped, tag = 'scoped memory for tpu_custom_call.1']
    #allocation7 [shape = 'u8[4096]{0}', space=vmem, size = 0x1000, scoped, tag = 'input window, operand 4, single buffered']
    #allocation8 [shape = 'u8[50176]{0}', space=vmem, size = 0xc400, scoped, tag = 'input window, operand 5, single buffered']
    #allocation9 [shape = 's32[1]{0}', space=sflag, size = 0x4, scoped, tag = 'scoped memory for tpu_custom_call.1']
    #allocation10 [shape = 'u8[16384]{0}', space=vmem, size = 0x4000, scoped, tag = 'output window, operand 0']
    %11 = vsyncpa [#allocation3], 0
    %s12 = scalar_lea.sflag [#allocation3], 1
    %13 = vsyncpa %s12, 0
    %14 = vsyncpa [#allocation6], 0
    %15 = vsyncpa [#allocation9], 0
    %16 = vsyncpa [#allocation4], 0
    %s17 = scalar_lea.sflag [#allocation4], 1
    %18 = vsyncpa %s17, 0
    loop: start=0, step=1, limit=4
    $region2: #{tpu_custom_call.1} parent=1 // loop_pre_header
      _
    $region3: #{tpu_custom_call.1} parent=1 // loop_header
      %s20 = sphi 0, %s24
      %p21 = scmp.ge.s32.totalorder %s20, 4
      %s30 = sphi 0, %s32
      %s33 = sphi 0, %s30
      %s34 = sphi 0, %s33
      %s50 = sphi 0, %s34
      %s54 = sphi 0, %s54
      %s56 = sphi 0, %s54
      %s57 = sphi 0, %s56
      %s71 = sphi 0, %s57
      %s75 = sphi 0, %s75
      %s77 = sphi 0, %s75
      %s78 = sphi 0, %s77
      %s92 = sphi 0, %s78
      %s96 = sphi 0, %s96
      %s98 = sphi 0, %s96
      %s99 = sphi 0, %s98
      %s113 = sphi 0, %s99
      %s117 = sphi 0, %s117
      %s119 = sphi 0, %s117
      %s120 = sphi 0, %s119
      %s134 = sphi 0, %s120
      %s138 = sphi 0, %s138
      %s140 = sphi 0, %s138
      %s141 = sphi 0, %s140
      %s155 = sphi 0, %s141
      %s161 = sphi 0, %s163
      %s164 = sphi 0, %s161
      %s165 = sphi 0, %s164
      %s181 = sphi 0, %s165
    $region4: #{tpu_custom_call.1} parent=1 // loop_header_branch
      %23 = sbr.rel (%p21) target = $region8
    $region5: #{tpu_custom_call.1} parent=1 // loop_body
      %s25 = ssub.s32 %s20, 1
      %s26 = ssub.s32 %s20, 2
      %s27 = sadd.s32 %s20, 1
      %s28 = ssub.s32 %s20, %s27
      %p29 = scmp.eq.s32.totalorder %s28, 0
      %s31 = sadd.s32 %s30, 1
      %s32 = scalar_select %p29, %s30, %s31
      %p35 = pneg %p29
      %p36 = scmp.eq.s32.totalorder %s20, 1
      %p37 = por %p35, %p36
      %p38 = scmp.ne.s32.totalorder %s30, %s33
      %p39 = scmp.eq.s32.totalorder %s20, 0
      %p40 = por %p38, %p39
      %p41 = scmp.ne.s32.totalorder %s30, %s33
      %p42 = scmp.eq.s32.totalorder %s25, 1
      %p43 = por %p41, %p42
      %p44 = scmp.ne.s32.totalorder %s33, %s34
      %p45 = scmp.eq.s32.totalorder %s25, 0
      %p46 = por %p44, %p45
      %p47 = scmp.ne.s32.totalorder %s33, %s34
      %p48 = scmp.eq.s32.totalorder %s26, 1
      %p49 = por %p47, %p48
      %p51 = scmp.ne.s32.totalorder %s34, %s50
      %p52 = scmp.eq.s32.totalorder %s26, 0
      %p53 = por %p51, %p52
      %s55 = sadd.s32 %s54, 1
      %p58 = scmp.eq.s32.totalorder %s20, 1
      %p59 = scmp.ne.s32.totalorder %s54, %s56
      %p60 = scmp.eq.s32.totalorder %s20, 0
      %p61 = por %p59, %p60
      %p62 = scmp.ne.s32.totalorder %s54, %s56
      %p63 = scmp.eq.s32.totalorder %s25, 1
      %p64 = por %p62, %p63
      %p65 = scmp.ne.s32.totalorder %s56, %s57
      %p66 = scmp.eq.s32.totalorder %s25, 0
      %p67 = por %p65, %p66
      %p68 = scmp.ne.s32.totalorder %s56, %s57
      %p69 = scmp.eq.s32.totalorder %s26, 1
      %p70 = por %p68, %p69
      %p72 = scmp.ne.s32.totalorder %s57, %s71
      %p73 = scmp.eq.s32.totalorder %s26, 0
      %p74 = por %p72, %p73
      %s76 = sadd.s32 %s75, 1
      %p79 = scmp.eq.s32.totalorder %s20, 1
      %p80 = scmp.ne.s32.totalorder %s75, %s77
      %p81 = scmp.eq.s32.totalorder %s20, 0
      %p82 = por %p80, %p81
      %p83 = scmp.ne.s32.totalorder %s75, %s77
      %p84 = scmp.eq.s32.totalorder %s25, 1
      %p85 = por %p83, %p84
      %p86 = scmp.ne.s32.totalorder %s77, %s78
      %p87 = scmp.eq.s32.totalorder %s25, 0
      %p88 = por %p86, %p87
      %p89 = scmp.ne.s32.totalorder %s77, %s78
      %p90 = scmp.eq.s32.totalorder %s26, 1
      %p91 = por %p89, %p90
      %p93 = scmp.ne.s32.totalorder %s78, %s92
      %p94 = scmp.eq.s32.totalorder %s26, 0
      %p95 = por %p93, %p94
      %s97 = sadd.s32 %s96, 1
      %p100 = scmp.eq.s32.totalorder %s20, 1
      %p101 = scmp.ne.s32.totalorder %s96, %s98
      %p102 = scmp.eq.s32.totalorder %s20, 0
      %p103 = por %p101, %p102
      %p104 = scmp.ne.s32.totalorder %s96, %s98
      %p105 = scmp.eq.s32.totalorder %s25, 1
      %p106 = por %p104, %p105
      %p107 = scmp.ne.s32.totalorder %s98, %s99
      %p108 = scmp.eq.s32.totalorder %s25, 0
      %p109 = por %p107, %p108
      %p110 = scmp.ne.s32.totalorder %s98, %s99
      %p111 = scmp.eq.s32.totalorder %s26, 1
      %p112 = por %p110, %p111
      %p114 = scmp.ne.s32.totalorder %s99, %s113
      %p115 = scmp.eq.s32.totalorder %s26, 0
      %p116 = por %p114, %p115
      %s118 = sadd.s32 %s117, 1
      %p121 = scmp.eq.s32.totalorder %s20, 1
      %p122 = scmp.ne.s32.totalorder %s117, %s119
      %p123 = scmp.eq.s32.totalorder %s20, 0
      %p124 = por %p122, %p123
      %p125 = scmp.ne.s32.totalorder %s117, %s119
      %p126 = scmp.eq.s32.totalorder %s25, 1
      %p127 = por %p125, %p126
      %p128 = scmp.ne.s32.totalorder %s119, %s120
      %p129 = scmp.eq.s32.totalorder %s25, 0
      %p130 = por %p128, %p129
      %p131 = scmp.ne.s32.totalorder %s119, %s120
      %p132 = scmp.eq.s32.totalorder %s26, 1
      %p133 = por %p131, %p132
      %p135 = scmp.ne.s32.totalorder %s120, %s134
      %p136 = scmp.eq.s32.totalorder %s26, 0
      %p137 = por %p135, %p136
      %s139 = sadd.s32 %s138, 1
      %p142 = scmp.eq.s32.totalorder %s20, 1
      %p143 = scmp.ne.s32.totalorder %s138, %s140
      %p144 = scmp.eq.s32.totalorder %s20, 0
      %p145 = por %p143, %p144
      %p146 = scmp.ne.s32.totalorder %s138, %s140
      %p147 = scmp.eq.s32.totalorder %s25, 1
      %p148 = por %p146, %p147
      %p149 = scmp.ne.s32.totalorder %s140, %s141
      %p150 = scmp.eq.s32.totalorder %s25, 0
      %p151 = por %p149, %p150
      %p152 = scmp.ne.s32.totalorder %s140, %s141
      %p153 = scmp.eq.s32.totalorder %s26, 1
      %p154 = por %p152, %p153
      %p156 = scmp.ne.s32.totalorder %s141, %s155
      %p157 = scmp.eq.s32.totalorder %s26, 0
      %p158 = por %p156, %p157
      %s159 = ssub.s32 %s20, %s27
      %p160 = scmp.eq.s32.totalorder %s159, 0
      %s162 = sadd.s32 %s161, 1
      %s163 = scalar_select %p160, %s161, %s162
      %p166 = pneg %p160
      %p167 = scmp.eq.s32.totalorder %s20, 1
      %p168 = por %p166, %p167
      %p169 = scmp.ne.s32.totalorder %s161, %s164
      %p170 = scmp.eq.s32.totalorder %s20, 0
      %p171 = por %p169, %p170
      %p172 = scmp.ne.s32.totalorder %s161, %s164
      %p173 = scmp.eq.s32.totalorder %s25, 1
      %p174 = por %p172, %p173
      %p175 = scmp.ne.s32.totalorder %s164, %s165
      %p176 = scmp.eq.s32.totalorder %s25, 0
      %p177 = por %p175, %p176
      %p178 = scmp.ne.s32.totalorder %s164, %s165
      %p179 = scmp.eq.s32.totalorder %s26, 1
      %p180 = por %p178, %p179
      %p182 = scmp.ne.s32.totalorder %s165, %s181
      %p183 = scmp.eq.s32.totalorder %s26, 0
      %p184 = por %p182, %p183
      %p185 = scmp.le.s32.totalorder 1, %s20
      %p186 = scmp.lt.s32.totalorder %s20, 3
      %p187 = pnand %p185, %p186
      %p188 = pneg %p187
      // Predicated region
      $region9: #{tpu_custom_call.1} parent=5 // pred_check
        _
      $region10: #{tpu_custom_call.1} parent=5 // pred_check_branch
        %190 = sbr.rel (%p187) target = $region12
      $region11: #{tpu_custom_call.1} parent=5 // pred_region
        %s191 = ssub.s32 %s20, 1
        // Predicated region
        $region13: #{tpu_custom_call.1} parent=11 // pred_check
          %p192 = pneg %p67
        $region14: #{tpu_custom_call.1} parent=11 // pred_check_branch
          %194 = sbr.rel (%p192) target = $region16
        $region15: #{tpu_custom_call.1} parent=11 // pred_region
          _
        $region16: #{tpu_custom_call.1} parent=11 // pred_fallthru
          _
        // Predicated region
        $region17: #{tpu_custom_call.1} parent=11 // pred_check
          %p195 = pneg %p88
        $region18: #{tpu_custom_call.1} parent=11 // pred_check_branch
          %197 = sbr.rel (%p195) target = $region20
        $region19: #{tpu_custom_call.1} parent=11 // pred_region
          %199 = vsyncadd [#allocation6], 0
          %s201 = sshll.u32 %s2, 4
          %s202 = int_to_ptr.hbm [resolvable:$true] %s201
          %s203 = sshll.u32 [#allocation5], 4
          %s204 = int_to_ptr.vmem [resolvable:$true] %s203
          %206 = dma.hbm_to_vmem [thread:$0]  %s202, 128, %s204, [#allocation6]
        $region20: #{tpu_custom_call.1} parent=11 // pred_fallthru
          _
        // Predicated region
        $region21: #{tpu_custom_call.1} parent=11 // pred_check
          %p207 = pneg %p109
        $region22: #{tpu_custom_call.1} parent=11 // pred_check_branch
          %209 = sbr.rel (%p207) target = $region24
        $region23: #{tpu_custom_call.1} parent=11 // pred_region
          _
        $region24: #{tpu_custom_call.1} parent=11 // pred_fallthru
          _
        // Predicated region
        $region25: #{tpu_custom_call.1} parent=11 // pred_check
          %p210 = pneg %p130
        $region26: #{tpu_custom_call.1} parent=11 // pred_check_branch
          %212 = sbr.rel (%p210) target = $region28
        $region27: #{tpu_custom_call.1} parent=11 // pred_region
          %214 = vsyncadd [#allocation6], 0
          %s216 = sshll.u32 %s4, 4
          %s217 = int_to_ptr.hbm [resolvable:$true] %s216
          %s218 = sshll.u32 [#allocation7], 4
          %s219 = int_to_ptr.vmem [resolvable:$true] %s218
          %221 = dma.hbm_to_vmem [thread:$0]  %s217, 128, %s219, [#allocation6]
        $region28: #{tpu_custom_call.1} parent=11 // pred_fallthru
          _
        // Predicated region
        $region29: #{tpu_custom_call.1} parent=11 // pred_check
          %p222 = pneg %p151
        $region30: #{tpu_custom_call.1} parent=11 // pred_check_branch
          %224 = sbr.rel (%p222) target = $region32
        $region31: #{tpu_custom_call.1} parent=11 // pred_region
          %226 = vsyncadd [#allocation9], 0
          %s227 = sshll.u32 %s5, 4
          %s228 = int_to_ptr.hbm [resolvable:$true] %s227
          %s229 = sshll.u32 [#allocation8], 4
          %s230 = int_to_ptr.vmem [resolvable:$true] %s229
          %235 = dma.hbm_to_vmem [thread:$0]  %s228, 1568, %s230, [#allocation9], 32, 32, 2
        $region32: #{tpu_custom_call.1} parent=11 // pred_fallthru
          _
      $region12: #{tpu_custom_call.1} parent=5 // pred_fallthru
        _
      %p236 = scmp.lt.s32.totalorder %s20, 2
      // Predicated region
      $region33: #{tpu_custom_call.1} parent=5 // pred_check
        %p237 = pneg %p236
      $region34: #{tpu_custom_call.1} parent=5 // pred_check_branch
        %239 = sbr.rel (%p237) target = $region36
      $region35: #{tpu_custom_call.1} parent=5 // pred_region
        // Predicated region
        $region37: #{tpu_custom_call.1} parent=35 // pred_check
          %p240 = pneg %p40
        $region38: #{tpu_custom_call.1} parent=35 // pred_check_branch
          %242 = sbr.rel (%p240) target = $region40
        $region39: #{tpu_custom_call.1} parent=35 // pred_region
          %s243 = sand.u32 %s30, 1
          %s244 = scalar_lea.sflag [#allocation3], %s243
          %s245 = sand.u32 %s30, 1
          %s246 = smul.addr %s245, 16
          %s247 = scalar_lea.vmem [#allocation2], %s246
          %249 = vsyncadd %s244, 0
          %s250 = smul.addr %s20, 2
          %s251 = smul.addr %s250, 8
          %s252 = scalar_lea.hbm %s0, %s251
          %s254 = sshll.u32 %s252, 4
          %s255 = int_to_ptr.hbm [resolvable:$true] %s254
          %s256 = sshll.u32 %s247, 4
          %s257 = int_to_ptr.vmem [resolvable:$true] %s256
          %259 = dma.hbm_to_vmem [thread:$0]  %s255, 256, %s257, %s244
        $region40: #{tpu_custom_call.1} parent=35 // pred_fallthru
          _
      $region36: #{tpu_custom_call.1} parent=5 // pred_fallthru
        _
      %p260 = scmp.le.s32.totalorder 1, %s20
      %p261 = scmp.lt.s32.totalorder %s20, 3
      %p262 = pnand %p260, %p261
      %p263 = pneg %p262
      // Predicated region
      $region41: #{tpu_custom_call.1} parent=5 // pred_check
        _
      $region42: #{tpu_custom_call.1} parent=5 // pred_check_branch
        %265 = sbr.rel (%p262) target = $region44
      $region43: #{tpu_custom_call.1} parent=5 // pred_region
        %s266 = ssub.s32 %s20, 1
        %s267 = sand.u32 %s33, 1
        %s268 = scalar_lea.sflag [#allocation3], %s267
        %s269 = sand.u32 %s33, 1
        %s270 = smul.addr %s269, 16
        %s271 = scalar_lea.vmem [#allocation2], %s270
        // Predicated region
        $region45: #{tpu_custom_call.1} parent=43 // pred_check
          %p272 = pneg %p46
        $region46: #{tpu_custom_call.1} parent=43 // pred_check_branch
          %274 = sbr.rel (%p272) target = $region48
        $region47: #{tpu_custom_call.1} parent=43 // pred_region
          %276 = dma.done %s268, 256
        $region48: #{tpu_custom_call.1} parent=43 // pred_fallthru
          _
        // Predicated region
        $region49: #{tpu_custom_call.1} parent=43 // pred_check
          %p277 = pneg %p88
        $region50: #{tpu_custom_call.1} parent=43 // pred_check_branch
          %279 = sbr.rel (%p277) target = $region52
        $region51: #{tpu_custom_call.1} parent=43 // pred_region
          %281 = dma.done [#allocation6], 128
        $region52: #{tpu_custom_call.1} parent=43 // pred_fallthru
          _
        // Predicated region
        $region53: #{tpu_custom_call.1} parent=43 // pred_check
          %p282 = pneg %p130
        $region54: #{tpu_custom_call.1} parent=43 // pred_check_branch
          %284 = sbr.rel (%p282) target = $region56
        $region55: #{tpu_custom_call.1} parent=43 // pred_region
          %286 = dma.done [#allocation6], 128
        $region56: #{tpu_custom_call.1} parent=43 // pred_fallthru
          _
        // Predicated region
        $region57: #{tpu_custom_call.1} parent=43 // pred_check
          %p287 = pneg %p151
        $region58: #{tpu_custom_call.1} parent=43 // pred_check_branch
          %289 = sbr.rel (%p287) target = $region60
        $region59: #{tpu_custom_call.1} parent=43 // pred_region
          %291 = dma.done [#allocation9], 1568
        $region60: #{tpu_custom_call.1} parent=43 // pred_fallthru
          _
        %s292 = sand.u32 %s33, 1
        %s293 = scalar_lea.sflag [#allocation3], %s292
        %s294 = sand.u32 %s33, 1
        %s295 = smul.addr %s294, 16
        %s296 = scalar_lea.vmem [#allocation2], %s295
        %p297 = pneg %p46
        %p298 = pneg %p43
        %p299 = pneg %p67
        %p300 = pneg %p64
        %p301 = pneg %p88
        %p302 = pneg %p85
        %p303 = pneg %p109
        %p304 = pneg %p106
        %p305 = pneg %p130
        %p306 = pneg %p127
        %p307 = pneg %p151
        %p308 = pneg %p148
        %p309 = pneg %p177
        %p310 = pneg %p174
        %s311 = sand.u32 %s164, 1
        %s312 = scalar_lea.sflag [#allocation4], %s311
        %s313 = sand.u32 %s164, 1
        %s314 = smul.addr %s313, 16
        %s315 = scalar_lea.vmem [#allocation10], %s314
        %v316 = vld [vmem:[%s3] sm:$0xff]
        %v317 = vld [vmem:[#allocation7] sm:$0xff]
        %v318 = vld [vmem:[%s271] sm:$0xff]
        %v319 = vld [vmem:[%s271 + $0x8] sm:$0xff]
        %321 = vset.pattern.permute.xlu0 0
        %322 = vperm.xlu0 %321, %v316
        %v323 = vpop.permute.xlu0 %322
        %v325 = vadd.f32 %v323, 0.0
        %326 = vset.pattern.permute.xlu0 1
        %327 = vperm.xlu0 %326, %v316
        %v328 = vpop.permute.xlu0 %327
        %v330 = vadd.f32 %v328, 0.0
        %v331 = vld [vmem:[#allocation8] sm:$0x3]
        %v333 = vperm.slane %v331, 0
        %v334 = vperm.slane %v331, 1
        %335 = vrot.lane.b32.xlu0 %v333, 77
        %v336 = vpop.permute.xlu0 %335
        %337 = vrot.lane.b32.xlu0 %v334, 77
        %v338 = vpop.permute.xlu0 %337
        %vm339 = vcmask 629760
        %v340 = vsel %vm339, %v336, %v338
        %v344 = vmul.f32 %v319, %v336
        %v345 = vmul.f32 %v318, %v340
        %v346 = vmul.f32 %v319, %v338
        %v347 = vld [vmem:[%s1] sm:$0xff]
        %349 = vset.pattern.permute.xlu0 0
        %350 = vperm.xlu0 %349, %v347
        %v351 = vpop.permute.xlu0 %350
        %v353 = vmul.f32 %v344, %v351
        %v354 = vmul.f32 %v345, %v351
        %v355 = vmul.f32 %v346, %v351
        %v356 = vadd.f32 %v325, %v353
        %v357 = vadd.f32 %v325, %v354
        %v358 = vadd.f32 %v325, %v355
        %s359 = scalar_lea.vmem [#allocation8], 2
        %v360 = vld [vmem:[%s359] sm:$0x3]
        %v362 = vperm.slane %v360, 0
        %v363 = vperm.slane %v360, 1
        %364 = vrot.lane.b32.xlu0 %v362, 78
        %v365 = vpop.permute.xlu0 %364
        %366 = vrot.lane.b32.xlu0 %v363, 78
        %v367 = vpop.permute.xlu0 %366
        %vm368 = vcmask 637952
        %v369 = vsel %vm368, %v365, %v367
        %v373 = vmul.f32 %v319, %v365
        %v374 = vmul.f32 %v318, %v369
        %v375 = vmul.f32 %v319, %v367
        %376 = vset.pattern.permute.xlu0 1
        %377 = vperm.xlu0 %376, %v347
        %v378 = vpop.permute.xlu0 %377
        %v380 = vmul.f32 %v373, %v378
        %v381 = vmul.f32 %v374, %v378
        %v382 = vmul.f32 %v375, %v378
        %386 = vrot.lane.b32.xlu0 %v380, 127
        %v387 = vpop.permute.xlu0 %386
        %388 = vrot.lane.b32.xlu0 %v381, 127
        %v389 = vpop.permute.xlu0 %388
        %390 = vrot.lane.b32.xlu0 %v382, 127
        %v391 = vpop.permute.xlu0 %390
        %vm392 = vcmask 1039360
        %v393 = vsel %vm392, %v387, %v389
        %v394 = vsel %vm392, %v389, %v391
        %v398 = vadd.f32 %v356, %v393
        %v399 = vadd.f32 %v357, %v394
        %v400 = vadd.f32 %v358, %v391
        %s401 = scalar_lea.vmem [#allocation8], 4
        %v402 = vld [vmem:[%s401] sm:$0x3]
        %v404 = vperm.slane %v402, 0
        %v405 = vperm.slane %v402, 1
        %406 = vrot.lane.b32.xlu0 %v404, 79
        %v407 = vpop.permute.xlu0 %406
        %408 = vrot.lane.b32.xlu0 %v405, 79
        %v409 = vpop.permute.xlu0 %408
        %vm410 = vcmask 646144
        %v411 = vsel %vm410, %v407, %v409
        %v415 = vmul.f32 %v319, %v407
        %v416 = vmul.f32 %v318, %v411
        %v417 = vmul.f32 %v319, %v409
        %418 = vset.pattern.permute.xlu0 2
        %419 = vperm.xlu0 %418, %v347
        %v420 = vpop.permute.xlu0 %419
        %v422 = vmul.f32 %v415, %v420
        %v423 = vmul.f32 %v416, %v420
        %v424 = vmul.f32 %v417, %v420
        %428 = vrot.lane.b32.xlu0 %v422, 126
        %v429 = vpop.permute.xlu0 %428
        %430 = vrot.lane.b32.xlu0 %v423, 126
        %v431 = vpop.permute.xlu0 %430
        %432 = vrot.lane.b32.xlu0 %v424, 126
        %v433 = vpop.permute.xlu0 %432
        %vm434 = vcmask 1031168
        %v435 = vsel %vm434, %v429, %v431
        %v436 = vsel %vm434, %v431, %v433
        %v440 = vadd.f32 %v398, %v435
        %v441 = vadd.f32 %v399, %v436
        %v442 = vadd.f32 %v400, %v433
        %s443 = scalar_lea.vmem [#allocation8], 6
        %v444 = vld [vmem:[%s443] sm:$0x3]
        %v446 = vperm.slane %v444, 0
        %v447 = vperm.slane %v444, 1
        %448 = vrot.lane.b32.xlu0 %v446, 80
        %v449 = vpop.permute.xlu0 %448
        %450 = vrot.lane.b32.xlu0 %v447, 80
        %v451 = vpop.permute.xlu0 %450
        %vm452 = vcmask 654336
        %v453 = vsel %vm452, %v449, %v451
        %v457 = vmul.f32 %v319, %v449
        %v458 = vmul.f32 %v318, %v453
        %v459 = vmul.f32 %v319, %v451
        %460 = vset.pattern.permute.xlu0 3
        %461 = vperm.xlu0 %460, %v347
        %v462 = vpop.permute.xlu0 %461
        %v464 = vmul.f32 %v457, %v462
        %v465 = vmul.f32 %v458, %v462
        %v466 = vmul.f32 %v459, %v462
        %470 = vrot.lane.b32.xlu0 %v464, 125
        %v471 = vpop.permute.xlu0 %470
        %472 = vrot.lane.b32.xlu0 %v465, 125
        %v473 = vpop.permute.xlu0 %472
        %474 = vrot.lane.b32.xlu0 %v466, 125
        %v475 = vpop.permute.xlu0 %474
        %vm476 = vcmask 1022976
        %v477 = vsel %vm476, %v471, %v473
        %v478 = vsel %vm476, %v473, %v475
        %v482 = vadd.f32 %v440, %v477
        %v483 = vadd.f32 %v441, %v478
        %v484 = vadd.f32 %v442, %v475
        %s485 = scalar_lea.vmem [#allocation8], 8
        %v486 = vld [vmem:[%s485] sm:$0x3]
        %v488 = vperm.slane %v486, 0
        %v489 = vperm.slane %v486, 1
        %490 = vrot.lane.b32.xlu0 %v488, 81
        %v491 = vpop.permute.xlu0 %490
        %492 = vrot.lane.b32.xlu0 %v489, 81
        %v493 = vpop.permute.xlu0 %492
        %vm494 = vcmask 662528
        %v495 = vsel %vm494, %v491, %v493
        %v499 = vmul.f32 %v319, %v491
        %v500 = vmul.f32 %v318, %v495
        %v501 = vmul.f32 %v319, %v493
        %502 = vset.pattern.permute.xlu0 4
        %503 = vperm.xlu0 %502, %v347
        %v504 = vpop.permute.xlu0 %503
        %v506 = vmul.f32 %v499, %v504
        %v507 = vmul.f32 %v500, %v504
        %v508 = vmul.f32 %v501, %v504
        %512 = vrot.lane.b32.xlu0 %v506, 124
        %v513 = vpop.permute.xlu0 %512
        %514 = vrot.lane.b32.xlu0 %v507, 124
        %v515 = vpop.permute.xlu0 %514
        %516 = vrot.lane.b32.xlu0 %v508, 124
        %v517 = vpop.permute.xlu0 %516
        %vm518 = vcmask 1014784
        %v519 = vsel %vm518, %v513, %v515
        %v520 = vsel %vm518, %v515, %v517
        %v524 = vadd.f32 %v482, %v519
        %v525 = vadd.f32 %v483, %v520
        %v526 = vadd.f32 %v484, %v517
        %s527 = scalar_lea.vmem [#allocation8], 10
        %v528 = vld [vmem:[%s527] sm:$0x3]
        %v530 = vperm.slane %v528, 0
        %v531 = vperm.slane %v528, 1
        %532 = vrot.lane.b32.xlu0 %v530, 82
        %v533 = vpop.permute.xlu0 %532
        %534 = vrot.lane.b32.xlu0 %v531, 82
        %v535 = vpop.permute.xlu0 %534
        %vm536 = vcmask 670720
        %v537 = vsel %vm536, %v533, %v535
        %v541 = vmul.f32 %v319, %v533
        %v542 = vmul.f32 %v318, %v537
        %v543 = vmul.f32 %v319, %v535
        %544 = vset.pattern.permute.xlu0 5
        %545 = vperm.xlu0 %544, %v347
        %v546 = vpop.permute.xlu0 %545
        %v548 = vmul.f32 %v541, %v546
        %v549 = vmul.f32 %v542, %v546
        %v550 = vmul.f32 %v543, %v546
        %554 = vrot.lane.b32.xlu0 %v548, 123
        %v555 = vpop.permute.xlu0 %554
        %556 = vrot.lane.b32.xlu0 %v549, 123
        %v557 = vpop.permute.xlu0 %556
        %558 = vrot.lane.b32.xlu0 %v550, 123
        %v559 = vpop.permute.xlu0 %558
        %vm560 = vcmask 1006592
        %v561 = vsel %vm560, %v555, %v557
        %v562 = vsel %vm560, %v557, %v559
        %v566 = vadd.f32 %v524, %v561
        %v567 = vadd.f32 %v525, %v562
        %v568 = vadd.f32 %v526, %v559
        %s569 = scalar_lea.vmem [#allocation8], 12
        %v570 = vld [vmem:[%s569] sm:$0x3]
        %v572 = vperm.slane %v570, 0
        %v573 = vperm.slane %v570, 1
        %574 = vrot.lane.b32.xlu0 %v572, 83
        %v575 = vpop.permute.xlu0 %574
        %576 = vrot.lane.b32.xlu0 %v573, 83
        %v577 = vpop.permute.xlu0 %576
        %vm578 = vcmask 678912
        %v579 = vsel %vm578, %v575, %v577
        %v583 = vmul.f32 %v319, %v575
        %v584 = vmul.f32 %v318, %v579
        %v585 = vmul.f32 %v319, %v577
        %586 = vset.pattern.permute.xlu0 6
        %587 = vperm.xlu0 %586, %v347
        %v588 = vpop.permute.xlu0 %587
        %v590 = vmul.f32 %v583, %v588
        %v591 = vmul.f32 %v584, %v588
        %v592 = vmul.f32 %v585, %v588
        %596 = vrot.lane.b32.xlu0 %v590, 122
        %v597 = vpop.permute.xlu0 %596
        %598 = vrot.lane.b32.xlu0 %v591, 122
        %v599 = vpop.permute.xlu0 %598
        %600 = vrot.lane.b32.xlu0 %v592, 122
        %v601 = vpop.permute.xlu0 %600
        %vm602 = vcmask 998400
        %v603 = vsel %vm602, %v597, %v599
        %v604 = vsel %vm602, %v599, %v601
        %v608 = vadd.f32 %v566, %v603
        %v609 = vadd.f32 %v567, %v604
        %v610 = vadd.f32 %v568, %v601
        %s611 = scalar_lea.vmem [#allocation8], 14
        %v612 = vld [vmem:[%s611] sm:$0x3]
        %v614 = vperm.slane %v612, 0
        %v615 = vperm.slane %v612, 1
        %616 = vrot.lane.b32.xlu0 %v614, 93
        %v617 = vpop.permute.xlu0 %616
        %618 = vrot.lane.b32.xlu0 %v615, 93
        %v619 = vpop.permute.xlu0 %618
        %vm620 = vcmask 760832
        %v621 = vsel %vm620, %v617, %v619
        %v625 = vmul.f32 %v319, %v617
        %v626 = vmul.f32 %v318, %v621
        %v627 = vmul.f32 %v319, %v619
        %628 = vset.pattern.permute.xlu0 7
        %629 = vperm.xlu0 %628, %v347
        %v630 = vpop.permute.xlu0 %629
        %v632 = vmul.f32 %v625, %v630
        %v633 = vmul.f32 %v626, %v630
        %v634 = vmul.f32 %v627, %v630
        %638 = vrot.lane.b32.xlu0 %v632, 112
        %v639 = vpop.permute.xlu0 %638
        %640 = vrot.lane.b32.xlu0 %v633, 112
        %v641 = vpop.permute.xlu0 %640
        %642 = vrot.lane.b32.xlu0 %v634, 112
        %v643 = vpop.permute.xlu0 %642
        %vm644 = vcmask 916480
        %v645 = vsel %vm644, %v639, %v641
        %v646 = vsel %vm644, %v641, %v643
        %v650 = vadd.f32 %v608, %v645
        %v651 = vadd.f32 %v609, %v646
        %v652 = vadd.f32 %v610, %v643
        %s653 = scalar_lea.vmem [#allocation8], 16
        %v654 = vld [vmem:[%s653] sm:$0x3]
        %v656 = vperm.slane %v654, 0
        %v657 = vperm.slane %v654, 1
        %658 = vrot.lane.b32.xlu0 %v656, 94
        %v659 = vpop.permute.xlu0 %658
        %660 = vrot.lane.b32.xlu0 %v657, 94
        %v661 = vpop.permute.xlu0 %660
        %vm662 = vcmask 769024
        %v663 = vsel %vm662, %v659, %v661
        %v667 = vmul.f32 %v319, %v659
        %v668 = vmul.f32 %v318, %v663
        %v669 = vmul.f32 %v319, %v661
        %670 = vset.pattern.permute.xlu0 8
        %671 = vperm.xlu0 %670, %v347
        %v672 = vpop.permute.xlu0 %671
        %v674 = vmul.f32 %v667, %v672
        %v675 = vmul.f32 %v668, %v672
        %v676 = vmul.f32 %v669, %v672
        %680 = vrot.lane.b32.xlu0 %v674, 111
        %v681 = vpop.permute.xlu0 %680
        %682 = vrot.lane.b32.xlu0 %v675, 111
        %v683 = vpop.permute.xlu0 %682
        %684 = vrot.lane.b32.xlu0 %v676, 111
        %v685 = vpop.permute.xlu0 %684
        %vm686 = vcmask 908288
        %v687 = vsel %vm686, %v681, %v683
        %v688 = vsel %vm686, %v683, %v685
        %v692 = vadd.f32 %v650, %v687
        %v693 = vadd.f32 %v651, %v688
        %v694 = vadd.f32 %v652, %v685
        %v695 = vld [vmem:[#allocation5] sm:$0xff]
        %697 = vset.pattern.permute.xlu0 0
        %698 = vperm.xlu0 %697, %v695
        %v699 = vpop.permute.xlu0 %698
        %v701 = vmul.f32 %v667, %v699
        %v702 = vmul.f32 %v668, %v699
        %v703 = vmul.f32 %v669, %v699
        %v704 = vadd.f32 %v330, %v701
        %v705 = vadd.f32 %v330, %v702
        %v706 = vadd.f32 %v330, %v703
        %s707 = scalar_lea.vmem [#allocation8], 18
        %v708 = vld [vmem:[%s707] sm:$0x3]
        %v710 = vperm.slane %v708, 0
        %v711 = vperm.slane %v708, 1
        %712 = vrot.lane.b32.xlu0 %v710, 95
        %v713 = vpop.permute.xlu0 %712
        %714 = vrot.lane.b32.xlu0 %v711, 95
        %v715 = vpop.permute.xlu0 %714
        %vm716 = vcmask 777216
        %v717 = vsel %vm716, %v713, %v715
        %v721 = vmul.f32 %v319, %v713
        %v722 = vmul.f32 %v318, %v717
        %v723 = vmul.f32 %v319, %v715
        %724 = vset.pattern.permute.xlu0 9
        %725 = vperm.xlu0 %724, %v347
        %v726 = vpop.permute.xlu0 %725
        %v728 = vmul.f32 %v721, %v726
        %v729 = vmul.f32 %v722, %v726
        %v730 = vmul.f32 %v723, %v726
        %734 = vrot.lane.b32.xlu0 %v728, 110
        %v735 = vpop.permute.xlu0 %734
        %736 = vrot.lane.b32.xlu0 %v729, 110
        %v737 = vpop.permute.xlu0 %736
        %738 = vrot.lane.b32.xlu0 %v730, 110
        %v739 = vpop.permute.xlu0 %738
        %vm740 = vcmask 900096
        %v741 = vsel %vm740, %v735, %v737
        %v742 = vsel %vm740, %v737, %v739
        %v746 = vadd.f32 %v692, %v741
        %v747 = vadd.f32 %v693, %v742
        %v748 = vadd.f32 %v694, %v739
        %749 = vset.pattern.permute.xlu0 1
        %750 = vperm.xlu0 %749, %v695
        %v751 = vpop.permute.xlu0 %750
        %v753 = vmul.f32 %v721, %v751
        %v754 = vmul.f32 %v722, %v751
        %v755 = vmul.f32 %v723, %v751
        %759 = vrot.lane.b32.xlu0 %v753, 127
        %v760 = vpop.permute.xlu0 %759
        %761 = vrot.lane.b32.xlu0 %v754, 127
        %v762 = vpop.permute.xlu0 %761
        %763 = vrot.lane.b32.xlu0 %v755, 127
        %v764 = vpop.permute.xlu0 %763
        %v765 = vsel %vm392, %v760, %v762
        %v766 = vsel %vm392, %v762, %v764
        %v770 = vadd.f32 %v704, %v765
        %v771 = vadd.f32 %v705, %v766
        %v772 = vadd.f32 %v706, %v764
        %s773 = scalar_lea.vmem [#allocation8], 20
        %v774 = vld [vmem:[%s773] sm:$0x3]
        %v776 = vperm.slane %v774, 0
        %v777 = vperm.slane %v774, 1
        %778 = vrot.lane.b32.xlu0 %v776, 96
        %v779 = vpop.permute.xlu0 %778
        %780 = vrot.lane.b32.xlu0 %v777, 96
        %v781 = vpop.permute.xlu0 %780
        %vm782 = vcmask 785408
        %v783 = vsel %vm782, %v779, %v781
        %v787 = vmul.f32 %v319, %v779
        %v788 = vmul.f32 %v318, %v783
        %v789 = vmul.f32 %v319, %v781
        %790 = vset.pattern.permute.xlu0 10
        %791 = vperm.xlu0 %790, %v347
        %v792 = vpop.permute.xlu0 %791
        %v794 = vmul.f32 %v787, %v792
        %v795 = vmul.f32 %v788, %v792
        %v796 = vmul.f32 %v789, %v792
        %800 = vrot.lane.b32.xlu0 %v794, 109
        %v801 = vpop.permute.xlu0 %800
        %802 = vrot.lane.b32.xlu0 %v795, 109
        %v803 = vpop.permute.xlu0 %802
        %804 = vrot.lane.b32.xlu0 %v796, 109
        %v805 = vpop.permute.xlu0 %804
        %vm806 = vcmask 891904
        %v807 = vsel %vm806, %v801, %v803
        %v808 = vsel %vm806, %v803, %v805
        %v812 = vadd.f32 %v746, %v807
        %v813 = vadd.f32 %v747, %v808
        %v814 = vadd.f32 %v748, %v805
        %815 = vset.pattern.permute.xlu0 2
        %816 = vperm.xlu0 %815, %v695
        %v817 = vpop.permute.xlu0 %816
        %v819 = vmul.f32 %v787, %v817
        %v820 = vmul.f32 %v788, %v817
        %v821 = vmul.f32 %v789, %v817
        %825 = vrot.lane.b32.xlu0 %v819, 126
        %v826 = vpop.permute.xlu0 %825
        %827 = vrot.lane.b32.xlu0 %v820, 126
        %v828 = vpop.permute.xlu0 %827
        %829 = vrot.lane.b32.xlu0 %v821, 126
        %v830 = vpop.permute.xlu0 %829
        %v831 = vsel %vm434, %v826, %v828
        %v832 = vsel %vm434, %v828, %v830
        %v836 = vadd.f32 %v770, %v831
        %v837 = vadd.f32 %v771, %v832
        %v838 = vadd.f32 %v772, %v830
        %s839 = scalar_lea.vmem [#allocation8], 22
        %v840 = vld [vmem:[%s839] sm:$0x3]
        %v842 = vperm.slane %v840, 0
        %v843 = vperm.slane %v840, 1
        %844 = vrot.lane.b32.xlu0 %v842, 97
        %v845 = vpop.permute.xlu0 %844
        %846 = vrot.lane.b32.xlu0 %v843, 97
        %v847 = vpop.permute.xlu0 %846
        %vm848 = vcmask 793600
        %v849 = vsel %vm848, %v845, %v847
        %v853 = vmul.f32 %v319, %v845
        %v854 = vmul.f32 %v318, %v849
        %v855 = vmul.f32 %v319, %v847
        %856 = vset.pattern.permute.xlu0 11
        %857 = vperm.xlu0 %856, %v347
        %v858 = vpop.permute.xlu0 %857
        %v860 = vmul.f32 %v853, %v858
        %v861 = vmul.f32 %v854, %v858
        %v862 = vmul.f32 %v855, %v858
        %866 = vrot.lane.b32.xlu0 %v860, 108
        %v867 = vpop.permute.xlu0 %866
        %868 = vrot.lane.b32.xlu0 %v861, 108
        %v869 = vpop.permute.xlu0 %868
        %870 = vrot.lane.b32.xlu0 %v862, 108
        %v871 = vpop.permute.xlu0 %870
        %vm872 = vcmask 883712
        %v873 = vsel %vm872, %v867, %v869
        %v874 = vsel %vm872, %v869, %v871
        %v878 = vadd.f32 %v812, %v873
        %v879 = vadd.f32 %v813, %v874
        %v880 = vadd.f32 %v814, %v871
        %881 = vset.pattern.permute.xlu0 3
        %882 = vperm.xlu0 %881, %v695
        %v883 = vpop.permute.xlu0 %882
        %v885 = vmul.f32 %v853, %v883
        %v886 = vmul.f32 %v854, %v883
        %v887 = vmul.f32 %v855, %v883
        %891 = vrot.lane.b32.xlu0 %v885, 125
        %v892 = vpop.permute.xlu0 %891
        %893 = vrot.lane.b32.xlu0 %v886, 125
        %v894 = vpop.permute.xlu0 %893
        %895 = vrot.lane.b32.xlu0 %v887, 125
        %v896 = vpop.permute.xlu0 %895
        %v897 = vsel %vm476, %v892, %v894
        %v898 = vsel %vm476, %v894, %v896
        %v902 = vadd.f32 %v836, %v897
        %v903 = vadd.f32 %v837, %v898
        %v904 = vadd.f32 %v838, %v896
        %s905 = scalar_lea.vmem [#allocation8], 24
        %v906 = vld [vmem:[%s905] sm:$0x3]
        %v908 = vperm.slane %v906, 0
        %v909 = vperm.slane %v906, 1
        %910 = vrot.lane.b32.xlu0 %v908, 98
        %v911 = vpop.permute.xlu0 %910
        %912 = vrot.lane.b32.xlu0 %v909, 98
        %v913 = vpop.permute.xlu0 %912
        %vm914 = vcmask 801792
        %v915 = vsel %vm914, %v911, %v913
        %v919 = vmul.f32 %v319, %v911
        %v920 = vmul.f32 %v318, %v915
        %v921 = vmul.f32 %v319, %v913
        %922 = vset.pattern.permute.xlu0 12
        %923 = vperm.xlu0 %922, %v347
        %v924 = vpop.permute.xlu0 %923
        %v926 = vmul.f32 %v919, %v924
        %v927 = vmul.f32 %v920, %v924
        %v928 = vmul.f32 %v921, %v924
        %932 = vrot.lane.b32.xlu0 %v926, 107
        %v933 = vpop.permute.xlu0 %932
        %934 = vrot.lane.b32.xlu0 %v927, 107
        %v935 = vpop.permute.xlu0 %934
        %936 = vrot.lane.b32.xlu0 %v928, 107
        %v937 = vpop.permute.xlu0 %936
        %vm938 = vcmask 875520
        %v939 = vsel %vm938, %v933, %v935
        %v940 = vsel %vm938, %v935, %v937
        %v944 = vadd.f32 %v878, %v939
        %v945 = vadd.f32 %v879, %v940
        %v946 = vadd.f32 %v880, %v937
        %947 = vset.pattern.permute.xlu0 4
        %948 = vperm.xlu0 %947, %v695
        %v949 = vpop.permute.xlu0 %948
        %v951 = vmul.f32 %v919, %v949
        %v952 = vmul.f32 %v920, %v949
        %v953 = vmul.f32 %v921, %v949
        %957 = vrot.lane.b32.xlu0 %v951, 124
        %v958 = vpop.permute.xlu0 %957
        %959 = vrot.lane.b32.xlu0 %v952, 124
        %v960 = vpop.permute.xlu0 %959
        %961 = vrot.lane.b32.xlu0 %v953, 124
        %v962 = vpop.permute.xlu0 %961
        %v963 = vsel %vm518, %v958, %v960
        %v964 = vsel %vm518, %v960, %v962
        %v968 = vadd.f32 %v902, %v963
        %v969 = vadd.f32 %v903, %v964
        %v970 = vadd.f32 %v904, %v962
        %s971 = scalar_lea.vmem [#allocation8], 26
        %v972 = vld [vmem:[%s971] sm:$0x3]
        %v974 = vperm.slane %v972, 0
        %v975 = vperm.slane %v972, 1
        %976 = vrot.lane.b32.xlu0 %v974, 99
        %v977 = vpop.permute.xlu0 %976
        %978 = vrot.lane.b32.xlu0 %v975, 99
        %v979 = vpop.permute.xlu0 %978
        %vm980 = vcmask 809984
        %v981 = vsel %vm980, %v977, %v979
        %v985 = vmul.f32 %v319, %v977
        %v986 = vmul.f32 %v318, %v981
        %v987 = vmul.f32 %v319, %v979
        %988 = vset.pattern.permute.xlu0 13
        %989 = vperm.xlu0 %988, %v347
        %v990 = vpop.permute.xlu0 %989
        %v992 = vmul.f32 %v985, %v990
        %v993 = vmul.f32 %v986, %v990
        %v994 = vmul.f32 %v987, %v990
        %998 = vrot.lane.b32.xlu0 %v992, 106
        %v999 = vpop.permute.xlu0 %998
        %1000 = vrot.lane.b32.xlu0 %v993, 106
        %v1001 = vpop.permute.xlu0 %1000
        %1002 = vrot.lane.b32.xlu0 %v994, 106
        %v1003 = vpop.permute.xlu0 %1002
        %vm1004 = vcmask 867328
        %v1005 = vsel %vm1004, %v999, %v1001
        %v1006 = vsel %vm1004, %v1001, %v1003
        %v1010 = vadd.f32 %v944, %v1005
        %v1011 = vadd.f32 %v945, %v1006
        %v1012 = vadd.f32 %v946, %v1003
        %s1013 = scalar_lea.vmem [#allocation8], 28
        %v1014 = vld [vmem:[%s1013] sm:$0x3]
        %v1016 = vperm.slane %v1014, 0
        %v1017 = vperm.slane %v1014, 1
        %1018 = vrot.lane.b32.xlu0 %v1016, 109
        %v1019 = vpop.permute.xlu0 %1018
        %1020 = vrot.lane.b32.xlu0 %v1017, 109
        %v1021 = vpop.permute.xlu0 %1020
        %v1022 = vsel %vm806, %v1019, %v1021
        %v1026 = vmul.f32 %v319, %v1019
        %v1027 = vmul.f32 %v318, %v1022
        %v1028 = vmul.f32 %v319, %v1021
        %1029 = vset.pattern.permute.xlu0 14
        %1030 = vperm.xlu0 %1029, %v347
        %v1031 = vpop.permute.xlu0 %1030
        %v1033 = vmul.f32 %v1026, %v1031
        %v1034 = vmul.f32 %v1027, %v1031
        %v1035 = vmul.f32 %v1028, %v1031
        %1039 = vrot.lane.b32.xlu0 %v1033, 96
        %v1040 = vpop.permute.xlu0 %1039
        %1041 = vrot.lane.b32.xlu0 %v1034, 96
        %v1042 = vpop.permute.xlu0 %1041
        %1043 = vrot.lane.b32.xlu0 %v1035, 96
        %v1044 = vpop.permute.xlu0 %1043
        %v1045 = vsel %vm782, %v1040, %v1042
        %v1046 = vsel %vm782, %v1042, %v1044
        %v1050 = vadd.f32 %v1010, %v1045
        %v1051 = vadd.f32 %v1011, %v1046
        %v1052 = vadd.f32 %v1012, %v1044
        %s1053 = scalar_lea.vmem [#allocation8], 30
        %v1054 = vld [vmem:[%s1053] sm:$0x3]
        %v1056 = vperm.slane %v1054, 0
        %v1057 = vperm.slane %v1054, 1
        %1058 = vrot.lane.b32.xlu0 %v1056, 110
        %v1059 = vpop.permute.xlu0 %1058
        %1060 = vrot.lane.b32.xlu0 %v1057, 110
        %v1061 = vpop.permute.xlu0 %1060
        %v1062 = vsel %vm740, %v1059, %v1061
        %v1066 = vmul.f32 %v319, %v1059
        %v1067 = vmul.f32 %v318, %v1062
        %v1068 = vmul.f32 %v319, %v1061
        %1069 = vset.pattern.permute.xlu0 15
        %1070 = vperm.xlu0 %1069, %v347
        %v1071 = vpop.permute.xlu0 %1070
        %v1073 = vmul.f32 %v1066, %v1071
        %v1074 = vmul.f32 %v1067, %v1071
        %v1075 = vmul.f32 %v1068, %v1071
        %1079 = vrot.lane.b32.xlu0 %v1073, 95
        %v1080 = vpop.permute.xlu0 %1079
        %1081 = vrot.lane.b32.xlu0 %v1074, 95
        %v1082 = vpop.permute.xlu0 %1081
        %1083 = vrot.lane.b32.xlu0 %v1075, 95
        %v1084 = vpop.permute.xlu0 %1083
        %v1085 = vsel %vm716, %v1080, %v1082
        %v1086 = vsel %vm716, %v1082, %v1084
        %v1090 = vadd.f32 %v1050, %v1085
        %v1091 = vadd.f32 %v1051, %v1086
        %v1092 = vadd.f32 %v1052, %v1084
        %1093 = vset.pattern.permute.xlu0 5
        %1094 = vperm.xlu0 %1093, %v695
        %v1095 = vpop.permute.xlu0 %1094
        %v1097 = vmul.f32 %v1066, %v1095
        %v1098 = vmul.f32 %v1067, %v1095
        %v1099 = vmul.f32 %v1068, %v1095
        %1103 = vrot.lane.b32.xlu0 %v1097, 112
        %v1104 = vpop.permute.xlu0 %1103
        %1105 = vrot.lane.b32.xlu0 %v1098, 112
        %v1106 = vpop.permute.xlu0 %1105
        %1107 = vrot.lane.b32.xlu0 %v1099, 112
        %v1108 = vpop.permute.xlu0 %1107
        %v1109 = vsel %vm644, %v1104, %v1106
        %v1110 = vsel %vm644, %v1106, %v1108
        %v1114 = vadd.f32 %v968, %v1109
        %v1115 = vadd.f32 %v969, %v1110
        %v1116 = vadd.f32 %v970, %v1108
        %s1117 = scalar_lea.vmem [#allocation8], 32
        %v1118 = vld [vmem:[%s1117] sm:$0x3]
        %v1120 = vperm.slane %v1118, 0
        %v1121 = vperm.slane %v1118, 1
        %1122 = vrot.lane.b32.xlu0 %v1120, 111
        %v1123 = vpop.permute.xlu0 %1122
        %1124 = vrot.lane.b32.xlu0 %v1121, 111
        %v1125 = vpop.permute.xlu0 %1124
        %v1126 = vsel %vm686, %v1123, %v1125
        %v1130 = vmul.f32 %v319, %v1123
        %v1131 = vmul.f32 %v318, %v1126
        %v1132 = vmul.f32 %v319, %v1125
        %1133 = vset.pattern.permute.xlu0 16
        %1134 = vperm.xlu0 %1133, %v347
        %v1135 = vpop.permute.xlu0 %1134
        %v1137 = vmul.f32 %v1130, %v1135
        %v1138 = vmul.f32 %v1131, %v1135
        %v1139 = vmul.f32 %v1132, %v1135
        %1143 = vrot.lane.b32.xlu0 %v1137, 94
        %v1144 = vpop.permute.xlu0 %1143
        %1145 = vrot.lane.b32.xlu0 %v1138, 94
        %v1146 = vpop.permute.xlu0 %1145
        %1147 = vrot.lane.b32.xlu0 %v1139, 94
        %v1148 = vpop.permute.xlu0 %1147
        %v1149 = vsel %vm662, %v1144, %v1146
        %v1150 = vsel %vm662, %v1146, %v1148
        %v1154 = vadd.f32 %v1090, %v1149
        %v1155 = vadd.f32 %v1091, %v1150
        %v1156 = vadd.f32 %v1092, %v1148
        %1157 = vset.pattern.permute.xlu0 6
        %1158 = vperm.xlu0 %1157, %v695
        %v1159 = vpop.permute.xlu0 %1158
        %v1161 = vmul.f32 %v1130, %v1159
        %v1162 = vmul.f32 %v1131, %v1159
        %v1163 = vmul.f32 %v1132, %v1159
        %1167 = vrot.lane.b32.xlu0 %v1161, 111
        %v1168 = vpop.permute.xlu0 %1167
        %1169 = vrot.lane.b32.xlu0 %v1162, 111
        %v1170 = vpop.permute.xlu0 %1169
        %1171 = vrot.lane.b32.xlu0 %v1163, 111
        %v1172 = vpop.permute.xlu0 %1171
        %v1173 = vsel %vm686, %v1168, %v1170
        %v1174 = vsel %vm686, %v1170, %v1172
        %v1178 = vadd.f32 %v1114, %v1173
        %v1179 = vadd.f32 %v1115, %v1174
        %v1180 = vadd.f32 %v1116, %v1172
        %vm1181 = vcmp.gt.f32.partialorder %v1118, 0.5
        %v1182 = vsel %vm1181, 1, 0
        %v1183 = vperm.slane %v1182, 0
        %v1184 = vperm.slane %v1182, 1
        %vm1185 = vcmp.eq.s32.totalorder %v1183, 1
        %vm1186 = vcmp.eq.s32.totalorder %v1184, 1
        %1189 = vrot.lane.b32.xlu0 %v319, 17
        %v1190 = vpop.permute.xlu0 %1189
        %1191 = vrot.lane.b32.xlu0 %v318, 17
        %v1192 = vpop.permute.xlu0 %1191
        %vm1193 = vcmask 138240
        %v1194 = vsel %vm1193, %v1190, %v1192
        %v1195 = vsel %vm1193, %v1192, %v1190
        %v1198 = vsel %vm1185, %v1194, -inf
        %v1199 = vsel %vm1186, %v1195, -inf
        %s1200 = scalar_lea.vmem [#allocation8], 34
        %v1201 = vld [vmem:[%s1200] sm:$0x3]
        %v1203 = vperm.slane %v1201, 0
        %v1204 = vperm.slane %v1201, 1
        %1205 = vrot.lane.b32.xlu0 %v1203, 112
        %v1206 = vpop.permute.xlu0 %1205
        %1207 = vrot.lane.b32.xlu0 %v1204, 112
        %v1208 = vpop.permute.xlu0 %1207
        %v1209 = vsel %vm644, %v1206, %v1208
        %v1213 = vmul.f32 %v319, %v1206
        %v1214 = vmul.f32 %v318, %v1209
        %v1215 = vmul.f32 %v319, %v1208
        %1216 = vset.pattern.permute.xlu0 17
        %1217 = vperm.xlu0 %1216, %v347
        %v1218 = vpop.permute.xlu0 %1217
        %v1220 = vmul.f32 %v1213, %v1218
        %v1221 = vmul.f32 %v1214, %v1218
        %v1222 = vmul.f32 %v1215, %v1218
        %1226 = vrot.lane.b32.xlu0 %v1220, 93
        %v1227 = vpop.permute.xlu0 %1226
        %1228 = vrot.lane.b32.xlu0 %v1221, 93
        %v1229 = vpop.permute.xlu0 %1228
        %1230 = vrot.lane.b32.xlu0 %v1222, 93
        %v1231 = vpop.permute.xlu0 %1230
        %v1232 = vsel %vm620, %v1227, %v1229
        %v1233 = vsel %vm620, %v1229, %v1231
        %v1237 = vadd.f32 %v1154, %v1232
        %v1238 = vadd.f32 %v1155, %v1233
        %v1239 = vadd.f32 %v1156, %v1231
        %1240 = vset.pattern.permute.xlu0 7
        %1241 = vperm.xlu0 %1240, %v695
        %v1242 = vpop.permute.xlu0 %1241
        %v1244 = vmul.f32 %v1213, %v1242
        %v1245 = vmul.f32 %v1214, %v1242
        %v1246 = vmul.f32 %v1215, %v1242
        %1250 = vrot.lane.b32.xlu0 %v1244, 110
        %v1251 = vpop.permute.xlu0 %1250
        %1252 = vrot.lane.b32.xlu0 %v1245, 110
        %v1253 = vpop.permute.xlu0 %1252
        %1254 = vrot.lane.b32.xlu0 %v1246, 110
        %v1255 = vpop.permute.xlu0 %1254
        %v1256 = vsel %vm740, %v1251, %v1253
        %v1257 = vsel %vm740, %v1253, %v1255
        %v1261 = vadd.f32 %v1178, %v1256
        %v1262 = vadd.f32 %v1179, %v1257
        %v1263 = vadd.f32 %v1180, %v1255
        %vm1264 = vcmp.gt.f32.partialorder %v1201, 0.5
        %v1265 = vsel %vm1264, 1, 0
        %v1266 = vperm.slane %v1265, 0
        %v1267 = vperm.slane %v1265, 1
        %vm1268 = vcmp.eq.s32.totalorder %v1266, 1
        %vm1269 = vcmp.eq.s32.totalorder %v1267, 1
        %1270 = vrot.lane.b32.xlu0 %v319, 16
        %v1271 = vpop.permute.xlu0 %1270
        %1272 = vrot.lane.b32.xlu0 %v318, 16
        %v1273 = vpop.permute.xlu0 %1272
        %vm1274 = vcmask 130048
        %v1275 = vsel %vm1274, %v1271, %v1273
        %v1276 = vsel %vm1274, %v1273, %v1271
        %v1279 = vsel %vm1268, %v1275, -inf
        %v1280 = vsel %vm1269, %v1276, -inf
        %v1281 = vmax.f32 %v1198, %v1279
        %v1282 = vmax.f32 %v1199, %v1280
        %s1283 = scalar_lea.vmem [#allocation8], 36
        %v1284 = vld [vmem:[%s1283] sm:$0x3]
        %v1286 = vperm.slane %v1284, 0
        %v1287 = vperm.slane %v1284, 1
        %1288 = vrot.lane.b32.xlu0 %v1286, 113
        %v1289 = vpop.permute.xlu0 %1288
        %1290 = vrot.lane.b32.xlu0 %v1287, 113
        %v1291 = vpop.permute.xlu0 %1290
        %vm1292 = vcmask 924672
        %v1293 = vsel %vm1292, %v1289, %v1291
        %v1297 = vmul.f32 %v319, %v1289
        %v1298 = vmul.f32 %v318, %v1293
        %v1299 = vmul.f32 %v319, %v1291
        %1300 = vset.pattern.permute.xlu0 18
        %1301 = vperm.xlu0 %1300, %v347
        %v1302 = vpop.permute.xlu0 %1301
        %v1304 = vmul.f32 %v1297, %v1302
        %v1305 = vmul.f32 %v1298, %v1302
        %v1306 = vmul.f32 %v1299, %v1302
        %1310 = vrot.lane.b32.xlu0 %v1304, 92
        %v1311 = vpop.permute.xlu0 %1310
        %1312 = vrot.lane.b32.xlu0 %v1305, 92
        %v1313 = vpop.permute.xlu0 %1312
        %1314 = vrot.lane.b32.xlu0 %v1306, 92
        %v1315 = vpop.permute.xlu0 %1314
        %vm1316 = vcmask 752640
        %v1317 = vsel %vm1316, %v1311, %v1313
        %v1318 = vsel %vm1316, %v1313, %v1315
        %v1322 = vadd.f32 %v1237, %v1317
        %v1323 = vadd.f32 %v1238, %v1318
        %v1324 = vadd.f32 %v1239, %v1315
        %1325 = vset.pattern.permute.xlu0 8
        %1326 = vperm.xlu0 %1325, %v695
        %v1327 = vpop.permute.xlu0 %1326
        %v1329 = vmul.f32 %v1297, %v1327
        %v1330 = vmul.f32 %v1298, %v1327
        %v1331 = vmul.f32 %v1299, %v1327
        %1335 = vrot.lane.b32.xlu0 %v1329, 109
        %v1336 = vpop.permute.xlu0 %1335
        %1337 = vrot.lane.b32.xlu0 %v1330, 109
        %v1338 = vpop.permute.xlu0 %1337
        %1339 = vrot.lane.b32.xlu0 %v1331, 109
        %v1340 = vpop.permute.xlu0 %1339
        %v1341 = vsel %vm806, %v1336, %v1338
        %v1342 = vsel %vm806, %v1338, %v1340
        %v1346 = vadd.f32 %v1261, %v1341
        %v1347 = vadd.f32 %v1262, %v1342
        %v1348 = vadd.f32 %v1263, %v1340
        %vm1349 = vcmp.gt.f32.partialorder %v1284, 0.5
        %v1350 = vsel %vm1349, 1, 0
        %v1351 = vperm.slane %v1350, 0
        %v1352 = vperm.slane %v1350, 1
        %vm1353 = vcmp.eq.s32.totalorder %v1351, 1
        %vm1354 = vcmp.eq.s32.totalorder %v1352, 1
        %1355 = vrot.lane.b32.xlu0 %v319, 15
        %v1356 = vpop.permute.xlu0 %1355
        %1357 = vrot.lane.b32.xlu0 %v318, 15
        %v1358 = vpop.permute.xlu0 %1357
        %vm1359 = vcmask 121856
        %v1360 = vsel %vm1359, %v1356, %v1358
        %v1361 = vsel %vm1359, %v1358, %v1356
        %v1364 = vsel %vm1353, %v1360, -inf
        %v1365 = vsel %vm1354, %v1361, -inf
        %v1366 = vmax.f32 %v1281, %v1364
        %v1367 = vmax.f32 %v1282, %v1365
        %s1368 = scalar_lea.vmem [#allocation8], 38
        %v1369 = vld [vmem:[%s1368] sm:$0x3]
        %v1371 = vperm.slane %v1369, 0
        %v1372 = vperm.slane %v1369, 1
        %1373 = vrot.lane.b32.xlu0 %v1371, 114
        %v1374 = vpop.permute.xlu0 %1373
        %1375 = vrot.lane.b32.xlu0 %v1372, 114
        %v1376 = vpop.permute.xlu0 %1375
        %vm1377 = vcmask 932864
        %v1378 = vsel %vm1377, %v1374, %v1376
        %v1382 = vmul.f32 %v319, %v1374
        %v1383 = vmul.f32 %v318, %v1378
        %v1384 = vmul.f32 %v319, %v1376
        %1385 = vset.pattern.permute.xlu0 19
        %1386 = vperm.xlu0 %1385, %v347
        %v1387 = vpop.permute.xlu0 %1386
        %v1389 = vmul.f32 %v1382, %v1387
        %v1390 = vmul.f32 %v1383, %v1387
        %v1391 = vmul.f32 %v1384, %v1387
        %1395 = vrot.lane.b32.xlu0 %v1389, 91
        %v1396 = vpop.permute.xlu0 %1395
        %1397 = vrot.lane.b32.xlu0 %v1390, 91
        %v1398 = vpop.permute.xlu0 %1397
        %1399 = vrot.lane.b32.xlu0 %v1391, 91
        %v1400 = vpop.permute.xlu0 %1399
        %vm1401 = vcmask 744448
        %v1402 = vsel %vm1401, %v1396, %v1398
        %v1403 = vsel %vm1401, %v1398, %v1400
        %v1407 = vadd.f32 %v1322, %v1402
        %v1408 = vadd.f32 %v1323, %v1403
        %v1409 = vadd.f32 %v1324, %v1400
        %1410 = vset.pattern.permute.xlu0 9
        %1411 = vperm.xlu0 %1410, %v695
        %v1412 = vpop.permute.xlu0 %1411
        %v1414 = vmul.f32 %v1382, %v1412
        %v1415 = vmul.f32 %v1383, %v1412
        %v1416 = vmul.f32 %v1384, %v1412
        %1420 = vrot.lane.b32.xlu0 %v1414, 108
        %v1421 = vpop.permute.xlu0 %1420
        %1422 = vrot.lane.b32.xlu0 %v1415, 108
        %v1423 = vpop.permute.xlu0 %1422
        %1424 = vrot.lane.b32.xlu0 %v1416, 108
        %v1425 = vpop.permute.xlu0 %1424
        %v1426 = vsel %vm872, %v1421, %v1423
        %v1427 = vsel %vm872, %v1423, %v1425
        %v1431 = vadd.f32 %v1346, %v1426
        %v1432 = vadd.f32 %v1347, %v1427
        %v1433 = vadd.f32 %v1348, %v1425
        %s1434 = scalar_lea.vmem [#allocation8], 40
        %v1435 = vld [vmem:[%s1434] sm:$0x3]
        %v1437 = vperm.slane %v1435, 0
        %v1438 = vperm.slane %v1435, 1
        %1439 = vrot.lane.b32.xlu0 %v1437, 115
        %v1440 = vpop.permute.xlu0 %1439
        %1441 = vrot.lane.b32.xlu0 %v1438, 115
        %v1442 = vpop.permute.xlu0 %1441
        %vm1443 = vcmask 941056
        %v1444 = vsel %vm1443, %v1440, %v1442
        %v1448 = vmul.f32 %v319, %v1440
        %v1449 = vmul.f32 %v318, %v1444
        %v1450 = vmul.f32 %v319, %v1442
        %1451 = vset.pattern.permute.xlu0 20
        %1452 = vperm.xlu0 %1451, %v347
        %v1453 = vpop.permute.xlu0 %1452
        %v1455 = vmul.f32 %v1448, %v1453
        %v1456 = vmul.f32 %v1449, %v1453
        %v1457 = vmul.f32 %v1450, %v1453
        %1461 = vrot.lane.b32.xlu0 %v1455, 90
        %v1462 = vpop.permute.xlu0 %1461
        %1463 = vrot.lane.b32.xlu0 %v1456, 90
        %v1464 = vpop.permute.xlu0 %1463
        %1465 = vrot.lane.b32.xlu0 %v1457, 90
        %v1466 = vpop.permute.xlu0 %1465
        %vm1467 = vcmask 736256
        %v1468 = vsel %vm1467, %v1462, %v1464
        %v1469 = vsel %vm1467, %v1464, %v1466
        %v1473 = vadd.f32 %v1407, %v1468
        %v1474 = vadd.f32 %v1408, %v1469
        %v1475 = vadd.f32 %v1409, %v1466
        %s1476 = scalar_lea.vmem [#allocation8], 42
        %v1477 = vld [vmem:[%s1476] sm:$0x3]
        %v1479 = vperm.slane %v1477, 0
        %v1480 = vperm.slane %v1477, 1
        %1481 = vrot.lane.b32.xlu0 %v1479, 125
        %v1482 = vpop.permute.xlu0 %1481
        %1483 = vrot.lane.b32.xlu0 %v1480, 125
        %v1484 = vpop.permute.xlu0 %1483
        %v1485 = vsel %vm476, %v1482, %v1484
        %v1489 = vmul.f32 %v319, %v1482
        %v1490 = vmul.f32 %v318, %v1485
        %v1491 = vmul.f32 %v319, %v1484
        %1492 = vset.pattern.permute.xlu0 21
        %1493 = vperm.xlu0 %1492, %v347
        %v1494 = vpop.permute.xlu0 %1493
        %v1496 = vmul.f32 %v1489, %v1494
        %v1497 = vmul.f32 %v1490, %v1494
        %v1498 = vmul.f32 %v1491, %v1494
        %1502 = vrot.lane.b32.xlu0 %v1496, 80
        %v1503 = vpop.permute.xlu0 %1502
        %1504 = vrot.lane.b32.xlu0 %v1497, 80
        %v1505 = vpop.permute.xlu0 %1504
        %1506 = vrot.lane.b32.xlu0 %v1498, 80
        %v1507 = vpop.permute.xlu0 %1506
        %v1508 = vsel %vm452, %v1503, %v1505
        %v1509 = vsel %vm452, %v1505, %v1507
        %v1513 = vadd.f32 %v1473, %v1508
        %v1514 = vadd.f32 %v1474, %v1509
        %v1515 = vadd.f32 %v1475, %v1507
        %s1516 = scalar_lea.vmem [#allocation8], 44
        %v1517 = vld [vmem:[%s1516] sm:$0x3]
        %v1519 = vperm.slane %v1517, 0
        %v1520 = vperm.slane %v1517, 1
        %1521 = vrot.lane.b32.xlu0 %v1519, 126
        %v1522 = vpop.permute.xlu0 %1521
        %1523 = vrot.lane.b32.xlu0 %v1520, 126
        %v1524 = vpop.permute.xlu0 %1523
        %v1525 = vsel %vm434, %v1522, %v1524
        %v1529 = vmul.f32 %v319, %v1522
        %v1530 = vmul.f32 %v318, %v1525
        %v1531 = vmul.f32 %v319, %v1524
        %1532 = vset.pattern.permute.xlu0 22
        %1533 = vperm.xlu0 %1532, %v347
        %v1534 = vpop.permute.xlu0 %1533
        %v1536 = vmul.f32 %v1529, %v1534
        %v1537 = vmul.f32 %v1530, %v1534
        %v1538 = vmul.f32 %v1531, %v1534
        %1542 = vrot.lane.b32.xlu0 %v1536, 79
        %v1543 = vpop.permute.xlu0 %1542
        %1544 = vrot.lane.b32.xlu0 %v1537, 79
        %v1545 = vpop.permute.xlu0 %1544
        %1546 = vrot.lane.b32.xlu0 %v1538, 79
        %v1547 = vpop.permute.xlu0 %1546
        %v1548 = vsel %vm410, %v1543, %v1545
        %v1549 = vsel %vm410, %v1545, %v1547
        %v1553 = vadd.f32 %v1513, %v1548
        %v1554 = vadd.f32 %v1514, %v1549
        %v1555 = vadd.f32 %v1515, %v1547
        %1556 = vset.pattern.permute.xlu0 10
        %1557 = vperm.xlu0 %1556, %v695
        %v1558 = vpop.permute.xlu0 %1557
        %v1560 = vmul.f32 %v1529, %v1558
        %v1561 = vmul.f32 %v1530, %v1558
        %v1562 = vmul.f32 %v1531, %v1558
        %1566 = vrot.lane.b32.xlu0 %v1560, 96
        %v1567 = vpop.permute.xlu0 %1566
        %1568 = vrot.lane.b32.xlu0 %v1561, 96
        %v1569 = vpop.permute.xlu0 %1568
        %1570 = vrot.lane.b32.xlu0 %v1562, 96
        %v1571 = vpop.permute.xlu0 %1570
        %v1572 = vsel %vm782, %v1567, %v1569
        %v1573 = vsel %vm782, %v1569, %v1571
        %v1577 = vadd.f32 %v1431, %v1572
        %v1578 = vadd.f32 %v1432, %v1573
        %v1579 = vadd.f32 %v1433, %v1571
        %s1580 = scalar_lea.vmem [#allocation8], 46
        %v1581 = vld [vmem:[%s1580] sm:$0x3]
        %v1583 = vperm.slane %v1581, 0
        %v1584 = vperm.slane %v1581, 1
        %1585 = vrot.lane.b32.xlu0 %v1583, 127
        %v1586 = vpop.permute.xlu0 %1585
        %1587 = vrot.lane.b32.xlu0 %v1584, 127
        %v1588 = vpop.permute.xlu0 %1587
        %v1589 = vsel %vm392, %v1586, %v1588
        %v1593 = vmul.f32 %v319, %v1586
        %v1594 = vmul.f32 %v318, %v1589
        %v1595 = vmul.f32 %v319, %v1588
        %1596 = vset.pattern.permute.xlu0 23
        %1597 = vperm.xlu0 %1596, %v347
        %v1598 = vpop.permute.xlu0 %1597
        %v1600 = vmul.f32 %v1593, %v1598
        %v1601 = vmul.f32 %v1594, %v1598
        %v1602 = vmul.f32 %v1595, %v1598
        %1606 = vrot.lane.b32.xlu0 %v1600, 78
        %v1607 = vpop.permute.xlu0 %1606
        %1608 = vrot.lane.b32.xlu0 %v1601, 78
        %v1609 = vpop.permute.xlu0 %1608
        %1610 = vrot.lane.b32.xlu0 %v1602, 78
        %v1611 = vpop.permute.xlu0 %1610
        %v1612 = vsel %vm368, %v1607, %v1609
        %v1613 = vsel %vm368, %v1609, %v1611
        %v1617 = vadd.f32 %v1553, %v1612
        %v1618 = vadd.f32 %v1554, %v1613
        %v1619 = vadd.f32 %v1555, %v1611
        %1620 = vset.pattern.permute.xlu0 11
        %1621 = vperm.xlu0 %1620, %v695
        %v1622 = vpop.permute.xlu0 %1621
        %v1624 = vmul.f32 %v1593, %v1622
        %v1625 = vmul.f32 %v1594, %v1622
        %v1626 = vmul.f32 %v1595, %v1622
        %1630 = vrot.lane.b32.xlu0 %v1624, 95
        %v1631 = vpop.permute.xlu0 %1630
        %1632 = vrot.lane.b32.xlu0 %v1625, 95
        %v1633 = vpop.permute.xlu0 %1632
        %1634 = vrot.lane.b32.xlu0 %v1626, 95
        %v1635 = vpop.permute.xlu0 %1634
        %v1636 = vsel %vm716, %v1631, %v1633
        %v1637 = vsel %vm716, %v1633, %v1635
        %v1641 = vadd.f32 %v1577, %v1636
        %v1642 = vadd.f32 %v1578, %v1637
        %v1643 = vadd.f32 %v1579, %v1635
        %vm1644 = vcmp.gt.f32.partialorder %v1581, 0.5
        %v1645 = vsel %vm1644, 1, 0
        %v1646 = vperm.slane %v1645, 0
        %v1647 = vperm.slane %v1645, 1
        %vm1648 = vcmp.eq.s32.totalorder %v1646, 1
        %vm1649 = vcmp.eq.s32.totalorder %v1647, 1
        %1650 = vrot.lane.b32.xlu0 %v319, 1
        %v1651 = vpop.permute.xlu0 %1650
        %1652 = vrot.lane.b32.xlu0 %v318, 1
        %v1653 = vpop.permute.xlu0 %1652
        %vm1654 = vcmask 7168
        %v1655 = vsel %vm1654, %v1651, %v1653
        %v1656 = vsel %vm1654, %v1653, %v1651
        %v1659 = vsel %vm1648, %v1655, -inf
        %v1660 = vsel %vm1649, %v1656, -inf
        %v1661 = vmax.f32 %v1366, %v1659
        %v1662 = vmax.f32 %v1367, %v1660
        %s1663 = scalar_lea.vmem [#allocation8], 48
        %v1664 = vld [vmem:[%s1663] sm:$0x3]
        %v1666 = vperm.slane %v1664, 0
        %v1667 = vperm.slane %v1664, 1
        %v1670 = vmul.f32 %v318, %v1666
        %v1671 = vmul.f32 %v319, %v1667
        %1672 = vset.pattern.permute.xlu0 24
        %1673 = vperm.xlu0 %1672, %v347
        %v1674 = vpop.permute.xlu0 %1673
        %v1676 = vmul.f32 %v1670, %v1674
        %v1677 = vmul.f32 %v1671, %v1674
        %1680 = vrot.lane.b32.xlu0 %v1676, 77
        %v1681 = vpop.permute.xlu0 %1680
        %1682 = vrot.lane.b32.xlu0 %v1677, 77
        %v1683 = vpop.permute.xlu0 %1682
        %v1684 = vsel %vm339, %v1681, %v1683
        %v1688 = vadd.f32 %v1617, %v1681
        %v1689 = vadd.f32 %v1618, %v1684
        %v1690 = vadd.f32 %v1619, %v1683
        %1691 = vset.pattern.permute.xlu0 12
        %1692 = vperm.xlu0 %1691, %v695
        %v1693 = vpop.permute.xlu0 %1692
        %v1695 = vmul.f32 %v1670, %v1693
        %v1696 = vmul.f32 %v1671, %v1693
        %1699 = vrot.lane.b32.xlu0 %v1695, 94
        %v1700 = vpop.permute.xlu0 %1699
        %1701 = vrot.lane.b32.xlu0 %v1696, 94
        %v1702 = vpop.permute.xlu0 %1701
        %v1703 = vsel %vm662, %v1700, %v1702
        %v1707 = vadd.f32 %v1641, %v1700
        %v1708 = vadd.f32 %v1642, %v1703
        %v1709 = vadd.f32 %v1643, %v1702
        %vm1710 = vcmp.gt.f32.partialorder %v1664, 0.5
        %v1711 = vsel %vm1710, 1, 0
        %v1712 = vperm.slane %v1711, 0
        %v1713 = vperm.slane %v1711, 1
        %vm1714 = vcmp.eq.s32.totalorder %v1712, 1
        %vm1715 = vcmp.eq.s32.totalorder %v1713, 1
        %v1716 = vsel %vm1714, %v318, -inf
        %v1717 = vsel %vm1715, %v319, -inf
        %v1718 = vmax.f32 %v1661, %v1716
        %v1719 = vmax.f32 %v1662, %v1717
        %s1720 = scalar_lea.vmem [#allocation8], 50
        %v1721 = vld [vmem:[%s1720] sm:$0x3]
        %v1723 = vperm.slane %v1721, 0
        %v1724 = vperm.slane %v1721, 1
        %1725 = vrot.lane.b32.xlu0 %v1723, 1
        %v1726 = vpop.permute.xlu0 %1725
        %1727 = vrot.lane.b32.xlu0 %v1724, 1
        %v1728 = vpop.permute.xlu0 %1727
        %v1729 = vsel %vm1654, %v1726, %v1728
        %v1733 = vmul.f32 %v318, %v1726
        %v1734 = vmul.f32 %v319, %v1729
        %v1735 = vmul.f32 %v318, %v1728
        %1736 = vset.pattern.permute.xlu0 25
        %1737 = vperm.xlu0 %1736, %v347
        %v1738 = vpop.permute.xlu0 %1737
        %v1740 = vmul.f32 %v1733, %v1738
        %v1741 = vmul.f32 %v1734, %v1738
        %v1742 = vmul.f32 %v1735, %v1738
        %1746 = vrot.lane.b32.xlu0 %v1740, 76
        %v1747 = vpop.permute.xlu0 %1746
        %1748 = vrot.lane.b32.xlu0 %v1741, 76
        %v1749 = vpop.permute.xlu0 %1748
        %1750 = vrot.lane.b32.xlu0 %v1742, 76
        %v1751 = vpop.permute.xlu0 %1750
        %vm1752 = vcmask 621568
        %v1753 = vsel %vm1752, %v1747, %v1749
        %v1754 = vsel %vm1752, %v1749, %v1751
        %v1758 = vadd.f32 %v1688, %v1747
        %v1759 = vadd.f32 %v1689, %v1753
        %v1760 = vadd.f32 %v1690, %v1754
        %1761 = vset.pattern.permute.xlu0 13
        %1762 = vperm.xlu0 %1761, %v695
        %v1763 = vpop.permute.xlu0 %1762
        %v1765 = vmul.f32 %v1733, %v1763
        %v1766 = vmul.f32 %v1734, %v1763
        %v1767 = vmul.f32 %v1735, %v1763
        %1771 = vrot.lane.b32.xlu0 %v1765, 93
        %v1772 = vpop.permute.xlu0 %1771
        %1773 = vrot.lane.b32.xlu0 %v1766, 93
        %v1774 = vpop.permute.xlu0 %1773
        %1775 = vrot.lane.b32.xlu0 %v1767, 93
        %v1776 = vpop.permute.xlu0 %1775
        %v1777 = vsel %vm620, %v1772, %v1774
        %v1778 = vsel %vm620, %v1774, %v1776
        %v1782 = vadd.f32 %v1707, %v1772
        %v1783 = vadd.f32 %v1708, %v1777
        %v1784 = vadd.f32 %v1709, %v1778
        %vm1785 = vcmp.gt.f32.partialorder %v1721, 0.5
        %v1786 = vsel %vm1785, 1, 0
        %v1787 = vperm.slane %v1786, 0
        %v1788 = vperm.slane %v1786, 1
        %vm1789 = vcmp.eq.s32.totalorder %v1787, 1
        %vm1790 = vcmp.eq.s32.totalorder %v1788, 1
        %1791 = vrot.lane.b32.xlu0 %v318, 127
        %v1792 = vpop.permute.xlu0 %1791
        %1793 = vrot.lane.b32.xlu0 %v319, 127
        %v1794 = vpop.permute.xlu0 %1793
        %v1795 = vsel %vm392, %v1792, %v1794
        %v1796 = vsel %vm392, %v1794, %v1792
        %v1799 = vsel %vm1789, %v1795, -inf
        %v1800 = vsel %vm1790, %v1796, -inf
        %v1801 = vmax.f32 %v1718, %v1799
        %v1802 = vmax.f32 %v1719, %v1800
        %s1803 = scalar_lea.vmem [#allocation8], 52
        %v1804 = vld [vmem:[%s1803] sm:$0x3]
        %v1806 = vperm.slane %v1804, 0
        %v1807 = vperm.slane %v1804, 1
        %1808 = vrot.lane.b32.xlu0 %v1806, 2
        %v1809 = vpop.permute.xlu0 %1808
        %1810 = vrot.lane.b32.xlu0 %v1807, 2
        %v1811 = vpop.permute.xlu0 %1810
        %vm1812 = vcmask 15360
        %v1813 = vsel %vm1812, %v1809, %v1811
        %v1817 = vmul.f32 %v318, %v1809
        %v1818 = vmul.f32 %v319, %v1813
        %v1819 = vmul.f32 %v318, %v1811
        %1820 = vset.pattern.permute.xlu0 26
        %1821 = vperm.xlu0 %1820, %v347
        %v1822 = vpop.permute.xlu0 %1821
        %v1824 = vmul.f32 %v1817, %v1822
        %v1825 = vmul.f32 %v1818, %v1822
        %v1826 = vmul.f32 %v1819, %v1822
        %1830 = vrot.lane.b32.xlu0 %v1824, 75
        %v1831 = vpop.permute.xlu0 %1830
        %1832 = vrot.lane.b32.xlu0 %v1825, 75
        %v1833 = vpop.permute.xlu0 %1832
        %1834 = vrot.lane.b32.xlu0 %v1826, 75
        %v1835 = vpop.permute.xlu0 %1834
        %vm1836 = vcmask 613376
        %v1837 = vsel %vm1836, %v1831, %v1833
        %v1838 = vsel %vm1836, %v1833, %v1835
        %v1842 = vadd.f32 %v1758, %v1831
        %v1843 = vadd.f32 %v1759, %v1837
        %v1844 = vadd.f32 %v1760, %v1838
        %1845 = vset.pattern.permute.xlu0 14
        %1846 = vperm.xlu0 %1845, %v695
        %v1847 = vpop.permute.xlu0 %1846
        %v1849 = vmul.f32 %v1817, %v1847
        %v1850 = vmul.f32 %v1818, %v1847
        %v1851 = vmul.f32 %v1819, %v1847
        %1855 = vrot.lane.b32.xlu0 %v1849, 92
        %v1856 = vpop.permute.xlu0 %1855
        %1857 = vrot.lane.b32.xlu0 %v1850, 92
        %v1858 = vpop.permute.xlu0 %1857
        %1859 = vrot.lane.b32.xlu0 %v1851, 92
        %v1860 = vpop.permute.xlu0 %1859
        %v1861 = vsel %vm1316, %v1856, %v1858
        %v1862 = vsel %vm1316, %v1858, %v1860
        %v1866 = vadd.f32 %v1782, %v1856
        %v1867 = vadd.f32 %v1783, %v1861
        %v1868 = vadd.f32 %v1784, %v1862
        %s1869 = scalar_lea.vmem [#allocation8], 54
        %v1870 = vld [vmem:[%s1869] sm:$0x3]
        %v1872 = vperm.slane %v1870, 0
        %v1873 = vperm.slane %v1870, 1
        %1874 = vrot.lane.b32.xlu0 %v1872, 3
        %v1875 = vpop.permute.xlu0 %1874
        %1876 = vrot.lane.b32.xlu0 %v1873, 3
        %v1877 = vpop.permute.xlu0 %1876
        %vm1878 = vcmask 23552
        %v1879 = vsel %vm1878, %v1875, %v1877
        %v1883 = vmul.f32 %v318, %v1875
        %v1884 = vmul.f32 %v319, %v1879
        %v1885 = vmul.f32 %v318, %v1877
        %1886 = vset.pattern.permute.xlu0 27
        %1887 = vperm.xlu0 %1886, %v347
        %v1888 = vpop.permute.xlu0 %1887
        %v1890 = vmul.f32 %v1883, %v1888
        %v1891 = vmul.f32 %v1884, %v1888
        %v1892 = vmul.f32 %v1885, %v1888
        %1896 = vrot.lane.b32.xlu0 %v1890, 74
        %v1897 = vpop.permute.xlu0 %1896
        %1898 = vrot.lane.b32.xlu0 %v1891, 74
        %v1899 = vpop.permute.xlu0 %1898
        %1900 = vrot.lane.b32.xlu0 %v1892, 74
        %v1901 = vpop.permute.xlu0 %1900
        %vm1902 = vcmask 605184
        %v1903 = vsel %vm1902, %v1897, %v1899
        %v1904 = vsel %vm1902, %v1899, %v1901
        %v1908 = vadd.f32 %v1842, %v1897
        %v1909 = vadd.f32 %v1843, %v1903
        %v1910 = vadd.f32 %v1844, %v1904
        %s1911 = scalar_lea.vmem [#allocation8], 56
        %v1912 = vld [vmem:[%s1911] sm:$0x3]
        %v1914 = vperm.slane %v1912, 0
        %v1915 = vperm.slane %v1912, 1
        %1916 = vrot.lane.b32.xlu0 %v1914, 13
        %v1917 = vpop.permute.xlu0 %1916
        %1918 = vrot.lane.b32.xlu0 %v1915, 13
        %v1919 = vpop.permute.xlu0 %1918
        %vm1920 = vcmask 105472
        %v1921 = vsel %vm1920, %v1917, %v1919
        %v1925 = vmul.f32 %v318, %v1917
        %v1926 = vmul.f32 %v319, %v1921
        %v1927 = vmul.f32 %v318, %v1919
        %1928 = vset.pattern.permute.xlu0 28
        %1929 = vperm.xlu0 %1928, %v347
        %v1930 = vpop.permute.xlu0 %1929
        %v1932 = vmul.f32 %v1925, %v1930
        %v1933 = vmul.f32 %v1926, %v1930
        %v1934 = vmul.f32 %v1927, %v1930
        %1938 = vrot.lane.b32.xlu0 %v1932, 64
        %v1939 = vpop.permute.xlu0 %1938
        %1940 = vrot.lane.b32.xlu0 %v1933, 64
        %v1941 = vpop.permute.xlu0 %1940
        %1942 = vrot.lane.b32.xlu0 %v1934, 64
        %v1943 = vpop.permute.xlu0 %1942
        %vm1944 = vcmask 523264
        %v1945 = vsel %vm1944, %v1939, %v1941
        %v1946 = vsel %vm1944, %v1941, %v1943
        %v1950 = vadd.f32 %v1908, %v1939
        %v1951 = vadd.f32 %v1909, %v1945
        %v1952 = vadd.f32 %v1910, %v1946
        %s1953 = scalar_lea.vmem [#allocation8], 58
        %v1954 = vld [vmem:[%s1953] sm:$0x3]
        %v1956 = vperm.slane %v1954, 0
        %v1957 = vperm.slane %v1954, 1
        %1958 = vrot.lane.b32.xlu0 %v1956, 14
        %v1959 = vpop.permute.xlu0 %1958
        %1960 = vrot.lane.b32.xlu0 %v1957, 14
        %v1961 = vpop.permute.xlu0 %1960
        %vm1962 = vcmask 113664
        %v1963 = vsel %vm1962, %v1959, %v1961
        %v1967 = vmul.f32 %v318, %v1959
        %v1968 = vmul.f32 %v319, %v1963
        %v1969 = vmul.f32 %v318, %v1961
        %1970 = vset.pattern.permute.xlu0 29
        %1971 = vperm.xlu0 %1970, %v347
        %v1972 = vpop.permute.xlu0 %1971
        %v1974 = vmul.f32 %v1967, %v1972
        %v1975 = vmul.f32 %v1968, %v1972
        %v1976 = vmul.f32 %v1969, %v1972
        %1980 = vrot.lane.b32.xlu0 %v1974, 63
        %v1981 = vpop.permute.xlu0 %1980
        %1982 = vrot.lane.b32.xlu0 %v1975, 63
        %v1983 = vpop.permute.xlu0 %1982
        %1984 = vrot.lane.b32.xlu0 %v1976, 63
        %v1985 = vpop.permute.xlu0 %1984
        %vm1986 = vcmask 515072
        %v1987 = vsel %vm1986, %v1981, %v1983
        %v1988 = vsel %vm1986, %v1983, %v1985
        %v1992 = vadd.f32 %v1950, %v1981
        %v1993 = vadd.f32 %v1951, %v1987
        %v1994 = vadd.f32 %v1952, %v1988
        %1995 = vset.pattern.permute.xlu0 15
        %1996 = vperm.xlu0 %1995, %v695
        %v1997 = vpop.permute.xlu0 %1996
        %v1999 = vmul.f32 %v1967, %v1997
        %v2000 = vmul.f32 %v1968, %v1997
        %v2001 = vmul.f32 %v1969, %v1997
        %2005 = vrot.lane.b32.xlu0 %v1999, 80
        %v2006 = vpop.permute.xlu0 %2005
        %2007 = vrot.lane.b32.xlu0 %v2000, 80
        %v2008 = vpop.permute.xlu0 %2007
        %2009 = vrot.lane.b32.xlu0 %v2001, 80
        %v2010 = vpop.permute.xlu0 %2009
        %v2011 = vsel %vm452, %v2006, %v2008
        %v2012 = vsel %vm452, %v2008, %v2010
        %v2016 = vadd.f32 %v1866, %v2006
        %v2017 = vadd.f32 %v1867, %v2011
        %v2018 = vadd.f32 %v1868, %v2012
        %s2019 = scalar_lea.vmem [#allocation8], 60
        %v2020 = vld [vmem:[%s2019] sm:$0x3]
        %v2022 = vperm.slane %v2020, 0
        %v2023 = vperm.slane %v2020, 1
        %2024 = vrot.lane.b32.xlu0 %v2022, 15
        %v2025 = vpop.permute.xlu0 %2024
        %2026 = vrot.lane.b32.xlu0 %v2023, 15
        %v2027 = vpop.permute.xlu0 %2026
        %v2028 = vsel %vm1359, %v2025, %v2027
        %v2032 = vmul.f32 %v318, %v2025
        %v2033 = vmul.f32 %v319, %v2028
        %v2034 = vmul.f32 %v318, %v2027
        %2035 = vset.pattern.permute.xlu0 30
        %2036 = vperm.xlu0 %2035, %v347
        %v2037 = vpop.permute.xlu0 %2036
        %v2039 = vmul.f32 %v2032, %v2037
        %v2040 = vmul.f32 %v2033, %v2037
        %v2041 = vmul.f32 %v2034, %v2037
        %2045 = vrot.lane.b32.xlu0 %v2039, 62
        %v2046 = vpop.permute.xlu0 %2045
        %2047 = vrot.lane.b32.xlu0 %v2040, 62
        %v2048 = vpop.permute.xlu0 %2047
        %2049 = vrot.lane.b32.xlu0 %v2041, 62
        %v2050 = vpop.permute.xlu0 %2049
        %vm2051 = vcmask 506880
        %v2052 = vsel %vm2051, %v2046, %v2048
        %v2053 = vsel %vm2051, %v2048, %v2050
        %v2057 = vadd.f32 %v1992, %v2046
        %v2058 = vadd.f32 %v1993, %v2052
        %v2059 = vadd.f32 %v1994, %v2053
        %2060 = vset.pattern.permute.xlu0 16
        %2061 = vperm.xlu0 %2060, %v695
        %v2062 = vpop.permute.xlu0 %2061
        %v2064 = vmul.f32 %v2032, %v2062
        %v2065 = vmul.f32 %v2033, %v2062
        %v2066 = vmul.f32 %v2034, %v2062
        %2070 = vrot.lane.b32.xlu0 %v2064, 79
        %v2071 = vpop.permute.xlu0 %2070
        %2072 = vrot.lane.b32.xlu0 %v2065, 79
        %v2073 = vpop.permute.xlu0 %2072
        %2074 = vrot.lane.b32.xlu0 %v2066, 79
        %v2075 = vpop.permute.xlu0 %2074
        %v2076 = vsel %vm410, %v2071, %v2073
        %v2077 = vsel %vm410, %v2073, %v2075
        %v2081 = vadd.f32 %v2016, %v2071
        %v2082 = vadd.f32 %v2017, %v2076
        %v2083 = vadd.f32 %v2018, %v2077
        %vm2084 = vcmp.gt.f32.partialorder %v2020, 0.5
        %v2085 = vsel %vm2084, 1, 0
        %v2086 = vperm.slane %v2085, 0
        %v2087 = vperm.slane %v2085, 1
        %vm2088 = vcmp.eq.s32.totalorder %v2086, 1
        %vm2089 = vcmp.eq.s32.totalorder %v2087, 1
        %2090 = vrot.lane.b32.xlu0 %v318, 113
        %v2091 = vpop.permute.xlu0 %2090
        %2092 = vrot.lane.b32.xlu0 %v319, 113
        %v2093 = vpop.permute.xlu0 %2092
        %v2094 = vsel %vm1292, %v2091, %v2093
        %v2095 = vsel %vm1292, %v2093, %v2091
        %v2098 = vsel %vm2088, %v2094, -inf
        %v2099 = vsel %vm2089, %v2095, -inf
        %v2100 = vmax.f32 %v1801, %v2098
        %v2101 = vmax.f32 %v1802, %v2099
        %s2102 = scalar_lea.vmem [#allocation8], 62
        %v2103 = vld [vmem:[%s2102] sm:$0x3]
        %v2105 = vperm.slane %v2103, 0
        %v2106 = vperm.slane %v2103, 1
        %2107 = vrot.lane.b32.xlu0 %v2105, 16
        %v2108 = vpop.permute.xlu0 %2107
        %2109 = vrot.lane.b32.xlu0 %v2106, 16
        %v2110 = vpop.permute.xlu0 %2109
        %v2111 = vsel %vm1274, %v2108, %v2110
        %v2115 = vmul.f32 %v318, %v2108
        %v2116 = vmul.f32 %v319, %v2111
        %v2117 = vmul.f32 %v318, %v2110
        %2118 = vset.pattern.permute.xlu0 31
        %2119 = vperm.xlu0 %2118, %v347
        %v2120 = vpop.permute.xlu0 %2119
        %v2122 = vmul.f32 %v2115, %v2120
        %v2123 = vmul.f32 %v2116, %v2120
        %v2124 = vmul.f32 %v2117, %v2120
        %2128 = vrot.lane.b32.xlu0 %v2122, 61
        %v2129 = vpop.permute.xlu0 %2128
        %2130 = vrot.lane.b32.xlu0 %v2123, 61
        %v2131 = vpop.permute.xlu0 %2130
        %2132 = vrot.lane.b32.xlu0 %v2124, 61
        %v2133 = vpop.permute.xlu0 %2132
        %vm2134 = vcmask 498688
        %v2135 = vsel %vm2134, %v2129, %v2131
        %v2136 = vsel %vm2134, %v2131, %v2133
        %v2140 = vadd.f32 %v2057, %v2129
        %v2141 = vadd.f32 %v2058, %v2135
        %v2142 = vadd.f32 %v2059, %v2136
        %2143 = vset.pattern.permute.xlu0 17
        %2144 = vperm.xlu0 %2143, %v695
        %v2145 = vpop.permute.xlu0 %2144
        %v2147 = vmul.f32 %v2115, %v2145
        %v2148 = vmul.f32 %v2116, %v2145
        %v2149 = vmul.f32 %v2117, %v2145
        %2153 = vrot.lane.b32.xlu0 %v2147, 78
        %v2154 = vpop.permute.xlu0 %2153
        %2155 = vrot.lane.b32.xlu0 %v2148, 78
        %v2156 = vpop.permute.xlu0 %2155
        %2157 = vrot.lane.b32.xlu0 %v2149, 78
        %v2158 = vpop.permute.xlu0 %2157
        %v2159 = vsel %vm368, %v2154, %v2156
        %v2160 = vsel %vm368, %v2156, %v2158
        %v2164 = vadd.f32 %v2081, %v2154
        %v2165 = vadd.f32 %v2082, %v2159
        %v2166 = vadd.f32 %v2083, %v2160
        %vm2167 = vcmp.gt.f32.partialorder %v2103, 0.5
        %v2168 = vsel %vm2167, 1, 0
        %v2169 = vperm.slane %v2168, 0
        %v2170 = vperm.slane %v2168, 1
        %vm2171 = vcmp.eq.s32.totalorder %v2169, 1
        %vm2172 = vcmp.eq.s32.totalorder %v2170, 1
        %2173 = vrot.lane.b32.xlu0 %v318, 112
        %v2174 = vpop.permute.xlu0 %2173
        %2175 = vrot.lane.b32.xlu0 %v319, 112
        %v2176 = vpop.permute.xlu0 %2175
        %v2177 = vsel %vm644, %v2174, %v2176
        %v2178 = vsel %vm644, %v2176, %v2174
        %v2181 = vsel %vm2171, %v2177, -inf
        %v2182 = vsel %vm2172, %v2178, -inf
        %v2183 = vmax.f32 %v2100, %v2181
        %v2184 = vmax.f32 %v2101, %v2182
        %s2185 = scalar_lea.vmem [#allocation8], 64
        %v2186 = vld [vmem:[%s2185] sm:$0x3]
        %v2188 = vperm.slane %v2186, 0
        %v2189 = vperm.slane %v2186, 1
        %2190 = vrot.lane.b32.xlu0 %v2188, 17
        %v2191 = vpop.permute.xlu0 %2190
        %2192 = vrot.lane.b32.xlu0 %v2189, 17
        %v2193 = vpop.permute.xlu0 %2192
        %v2194 = vsel %vm1193, %v2191, %v2193
        %v2198 = vmul.f32 %v318, %v2191
        %v2199 = vmul.f32 %v319, %v2194
        %v2200 = vmul.f32 %v318, %v2193
        %2201 = vset.pattern.permute.xlu0 32
        %2202 = vperm.xlu0 %2201, %v347
        %v2203 = vpop.permute.xlu0 %2202
        %v2205 = vmul.f32 %v2198, %v2203
        %v2206 = vmul.f32 %v2199, %v2203
        %v2207 = vmul.f32 %v2200, %v2203
        %2211 = vrot.lane.b32.xlu0 %v2205, 60
        %v2212 = vpop.permute.xlu0 %2211
        %2213 = vrot.lane.b32.xlu0 %v2206, 60
        %v2214 = vpop.permute.xlu0 %2213
        %2215 = vrot.lane.b32.xlu0 %v2207, 60
        %v2216 = vpop.permute.xlu0 %2215
        %vm2217 = vcmask 490496
        %v2218 = vsel %vm2217, %v2212, %v2214
        %v2219 = vsel %vm2217, %v2214, %v2216
        %v2223 = vadd.f32 %v2140, %v2212
        %v2224 = vadd.f32 %v2141, %v2218
        %v2225 = vadd.f32 %v2142, %v2219
        %2226 = vset.pattern.permute.xlu0 18
        %2227 = vperm.xlu0 %2226, %v695
        %v2228 = vpop.permute.xlu0 %2227
        %v2230 = vmul.f32 %v2198, %v2228
        %v2231 = vmul.f32 %v2199, %v2228
        %v2232 = vmul.f32 %v2200, %v2228
        %2236 = vrot.lane.b32.xlu0 %v2230, 77
        %v2237 = vpop.permute.xlu0 %2236
        %2238 = vrot.lane.b32.xlu0 %v2231, 77
        %v2239 = vpop.permute.xlu0 %2238
        %2240 = vrot.lane.b32.xlu0 %v2232, 77
        %v2241 = vpop.permute.xlu0 %2240
        %v2242 = vsel %vm339, %v2237, %v2239
        %v2243 = vsel %vm339, %v2239, %v2241
        %v2247 = vadd.f32 %v2164, %v2237
        %v2248 = vadd.f32 %v2165, %v2242
        %v2249 = vadd.f32 %v2166, %v2243
        %vm2250 = vcmp.gt.f32.partialorder %v2186, 0.5
        %v2251 = vsel %vm2250, 1, 0
        %v2252 = vperm.slane %v2251, 0
        %v2253 = vperm.slane %v2251, 1
        %vm2254 = vcmp.eq.s32.totalorder %v2252, 1
        %vm2255 = vcmp.eq.s32.totalorder %v2253, 1
        %2256 = vrot.lane.b32.xlu0 %v318, 111
        %v2257 = vpop.permute.xlu0 %2256
        %2258 = vrot.lane.b32.xlu0 %v319, 111
        %v2259 = vpop.permute.xlu0 %2258
        %v2260 = vsel %vm686, %v2257, %v2259
        %v2261 = vsel %vm686, %v2259, %v2257
        %v2264 = vsel %vm2254, %v2260, -inf
        %v2265 = vsel %vm2255, %v2261, -inf
        %v2266 = vmax.f32 %v2183, %v2264
        %v2267 = vmax.f32 %v2184, %v2265
        %s2268 = scalar_lea.vmem [#allocation8], 66
        %v2269 = vld [vmem:[%s2268] sm:$0x3]
        %v2271 = vperm.slane %v2269, 0
        %v2272 = vperm.slane %v2269, 1
        %2273 = vrot.lane.b32.xlu0 %v2271, 18
        %v2274 = vpop.permute.xlu0 %2273
        %2275 = vrot.lane.b32.xlu0 %v2272, 18
        %v2276 = vpop.permute.xlu0 %2275
        %vm2277 = vcmask 146432
        %v2278 = vsel %vm2277, %v2274, %v2276
        %v2282 = vmul.f32 %v318, %v2274
        %v2283 = vmul.f32 %v319, %v2278
        %v2284 = vmul.f32 %v318, %v2276
        %2285 = vset.pattern.permute.xlu0 33
        %2286 = vperm.xlu0 %2285, %v347
        %v2287 = vpop.permute.xlu0 %2286
        %v2289 = vmul.f32 %v2282, %v2287
        %v2290 = vmul.f32 %v2283, %v2287
        %v2291 = vmul.f32 %v2284, %v2287
        %2295 = vrot.lane.b32.xlu0 %v2289, 59
        %v2296 = vpop.permute.xlu0 %2295
        %2297 = vrot.lane.b32.xlu0 %v2290, 59
        %v2298 = vpop.permute.xlu0 %2297
        %2299 = vrot.lane.b32.xlu0 %v2291, 59
        %v2300 = vpop.permute.xlu0 %2299
        %vm2301 = vcmask 482304
        %v2302 = vsel %vm2301, %v2296, %v2298
        %v2303 = vsel %vm2301, %v2298, %v2300
        %v2307 = vadd.f32 %v2223, %v2296
        %v2308 = vadd.f32 %v2224, %v2302
        %v2309 = vadd.f32 %v2225, %v2303
        %2310 = vset.pattern.permute.xlu0 19
        %2311 = vperm.xlu0 %2310, %v695
        %v2312 = vpop.permute.xlu0 %2311
        %v2314 = vmul.f32 %v2282, %v2312
        %v2315 = vmul.f32 %v2283, %v2312
        %v2316 = vmul.f32 %v2284, %v2312
        %2320 = vrot.lane.b32.xlu0 %v2314, 76
        %v2321 = vpop.permute.xlu0 %2320
        %2322 = vrot.lane.b32.xlu0 %v2315, 76
        %v2323 = vpop.permute.xlu0 %2322
        %2324 = vrot.lane.b32.xlu0 %v2316, 76
        %v2325 = vpop.permute.xlu0 %2324
        %v2326 = vsel %vm1752, %v2321, %v2323
        %v2327 = vsel %vm1752, %v2323, %v2325
        %v2331 = vadd.f32 %v2247, %v2321
        %v2332 = vadd.f32 %v2248, %v2326
        %v2333 = vadd.f32 %v2249, %v2327
        %s2334 = scalar_lea.vmem [#allocation8], 68
        %v2335 = vld [vmem:[%s2334] sm:$0x3]
        %v2337 = vperm.slane %v2335, 0
        %v2338 = vperm.slane %v2335, 1
        %2339 = vrot.lane.b32.xlu0 %v2337, 19
        %v2340 = vpop.permute.xlu0 %2339
        %2341 = vrot.lane.b32.xlu0 %v2338, 19
        %v2342 = vpop.permute.xlu0 %2341
        %vm2343 = vcmask 154624
        %v2344 = vsel %vm2343, %v2340, %v2342
        %v2348 = vmul.f32 %v318, %v2340
        %v2349 = vmul.f32 %v319, %v2344
        %v2350 = vmul.f32 %v318, %v2342
        %2351 = vset.pattern.permute.xlu0 34
        %2352 = vperm.xlu0 %2351, %v347
        %v2353 = vpop.permute.xlu0 %2352
        %v2355 = vmul.f32 %v2348, %v2353
        %v2356 = vmul.f32 %v2349, %v2353
        %v2357 = vmul.f32 %v2350, %v2353
        %2361 = vrot.lane.b32.xlu0 %v2355, 58
        %v2362 = vpop.permute.xlu0 %2361
        %2363 = vrot.lane.b32.xlu0 %v2356, 58
        %v2364 = vpop.permute.xlu0 %2363
        %2365 = vrot.lane.b32.xlu0 %v2357, 58
        %v2366 = vpop.permute.xlu0 %2365
        %vm2367 = vcmask 474112
        %v2368 = vsel %vm2367, %v2362, %v2364
        %v2369 = vsel %vm2367, %v2364, %v2366
        %v2373 = vadd.f32 %v2307, %v2362
        %v2374 = vadd.f32 %v2308, %v2368
        %v2375 = vadd.f32 %v2309, %v2369
        %s2376 = scalar_lea.vmem [#allocation8], 70
        %v2377 = vld [vmem:[%s2376] sm:$0x3]
        %v2379 = vperm.slane %v2377, 0
        %v2380 = vperm.slane %v2377, 1
        %2381 = vrot.lane.b32.xlu0 %v2379, 29
        %v2382 = vpop.permute.xlu0 %2381
        %2383 = vrot.lane.b32.xlu0 %v2380, 29
        %v2384 = vpop.permute.xlu0 %2383
        %vm2385 = vcmask 236544
        %v2386 = vsel %vm2385, %v2382, %v2384
        %v2390 = vmul.f32 %v318, %v2382
        %v2391 = vmul.f32 %v319, %v2386
        %v2392 = vmul.f32 %v318, %v2384
        %2393 = vset.pattern.permute.xlu0 35
        %2394 = vperm.xlu0 %2393, %v347
        %v2395 = vpop.permute.xlu0 %2394
        %v2397 = vmul.f32 %v2390, %v2395
        %v2398 = vmul.f32 %v2391, %v2395
        %v2399 = vmul.f32 %v2392, %v2395
        %2403 = vrot.lane.b32.xlu0 %v2397, 48
        %v2404 = vpop.permute.xlu0 %2403
        %2405 = vrot.lane.b32.xlu0 %v2398, 48
        %v2406 = vpop.permute.xlu0 %2405
        %2407 = vrot.lane.b32.xlu0 %v2399, 48
        %v2408 = vpop.permute.xlu0 %2407
        %vm2409 = vcmask 392192
        %v2410 = vsel %vm2409, %v2404, %v2406
        %v2411 = vsel %vm2409, %v2406, %v2408
        %v2415 = vadd.f32 %v2373, %v2404
        %v2416 = vadd.f32 %v2374, %v2410
        %v2417 = vadd.f32 %v2375, %v2411
        %s2418 = scalar_lea.vmem [#allocation8], 72
        %v2419 = vld [vmem:[%s2418] sm:$0x3]
        %v2421 = vperm.slane %v2419, 0
        %v2422 = vperm.slane %v2419, 1
        %2423 = vrot.lane.b32.xlu0 %v2421, 30
        %v2424 = vpop.permute.xlu0 %2423
        %2425 = vrot.lane.b32.xlu0 %v2422, 30
        %v2426 = vpop.permute.xlu0 %2425
        %vm2427 = vcmask 244736
        %v2428 = vsel %vm2427, %v2424, %v2426
        %v2432 = vmul.f32 %v318, %v2424
        %v2433 = vmul.f32 %v319, %v2428
        %v2434 = vmul.f32 %v318, %v2426
        %2435 = vset.pattern.permute.xlu0 36
        %2436 = vperm.xlu0 %2435, %v347
        %v2437 = vpop.permute.xlu0 %2436
        %v2439 = vmul.f32 %v2432, %v2437
        %v2440 = vmul.f32 %v2433, %v2437
        %v2441 = vmul.f32 %v2434, %v2437
        %2445 = vrot.lane.b32.xlu0 %v2439, 47
        %v2446 = vpop.permute.xlu0 %2445
        %2447 = vrot.lane.b32.xlu0 %v2440, 47
        %v2448 = vpop.permute.xlu0 %2447
        %2449 = vrot.lane.b32.xlu0 %v2441, 47
        %v2450 = vpop.permute.xlu0 %2449
        %vm2451 = vcmask 384000
        %v2452 = vsel %vm2451, %v2446, %v2448
        %v2453 = vsel %vm2451, %v2448, %v2450
        %v2457 = vadd.f32 %v2415, %v2446
        %v2458 = vadd.f32 %v2416, %v2452
        %v2459 = vadd.f32 %v2417, %v2453
        %2460 = vset.pattern.permute.xlu0 20
        %2461 = vperm.xlu0 %2460, %v695
        %v2462 = vpop.permute.xlu0 %2461
        %v2464 = vmul.f32 %v2432, %v2462
        %v2465 = vmul.f32 %v2433, %v2462
        %v2466 = vmul.f32 %v2434, %v2462
        %2470 = vrot.lane.b32.xlu0 %v2464, 64
        %v2471 = vpop.permute.xlu0 %2470
        %2472 = vrot.lane.b32.xlu0 %v2465, 64
        %v2473 = vpop.permute.xlu0 %2472
        %2474 = vrot.lane.b32.xlu0 %v2466, 64
        %v2475 = vpop.permute.xlu0 %2474
        %v2476 = vsel %vm1944, %v2471, %v2473
        %v2477 = vsel %vm1944, %v2473, %v2475
        %v2481 = vadd.f32 %v2331, %v2471
        %v2482 = vadd.f32 %v2332, %v2476
        %v2483 = vadd.f32 %v2333, %v2477
        %s2484 = scalar_lea.vmem [#allocation8], 74
        %v2485 = vld [vmem:[%s2484] sm:$0x3]
        %v2487 = vperm.slane %v2485, 0
        %v2488 = vperm.slane %v2485, 1
        %2489 = vrot.lane.b32.xlu0 %v2487, 31
        %v2490 = vpop.permute.xlu0 %2489
        %2491 = vrot.lane.b32.xlu0 %v2488, 31
        %v2492 = vpop.permute.xlu0 %2491
        %vm2493 = vcmask 252928
        %v2494 = vsel %vm2493, %v2490, %v2492
        %v2498 = vmul.f32 %v318, %v2490
        %v2499 = vmul.f32 %v319, %v2494
        %v2500 = vmul.f32 %v318, %v2492
        %2501 = vset.pattern.permute.xlu0 37
        %2502 = vperm.xlu0 %2501, %v347
        %v2503 = vpop.permute.xlu0 %2502
        %v2505 = vmul.f32 %v2498, %v2503
        %v2506 = vmul.f32 %v2499, %v2503
        %v2507 = vmul.f32 %v2500, %v2503
        %2511 = vrot.lane.b32.xlu0 %v2505, 46
        %v2512 = vpop.permute.xlu0 %2511
        %2513 = vrot.lane.b32.xlu0 %v2506, 46
        %v2514 = vpop.permute.xlu0 %2513
        %2515 = vrot.lane.b32.xlu0 %v2507, 46
        %v2516 = vpop.permute.xlu0 %2515
        %vm2517 = vcmask 375808
        %v2518 = vsel %vm2517, %v2512, %v2514
        %v2519 = vsel %vm2517, %v2514, %v2516
        %v2523 = vadd.f32 %v2457, %v2512
        %v2524 = vadd.f32 %v2458, %v2518
        %v2525 = vadd.f32 %v2459, %v2519
        %2526 = vset.pattern.permute.xlu0 21
        %2527 = vperm.xlu0 %2526, %v695
        %v2528 = vpop.permute.xlu0 %2527
        %v2530 = vmul.f32 %v2498, %v2528
        %v2531 = vmul.f32 %v2499, %v2528
        %v2532 = vmul.f32 %v2500, %v2528
        %2536 = vrot.lane.b32.xlu0 %v2530, 63
        %v2537 = vpop.permute.xlu0 %2536
        %2538 = vrot.lane.b32.xlu0 %v2531, 63
        %v2539 = vpop.permute.xlu0 %2538
        %2540 = vrot.lane.b32.xlu0 %v2532, 63
        %v2541 = vpop.permute.xlu0 %2540
        %v2542 = vsel %vm1986, %v2537, %v2539
        %v2543 = vsel %vm1986, %v2539, %v2541
        %v2547 = vadd.f32 %v2481, %v2537
        %v2548 = vadd.f32 %v2482, %v2542
        %v2549 = vadd.f32 %v2483, %v2543
        %s2550 = scalar_lea.vmem [#allocation8], 76
        %v2551 = vld [vmem:[%s2550] sm:$0x3]
        %v2553 = vperm.slane %v2551, 0
        %v2554 = vperm.slane %v2551, 1
        %2555 = vrot.lane.b32.xlu0 %v2553, 32
        %v2556 = vpop.permute.xlu0 %2555
        %2557 = vrot.lane.b32.xlu0 %v2554, 32
        %v2558 = vpop.permute.xlu0 %2557
        %vm2559 = vcmask 261120
        %v2560 = vsel %vm2559, %v2556, %v2558
        %v2564 = vmul.f32 %v318, %v2556
        %v2565 = vmul.f32 %v319, %v2560
        %v2566 = vmul.f32 %v318, %v2558
        %2567 = vset.pattern.permute.xlu0 38
        %2568 = vperm.xlu0 %2567, %v347
        %v2569 = vpop.permute.xlu0 %2568
        %v2571 = vmul.f32 %v2564, %v2569
        %v2572 = vmul.f32 %v2565, %v2569
        %v2573 = vmul.f32 %v2566, %v2569
        %2577 = vrot.lane.b32.xlu0 %v2571, 45
        %v2578 = vpop.permute.xlu0 %2577
        %2579 = vrot.lane.b32.xlu0 %v2572, 45
        %v2580 = vpop.permute.xlu0 %2579
        %2581 = vrot.lane.b32.xlu0 %v2573, 45
        %v2582 = vpop.permute.xlu0 %2581
        %vm2583 = vcmask 367616
        %v2584 = vsel %vm2583, %v2578, %v2580
        %v2585 = vsel %vm2583, %v2580, %v2582
        %v2589 = vadd.f32 %v2523, %v2578
        %v2590 = vadd.f32 %v2524, %v2584
        %v2591 = vadd.f32 %v2525, %v2585
        %2592 = vset.pattern.permute.xlu0 22
        %2593 = vperm.xlu0 %2592, %v695
        %v2594 = vpop.permute.xlu0 %2593
        %v2596 = vmul.f32 %v2564, %v2594
        %v2597 = vmul.f32 %v2565, %v2594
        %v2598 = vmul.f32 %v2566, %v2594
        %2602 = vrot.lane.b32.xlu0 %v2596, 62
        %v2603 = vpop.permute.xlu0 %2602
        %2604 = vrot.lane.b32.xlu0 %v2597, 62
        %v2605 = vpop.permute.xlu0 %2604
        %2606 = vrot.lane.b32.xlu0 %v2598, 62
        %v2607 = vpop.permute.xlu0 %2606
        %v2608 = vsel %vm2051, %v2603, %v2605
        %v2609 = vsel %vm2051, %v2605, %v2607
        %v2613 = vadd.f32 %v2547, %v2603
        %v2614 = vadd.f32 %v2548, %v2608
        %v2615 = vadd.f32 %v2549, %v2609
        %s2616 = scalar_lea.vmem [#allocation8], 78
        %v2617 = vld [vmem:[%s2616] sm:$0x3]
        %v2619 = vperm.slane %v2617, 0
        %v2620 = vperm.slane %v2617, 1
        %2621 = vrot.lane.b32.xlu0 %v2619, 33
        %v2622 = vpop.permute.xlu0 %2621
        %2623 = vrot.lane.b32.xlu0 %v2620, 33
        %v2624 = vpop.permute.xlu0 %2623
        %vm2625 = vcmask 269312
        %v2626 = vsel %vm2625, %v2622, %v2624
        %v2630 = vmul.f32 %v318, %v2622
        %v2631 = vmul.f32 %v319, %v2626
        %v2632 = vmul.f32 %v318, %v2624
        %2633 = vset.pattern.permute.xlu0 39
        %2634 = vperm.xlu0 %2633, %v347
        %v2635 = vpop.permute.xlu0 %2634
        %v2637 = vmul.f32 %v2630, %v2635
        %v2638 = vmul.f32 %v2631, %v2635
        %v2639 = vmul.f32 %v2632, %v2635
        %2643 = vrot.lane.b32.xlu0 %v2637, 44
        %v2644 = vpop.permute.xlu0 %2643
        %2645 = vrot.lane.b32.xlu0 %v2638, 44
        %v2646 = vpop.permute.xlu0 %2645
        %2647 = vrot.lane.b32.xlu0 %v2639, 44
        %v2648 = vpop.permute.xlu0 %2647
        %vm2649 = vcmask 359424
        %v2650 = vsel %vm2649, %v2644, %v2646
        %v2651 = vsel %vm2649, %v2646, %v2648
        %v2655 = vadd.f32 %v2589, %v2644
        %v2656 = vadd.f32 %v2590, %v2650
        %v2657 = vadd.f32 %v2591, %v2651
        %2658 = vset.pattern.permute.xlu0 23
        %2659 = vperm.xlu0 %2658, %v695
        %v2660 = vpop.permute.xlu0 %2659
        %v2662 = vmul.f32 %v2630, %v2660
        %v2663 = vmul.f32 %v2631, %v2660
        %v2664 = vmul.f32 %v2632, %v2660
        %2668 = vrot.lane.b32.xlu0 %v2662, 61
        %v2669 = vpop.permute.xlu0 %2668
        %2670 = vrot.lane.b32.xlu0 %v2663, 61
        %v2671 = vpop.permute.xlu0 %2670
        %2672 = vrot.lane.b32.xlu0 %v2664, 61
        %v2673 = vpop.permute.xlu0 %2672
        %v2674 = vsel %vm2134, %v2669, %v2671
        %v2675 = vsel %vm2134, %v2671, %v2673
        %v2679 = vadd.f32 %v2613, %v2669
        %v2680 = vadd.f32 %v2614, %v2674
        %v2681 = vadd.f32 %v2615, %v2675
        %s2682 = scalar_lea.vmem [#allocation8], 80
        %v2683 = vld [vmem:[%s2682] sm:$0x3]
        %v2685 = vperm.slane %v2683, 0
        %v2686 = vperm.slane %v2683, 1
        %2687 = vrot.lane.b32.xlu0 %v2685, 34
        %v2688 = vpop.permute.xlu0 %2687
        %2689 = vrot.lane.b32.xlu0 %v2686, 34
        %v2690 = vpop.permute.xlu0 %2689
        %vm2691 = vcmask 277504
        %v2692 = vsel %vm2691, %v2688, %v2690
        %v2696 = vmul.f32 %v318, %v2688
        %v2697 = vmul.f32 %v319, %v2692
        %v2698 = vmul.f32 %v318, %v2690
        %2699 = vset.pattern.permute.xlu0 40
        %2700 = vperm.xlu0 %2699, %v347
        %v2701 = vpop.permute.xlu0 %2700
        %v2703 = vmul.f32 %v2696, %v2701
        %v2704 = vmul.f32 %v2697, %v2701
        %v2705 = vmul.f32 %v2698, %v2701
        %2709 = vrot.lane.b32.xlu0 %v2703, 43
        %v2710 = vpop.permute.xlu0 %2709
        %2711 = vrot.lane.b32.xlu0 %v2704, 43
        %v2712 = vpop.permute.xlu0 %2711
        %2713 = vrot.lane.b32.xlu0 %v2705, 43
        %v2714 = vpop.permute.xlu0 %2713
        %vm2715 = vcmask 351232
        %v2716 = vsel %vm2715, %v2710, %v2712
        %v2717 = vsel %vm2715, %v2712, %v2714
        %v2721 = vadd.f32 %v2655, %v2710
        %v2722 = vadd.f32 %v2656, %v2716
        %v2723 = vadd.f32 %v2657, %v2717
        %2724 = vset.pattern.permute.xlu0 24
        %2725 = vperm.xlu0 %2724, %v695
        %v2726 = vpop.permute.xlu0 %2725
        %v2728 = vmul.f32 %v2696, %v2726
        %v2729 = vmul.f32 %v2697, %v2726
        %v2730 = vmul.f32 %v2698, %v2726
        %2734 = vrot.lane.b32.xlu0 %v2728, 60
        %v2735 = vpop.permute.xlu0 %2734
        %2736 = vrot.lane.b32.xlu0 %v2729, 60
        %v2737 = vpop.permute.xlu0 %2736
        %2738 = vrot.lane.b32.xlu0 %v2730, 60
        %v2739 = vpop.permute.xlu0 %2738
        %v2740 = vsel %vm2217, %v2735, %v2737
        %v2741 = vsel %vm2217, %v2737, %v2739
        %v2745 = vadd.f32 %v2679, %v2735
        %v2746 = vadd.f32 %v2680, %v2740
        %v2747 = vadd.f32 %v2681, %v2741
        %s2748 = scalar_lea.vmem [#allocation8], 82
        %v2749 = vld [vmem:[%s2748] sm:$0x3]
        %v2751 = vperm.slane %v2749, 0
        %v2752 = vperm.slane %v2749, 1
        %2753 = vrot.lane.b32.xlu0 %v2751, 35
        %v2754 = vpop.permute.xlu0 %2753
        %2755 = vrot.lane.b32.xlu0 %v2752, 35
        %v2756 = vpop.permute.xlu0 %2755
        %vm2757 = vcmask 285696
        %v2758 = vsel %vm2757, %v2754, %v2756
        %v2762 = vmul.f32 %v318, %v2754
        %v2763 = vmul.f32 %v319, %v2758
        %v2764 = vmul.f32 %v318, %v2756
        %2765 = vset.pattern.permute.xlu0 41
        %2766 = vperm.xlu0 %2765, %v347
        %v2767 = vpop.permute.xlu0 %2766
        %v2769 = vmul.f32 %v2762, %v2767
        %v2770 = vmul.f32 %v2763, %v2767
        %v2771 = vmul.f32 %v2764, %v2767
        %2775 = vrot.lane.b32.xlu0 %v2769, 42
        %v2776 = vpop.permute.xlu0 %2775
        %2777 = vrot.lane.b32.xlu0 %v2770, 42
        %v2778 = vpop.permute.xlu0 %2777
        %2779 = vrot.lane.b32.xlu0 %v2771, 42
        %v2780 = vpop.permute.xlu0 %2779
        %vm2781 = vcmask 343040
        %v2782 = vsel %vm2781, %v2776, %v2778
        %v2783 = vsel %vm2781, %v2778, %v2780
        %v2787 = vadd.f32 %v2721, %v2776
        %v2788 = vadd.f32 %v2722, %v2782
        %v2789 = vadd.f32 %v2723, %v2783
        %s2790 = scalar_lea.vmem [#allocation8], 84
        %v2791 = vld [vmem:[%s2790] sm:$0x3]
        %v2793 = vperm.slane %v2791, 0
        %v2794 = vperm.slane %v2791, 1
        %2795 = vrot.lane.b32.xlu0 %v2793, 45
        %v2796 = vpop.permute.xlu0 %2795
        %2797 = vrot.lane.b32.xlu0 %v2794, 45
        %v2798 = vpop.permute.xlu0 %2797
        %v2799 = vsel %vm2583, %v2796, %v2798
        %v2803 = vmul.f32 %v318, %v2796
        %v2804 = vmul.f32 %v319, %v2799
        %v2805 = vmul.f32 %v318, %v2798
        %2806 = vset.pattern.permute.xlu0 42
        %2807 = vperm.xlu0 %2806, %v347
        %v2808 = vpop.permute.xlu0 %2807
        %v2810 = vmul.f32 %v2803, %v2808
        %v2811 = vmul.f32 %v2804, %v2808
        %v2812 = vmul.f32 %v2805, %v2808
        %2816 = vrot.lane.b32.xlu0 %v2810, 32
        %v2817 = vpop.permute.xlu0 %2816
        %2818 = vrot.lane.b32.xlu0 %v2811, 32
        %v2819 = vpop.permute.xlu0 %2818
        %2820 = vrot.lane.b32.xlu0 %v2812, 32
        %v2821 = vpop.permute.xlu0 %2820
        %v2822 = vsel %vm2559, %v2817, %v2819
        %v2823 = vsel %vm2559, %v2819, %v2821
        %v2827 = vadd.f32 %v2787, %v2817
        %v2828 = vadd.f32 %v2788, %v2822
        %v2829 = vadd.f32 %v2789, %v2823
        %s2830 = scalar_lea.vmem [#allocation8], 86
        %v2831 = vld [vmem:[%s2830] sm:$0x3]
        %v2833 = vperm.slane %v2831, 0
        %v2834 = vperm.slane %v2831, 1
        %2835 = vrot.lane.b32.xlu0 %v2833, 46
        %v2836 = vpop.permute.xlu0 %2835
        %2837 = vrot.lane.b32.xlu0 %v2834, 46
        %v2838 = vpop.permute.xlu0 %2837
        %v2839 = vsel %vm2517, %v2836, %v2838
        %v2843 = vmul.f32 %v318, %v2836
        %v2844 = vmul.f32 %v319, %v2839
        %v2845 = vmul.f32 %v318, %v2838
        %2846 = vset.pattern.permute.xlu0 43
        %2847 = vperm.xlu0 %2846, %v347
        %v2848 = vpop.permute.xlu0 %2847
        %v2850 = vmul.f32 %v2843, %v2848
        %v2851 = vmul.f32 %v2844, %v2848
        %v2852 = vmul.f32 %v2845, %v2848
        %2856 = vrot.lane.b32.xlu0 %v2850, 31
        %v2857 = vpop.permute.xlu0 %2856
        %2858 = vrot.lane.b32.xlu0 %v2851, 31
        %v2859 = vpop.permute.xlu0 %2858
        %2860 = vrot.lane.b32.xlu0 %v2852, 31
        %v2861 = vpop.permute.xlu0 %2860
        %v2862 = vsel %vm2493, %v2857, %v2859
        %v2863 = vsel %vm2493, %v2859, %v2861
        %v2867 = vadd.f32 %v2827, %v2857
        %v2868 = vadd.f32 %v2828, %v2862
        %v2869 = vadd.f32 %v2829, %v2863
        %s2870 = scalar_lea.vmem [#allocation8], 88
        %v2871 = vld [vmem:[%s2870] sm:$0x3]
        %v2873 = vperm.slane %v2871, 0
        %v2874 = vperm.slane %v2871, 1
        %2875 = vrot.lane.b32.xlu0 %v2873, 47
        %v2876 = vpop.permute.xlu0 %2875
        %2877 = vrot.lane.b32.xlu0 %v2874, 47
        %v2878 = vpop.permute.xlu0 %2877
        %v2879 = vsel %vm2451, %v2876, %v2878
        %v2883 = vmul.f32 %v318, %v2876
        %v2884 = vmul.f32 %v319, %v2879
        %v2885 = vmul.f32 %v318, %v2878
        %2886 = vset.pattern.permute.xlu0 44
        %2887 = vperm.xlu0 %2886, %v347
        %v2888 = vpop.permute.xlu0 %2887
        %v2890 = vmul.f32 %v2883, %v2888
        %v2891 = vmul.f32 %v2884, %v2888
        %v2892 = vmul.f32 %v2885, %v2888
        %2896 = vrot.lane.b32.xlu0 %v2890, 30
        %v2897 = vpop.permute.xlu0 %2896
        %2898 = vrot.lane.b32.xlu0 %v2891, 30
        %v2899 = vpop.permute.xlu0 %2898
        %2900 = vrot.lane.b32.xlu0 %v2892, 30
        %v2901 = vpop.permute.xlu0 %2900
        %v2902 = vsel %vm2427, %v2897, %v2899
        %v2903 = vsel %vm2427, %v2899, %v2901
        %v2907 = vadd.f32 %v2867, %v2897
        %v2908 = vadd.f32 %v2868, %v2902
        %v2909 = vadd.f32 %v2869, %v2903
        %s2910 = scalar_lea.vmem [#allocation8], 90
        %v2911 = vld [vmem:[%s2910] sm:$0x3]
        %v2913 = vperm.slane %v2911, 0
        %v2914 = vperm.slane %v2911, 1
        %2915 = vrot.lane.b32.xlu0 %v2913, 48
        %v2916 = vpop.permute.xlu0 %2915
        %2917 = vrot.lane.b32.xlu0 %v2914, 48
        %v2918 = vpop.permute.xlu0 %2917
        %v2919 = vsel %vm2409, %v2916, %v2918
        %v2923 = vmul.f32 %v318, %v2916
        %v2924 = vmul.f32 %v319, %v2919
        %v2925 = vmul.f32 %v318, %v2918
        %2926 = vset.pattern.permute.xlu0 45
        %2927 = vperm.xlu0 %2926, %v347
        %v2928 = vpop.permute.xlu0 %2927
        %v2930 = vmul.f32 %v2923, %v2928
        %v2931 = vmul.f32 %v2924, %v2928
        %v2932 = vmul.f32 %v2925, %v2928
        %2936 = vrot.lane.b32.xlu0 %v2930, 29
        %v2937 = vpop.permute.xlu0 %2936
        %2938 = vrot.lane.b32.xlu0 %v2931, 29
        %v2939 = vpop.permute.xlu0 %2938
        %2940 = vrot.lane.b32.xlu0 %v2932, 29
        %v2941 = vpop.permute.xlu0 %2940
        %v2942 = vsel %vm2385, %v2937, %v2939
        %v2943 = vsel %vm2385, %v2939, %v2941
        %v2947 = vadd.f32 %v2907, %v2937
        %v2948 = vadd.f32 %v2908, %v2942
        %v2949 = vadd.f32 %v2909, %v2943
        %s2950 = scalar_lea.vmem [#allocation8], 92
        %v2951 = vld [vmem:[%s2950] sm:$0x3]
        %v2953 = vperm.slane %v2951, 0
        %v2954 = vperm.slane %v2951, 1
        %2955 = vrot.lane.b32.xlu0 %v2953, 49
        %v2956 = vpop.permute.xlu0 %2955
        %2957 = vrot.lane.b32.xlu0 %v2954, 49
        %v2958 = vpop.permute.xlu0 %2957
        %vm2959 = vcmask 400384
        %v2960 = vsel %vm2959, %v2956, %v2958
        %v2964 = vmul.f32 %v318, %v2956
        %v2965 = vmul.f32 %v319, %v2960
        %v2966 = vmul.f32 %v318, %v2958
        %2967 = vset.pattern.permute.xlu0 46
        %2968 = vperm.xlu0 %2967, %v347
        %v2969 = vpop.permute.xlu0 %2968
        %v2971 = vmul.f32 %v2964, %v2969
        %v2972 = vmul.f32 %v2965, %v2969
        %v2973 = vmul.f32 %v2966, %v2969
        %2977 = vrot.lane.b32.xlu0 %v2971, 28
        %v2978 = vpop.permute.xlu0 %2977
        %2979 = vrot.lane.b32.xlu0 %v2972, 28
        %v2980 = vpop.permute.xlu0 %2979
        %2981 = vrot.lane.b32.xlu0 %v2973, 28
        %v2982 = vpop.permute.xlu0 %2981
        %vm2983 = vcmask 228352
        %v2984 = vsel %vm2983, %v2978, %v2980
        %v2985 = vsel %vm2983, %v2980, %v2982
        %v2989 = vadd.f32 %v2947, %v2978
        %v2990 = vadd.f32 %v2948, %v2984
        %v2991 = vadd.f32 %v2949, %v2985
        %s2992 = scalar_lea.vmem [#allocation8], 94
        %v2993 = vld [vmem:[%s2992] sm:$0x3]
        %v2995 = vperm.slane %v2993, 0
        %v2996 = vperm.slane %v2993, 1
        %2997 = vrot.lane.b32.xlu0 %v2995, 50
        %v2998 = vpop.permute.xlu0 %2997
        %2999 = vrot.lane.b32.xlu0 %v2996, 50
        %v3000 = vpop.permute.xlu0 %2999
        %vm3001 = vcmask 408576
        %v3002 = vsel %vm3001, %v2998, %v3000
        %v3006 = vmul.f32 %v318, %v2998
        %v3007 = vmul.f32 %v319, %v3002
        %v3008 = vmul.f32 %v318, %v3000
        %3009 = vset.pattern.permute.xlu0 47
        %3010 = vperm.xlu0 %3009, %v347
        %v3011 = vpop.permute.xlu0 %3010
        %v3013 = vmul.f32 %v3006, %v3011
        %v3014 = vmul.f32 %v3007, %v3011
        %v3015 = vmul.f32 %v3008, %v3011
        %3019 = vrot.lane.b32.xlu0 %v3013, 27
        %v3020 = vpop.permute.xlu0 %3019
        %3021 = vrot.lane.b32.xlu0 %v3014, 27
        %v3022 = vpop.permute.xlu0 %3021
        %3023 = vrot.lane.b32.xlu0 %v3015, 27
        %v3024 = vpop.permute.xlu0 %3023
        %vm3025 = vcmask 220160
        %v3026 = vsel %vm3025, %v3020, %v3022
        %v3027 = vsel %vm3025, %v3022, %v3024
        %v3031 = vadd.f32 %v2989, %v3020
        %v3032 = vadd.f32 %v2990, %v3026
        %v3033 = vadd.f32 %v2991, %v3027
        %s3034 = scalar_lea.vmem [#allocation8], 96
        %v3035 = vld [vmem:[%s3034] sm:$0x3]
        %v3037 = vperm.slane %v3035, 0
        %v3038 = vperm.slane %v3035, 1
        %3039 = vrot.lane.b32.xlu0 %v3037, 51
        %v3040 = vpop.permute.xlu0 %3039
        %3041 = vrot.lane.b32.xlu0 %v3038, 51
        %v3042 = vpop.permute.xlu0 %3041
        %vm3043 = vcmask 416768
        %v3044 = vsel %vm3043, %v3040, %v3042
        %v3048 = vmul.f32 %v318, %v3040
        %v3049 = vmul.f32 %v319, %v3044
        %v3050 = vmul.f32 %v318, %v3042
        %3051 = vset.pattern.permute.xlu0 48
        %3052 = vperm.xlu0 %3051, %v347
        %v3053 = vpop.permute.xlu0 %3052
        %v3055 = vmul.f32 %v3048, %v3053
        %v3056 = vmul.f32 %v3049, %v3053
        %v3057 = vmul.f32 %v3050, %v3053
        %3061 = vrot.lane.b32.xlu0 %v3055, 26
        %v3062 = vpop.permute.xlu0 %3061
        %3063 = vrot.lane.b32.xlu0 %v3056, 26
        %v3064 = vpop.permute.xlu0 %3063
        %3065 = vrot.lane.b32.xlu0 %v3057, 26
        %v3066 = vpop.permute.xlu0 %3065
        %vm3067 = vcmask 211968
        %v3068 = vsel %vm3067, %v3062, %v3064
        %v3069 = vsel %vm3067, %v3064, %v3066
        %v3073 = vadd.f32 %v3031, %v3062
        %v3074 = vadd.f32 %v3032, %v3068
        %v3075 = vadd.f32 %v3033, %v3069
        %v3076 = vmax.f32 %v3073, 0.0
        %v3077 = vmax.f32 %v3074, 0.0
        %v3078 = vmax.f32 %v3075, 0.0
        %3081 = vrot.lane.b32.xlu0 %v2266, 94
        %v3082 = vpop.permute.xlu0 %3081
        %3083 = vrot.lane.b32.xlu0 %v2267, 94
        %v3084 = vpop.permute.xlu0 %3083
        %v3085 = vsel %vm662, %v3082, %v3084
        %v3089 = vadd.f32 %v2745, %v3082
        %v3090 = vadd.f32 %v2746, %v3085
        %v3091 = vadd.f32 %v2747, %v3084
        %v3092 = vmax.f32 %v3089, 0.0
        %v3093 = vmax.f32 %v3090, 0.0
        %v3094 = vmax.f32 %v3091, 0.0
        %3098 = vrot.lane.b32.xlu0 %v3092, 111
        %v3099 = vpop.permute.xlu0 %3098
        %3100 = vrot.lane.b32.xlu0 %v3093, 111
        %v3101 = vpop.permute.xlu0 %3100
        %3102 = vrot.lane.b32.xlu0 %v3094, 111
        %v3103 = vpop.permute.xlu0 %3102
        %v3104 = vsel %vm686, %v3099, %v3101
        %v3105 = vsel %vm686, %v3101, %v3103
        %3106 = vset.pattern.permute.xlu0 2
        %3107 = vperm.xlu0 %3106, %v316
        %v3108 = vpop.permute.xlu0 %3107
        %3113 = vrot.lane.b32.xlu0 %v3076, 51
        %v3114 = vpop.permute.xlu0 %3113
        %3115 = vrot.lane.b32.xlu0 %v3077, 51
        %v3116 = vpop.permute.xlu0 %3115
        %3117 = vrot.lane.b32.xlu0 %v3078, 51
        %v3118 = vpop.permute.xlu0 %3117
        %3119 = vrot.lane.b32.xlu0 %v3104, 51
        %v3120 = vpop.permute.xlu0 %3119
        %3121 = vrot.lane.b32.xlu0 %v3105, 51
        %v3122 = vpop.permute.xlu0 %3121
        %3123 = vrot.lane.b32.xlu0 %v3103, 51
        %v3124 = vpop.permute.xlu0 %3123
        %v3125 = vsel %vm3043, %v3114, %v3116
        %v3126 = vsel %vm3043, %v3116, %v3118
        %v3127 = vsel %vm3043, %v3120, %v3122
        %v3128 = vsel %vm3043, %v3122, %v3124
        %v3134 = vsel %vm1274, %v317, 0
        %3136 = vmatpush.msra.mxu0 0.0
        %3137 = vmatpush.msra.mxu0 0.0
        %3138 = vmatpush.msra.mxu0 0.0
        %3139 = vmatpush.msra.mxu0 0.0
        %3140 = vmatpush.msra.mxu0 0.0
        %3141 = vmatpush.msra.mxu0 0.0
        %3142 = vmatpush.msra.mxu0 0.0
        %3143 = vmatpush.msra.mxu0 0.0
        %3144 = vmatpush.msra.mxu0 0.0
        %3145 = vmatpush.msra.mxu0 0.0
        %3146 = vmatpush.msra.mxu0 0.0
        %3147 = vmatpush.msra.mxu0 0.0
        %3148 = vmatpush.msra.mxu0 0.0
        %3149 = vmatpush.msra.mxu0 0.0
        %3150 = vmatpush.msra.mxu0 %v3127
        %3151 = vmatpush.msra.mxu0 %v3125
        %3152 = vmatmul.f32.gmra.mxu0 %v3134
        %v3153 = vpop.f32.mrf.mxu0
        %v3154 = vadd.f32 %v3108, %v3153
        %3155 = vdwg.mxu0
        %3156 = vmatpush.msra.mxu0 0.0
        %3157 = vmatpush.msra.mxu0 0.0
        %3158 = vmatpush.msra.mxu0 0.0
        %3159 = vmatpush.msra.mxu0 0.0
        %3160 = vmatpush.msra.mxu0 0.0
        %3161 = vmatpush.msra.mxu0 0.0
        %3162 = vmatpush.msra.mxu0 0.0
        %3163 = vmatpush.msra.mxu0 0.0
        %3164 = vmatpush.msra.mxu0 0.0
        %3165 = vmatpush.msra.mxu0 0.0
        %3166 = vmatpush.msra.mxu0 0.0
        %3167 = vmatpush.msra.mxu0 0.0
        %3168 = vmatpush.msra.mxu0 0.0
        %3169 = vmatpush.msra.mxu0 0.0
        %3170 = vmatpush.msra.mxu0 %v3128
        %3171 = vmatpush.msra.mxu0 %v3126
        %3172 = vmatmul.f32.gmra.mxu0 %v3134
        %v3173 = vpop.f32.mrf.mxu0
        %v3174 = vadd.f32 %v3108, %v3173
        %3175 = vdwg.mxu0
        %v3176 = vmax.f32 %v3154, 0.0
        %v3177 = vmax.f32 %v3174, 0.0
        %3178 = vst [vmem:[%s315] sm:$0xff] %v3176
        %3179 = vst [vmem:[%s315 + $0x8] sm:$0xff] %v3177
        %s3180 = sand.u32 %s164, 1
        %s3181 = scalar_lea.sflag [#allocation4], %s3180
        %s3182 = sand.u32 %s164, 1
        %s3183 = smul.addr %s3182, 16
        %s3184 = scalar_lea.vmem [#allocation10], %s3183
        // Predicated region
        $region61: #{tpu_custom_call.1} parent=43 // pred_check
          %p3185 = pneg %p174
        $region62: #{tpu_custom_call.1} parent=43 // pred_check_branch
          %3187 = sbr.rel (%p3185) target = $region64
        $region63: #{tpu_custom_call.1} parent=43 // pred_region
          %3189 = vsyncadd %s3181, 0
          %s3190 = smul.addr %s25, 2
          %s3191 = smul.addr %s3190, 8
          %s3192 = scalar_lea.hbm %s6, %s3191
          %s3194 = sshll.u32 %s3184, 4
          %s3195 = int_to_ptr.vmem [resolvable:$true] %s3194
          %s3196 = sshll.u32 %s3192, 4
          %s3197 = int_to_ptr.hbm [resolvable:$true] %s3196
          %3199 = dma.vmem_to_hbm [thread:$0]  %s3195, 256, %s3197, %s3181
        $region64: #{tpu_custom_call.1} parent=43 // pred_fallthru
          _
      $region44: #{tpu_custom_call.1} parent=5 // pred_fallthru
        _
      %p3200 = scmp.le.s32.totalorder 2, %s20
      // Predicated region
      $region65: #{tpu_custom_call.1} parent=5 // pred_check
        %p3201 = pneg %p3200
      $region66: #{tpu_custom_call.1} parent=5 // pred_check_branch
        %3203 = sbr.rel (%p3201) target = $region68
      $region67: #{tpu_custom_call.1} parent=5 // pred_region
        %s3204 = ssub.s32 %s20, 2
        // Predicated region
        $region69: #{tpu_custom_call.1} parent=67 // pred_check
          %p3205 = pneg %p180
        $region70: #{tpu_custom_call.1} parent=67 // pred_check_branch
          %3207 = sbr.rel (%p3205) target = $region72
        $region71: #{tpu_custom_call.1} parent=67 // pred_region
          %s3208 = sand.u32 %s165, 1
          %s3209 = scalar_lea.sflag [#allocation4], %s3208
          %s3210 = sand.u32 %s165, 1
          %s3211 = smul.addr %s3210, 16
          %s3212 = scalar_lea.vmem [#allocation10], %s3211
          %3214 = dma.done %s3209, 256
        $region72: #{tpu_custom_call.1} parent=67 // pred_fallthru
          _
      $region68: #{tpu_custom_call.1} parent=5 // pred_fallthru
        _
    $region6: #{tpu_custom_call.1} parent=1 // loop_footer
      %s24 = sadd.s32 1, %s20
    $region7: #{tpu_custom_call.1} parent=1 // loop_footer_branch
      %19 = sbr.rel target = $region3
    $region8: #{tpu_custom_call.1} parent=1 // loop_exit
      _
    %3215 = vsyncpa [#allocation3], 1
    %s3216 = scalar_lea.sflag [#allocation3], 1
    %3217 = vsyncpa %s3216, 1
    %3218 = vsyncpa [#allocation6], 1
    %3219 = vsyncpa [#allocation9], 1
    %3220 = vsyncpa [#allocation4], 1
    %s3221 = scalar_lea.sflag [#allocation4], 1
    %3222 = vsyncpa %s3221, 1

</llo_original>
